<compile_context>
chip_gen: v6e
topology: v6e:2x2x1
jax: 0.10.0
libtpu: 0.0.40
codegen_flags: <defaults>
</compile_context>

<pallas_src>
import math
from functools import partial

import jax
import jax.numpy as jnp
import numpy as np
from jax.experimental import pallas as pl
from jax.experimental.pallas import tpu as pltpu

LN_EPS = 1e-12  # HuggingFace BERT layer-norm epsilon

LAYER_KEYS = ("wq", "bq", "wk", "bk", "wv", "bv", "wo", "bo",
              "ln1_g", "ln1_b", "w1", "b1", "w2", "b2", "ln2_g", "ln2_b")


# ----------------------------- shared math helpers ---------------------------

def _layer_norm(x, gamma, beta):
    mean = jnp.mean(x, axis=-1, keepdims=True)
    var = jnp.mean(jnp.square(x - mean), axis=-1, keepdims=True)
    return (x - mean) * jax.lax.rsqrt(var + LN_EPS) * gamma + beta


def _gelu(x):
    # tanh approximation of GELU (see TODO above).
    return 0.5 * x * (1.0 + jnp.tanh(0.7978845608028654 * (x + 0.044715 * x * x * x)))


def _mm_bf(a_bf, b_bf):
    # (M, K) @ (K, N): bf16 MXU operands, f32 accumulation.
    return jax.lax.dot_general(a_bf, b_bf, (((1,), (0,)), ((), ())),
                               preferred_element_type=jnp.float32)


# --------------------------------- fused kernel -------------------------------

def _fused_encoder_kernel(emb_ref, bias_ref, wemb_ref,
                          emb_g_ref, emb_b_ref, wlf_w_ref, wlf_b_ref,
                          wqkv_ref, bqkv_ref, wo_ref, bo_ref,
                          ln1_g_ref, ln1_b_ref,
                          w1_ref, b1_ref, w2_ref, b2_ref,
                          ln2_g_ref, ln2_b_ref,
                          o_ref, x_scr,
                          *, num_heads, head_dim, bblk, seq_len, hidden):
    layer = pl.program_id(1)
    M = bblk * seq_len

    # Layer-0 prologue: embedding layer-norm; x stays VMEM-resident from here on.
    @pl.when(layer == 0)
    def _():
        emb = emb_ref[...].reshape(M, hidden)
        x_scr[...] = _layer_norm(emb, emb_g_ref[...], emb_b_ref[...])

    x = x_scr[...]                                  # (M, H) f32, carried across layers
    bias = bias_ref[...]                            # (Bblk, 1, L) additive attn bias

    # ---- fused QKV projection (one N=3H matmul; softmax scale folded into Wq) ----
    x_bf = x.astype(jnp.bfloat16)                   # cast hoisted: once per layer
    qkv = _mm_bf(x_bf, wqkv_ref[0]) + bqkv_ref[0]   # (M, 3H) f32
    q = qkv[:, :hidden].reshape(bblk, seq_len, hidden).astype(jnp.bfloat16)
    k = qkv[:, hidden:2 * hidden].reshape(bblk, seq_len, hidden).astype(jnp.bfloat16)
    v = qkv[:, 2 * hidden:].reshape(bblk, seq_len, hidden).astype(jnp.bfloat16)

    # ---- per-head attention, batched over the Bblk packed sequences ----
    ctx_heads = []
    for h in range(num_heads):                      # static; unrolled to 2-D MXU dots
        sl = slice(h * head_dim, (h + 1) * head_dim)
        qh, kh, vh = q[..., sl], k[..., sl], v[..., sl]
        # Q @ K^T via the native trans-B contraction (no kh transpose relayout).
        s = jnp.einsum('bld,bmd->blm', qh, kh,
                       preferred_element_type=jnp.float32) + bias
        s = s - jnp.max(s, axis=-1, keepdims=True)
        p = jnp.exp(s)
        p = p * pl.reciprocal(jnp.sum(p, axis=-1, keepdims=True), approx=True)
        ctx_heads.append(jnp.einsum('blm,bmd->bld', p.astype(jnp.bfloat16), vh,
                                    preferred_element_type=jnp.float32))
    # Assemble heads lane-densely in vregs (no masked 64-lane stores, no scratch).
    ctx = jnp.concatenate(ctx_heads, axis=-1).reshape(M, hidden)

    attn_out = _mm_bf(ctx.astype(jnp.bfloat16), wo_ref[0]) + bo_ref[0]
    x1 = _layer_norm(x + attn_out, ln1_g_ref[0], ln1_b_ref[0])

    x1_bf = x1.astype(jnp.bfloat16)
    hmid = _gelu(_mm_bf(x1_bf, w1_ref[0]) + b1_ref[0])
    ffn = _mm_bf(hmid.astype(jnp.bfloat16), w2_ref[0]) + b2_ref[0]
    x2 = _layer_norm(x1 + ffn, ln2_g_ref[0], ln2_b_ref[0])
    x_scr[...] = x2

    # Last-layer epilogue: fuse word2bert_linear(seqs_word_embedding) + bert output.
    @pl.when(layer == pl.num_programs(1) - 1)
    def _():
        x2b = x2.reshape(bblk, seq_len, hidden)
        for i in range(bblk):                       # static; tiny K=word_size matmuls
            proj = _mm_bf(wemb_ref[i].astype(jnp.bfloat16), wlf_w_ref[...]) \
                   + wlf_b_ref[...]
            o_ref[i] = x2b[i] + proj                # lane-dense (L, H) store


# ------------------------------- forward passes --------------------------------

def bert_wlf_forward(params, seqs_char, seqs_word_embedding, att_mask,
                     num_heads, head_dim, *, batch_block=None):
    """Pallas implementation of BERTWLFEncoder.forward."""
    B, L = seqs_char.shape
    H = params["tok_emb"].shape[-1]
    W = seqs_word_embedding.shape[-1]
    num_layers = params["wq"].shape[0]
    assert num_heads * head_dim == H

    # Pack several sequences into the matmul M dimension; for the demo the whole
    # batch fits in one block (at real sizes target Bblk*L ~ 128-256).
    if batch_block is None:
        batch_block = B
    assert B % batch_block == 0
    nb = B // batch_block

    # Embedding-table gathers are glue (no clean Pallas equivalent); everything
    # downstream runs in the fused kernel.
    emb = (params["tok_emb"][seqs_char]
           + params["pos_emb"][:L][None, :, :]
           + params["type_emb"][0][None, None, :])
    # Hoisted attention-mask bias: (1 - mask) * -10000, shape (B, 1, L), f32.
    bias = ((1.0 - att_mask.astype(jnp.float32)) * (-10000.0)).reshape(B, 1, L)

    # Fused QKV weights with 1/sqrt(head_dim) folded into the Q projection.
    # (One-time weight prep; in production precompute/cached outside the call.)
    scale = 1.0 / math.sqrt(head_dim)
    wqkv = jnp.concatenate(
        [(params["wq"].astype(jnp.float32) * scale).astype(jnp.bfloat16),
         params["wk"], params["wv"]], axis=-1)                 # (NL, H, 3H) bf16
    bqkv = jnp.concatenate(
        [params["bq"] * scale, params["bk"], params["bv"]], axis=-1)  # (NL,1,3H) f32

    def batch_spec(d1, d2):
        return pl.BlockSpec((batch_block, d1, d2), lambda b, l: (b, 0, 0))

    def layer_spec(a):
        return pl.BlockSpec((1,) + a.shape[1:], lambda b, l: (l, 0, 0))

    def const_spec(a):
        nd = a.ndim
        return pl.BlockSpec(a.shape, lambda b, l, _nd=nd: (0,) * _nd)

    layer_args = [wqkv, bqkv, params["wo"], params["bo"],
                  params["ln1_g"], params["ln1_b"],
                  params["w1"], params["b1"], params["w2"], params["b2"],
                  params["ln2_g"], params["ln2_b"]]

    in_specs = ([batch_spec(L, H),                       # emb
                 batch_spec(1, L),                       # attention bias
                 batch_spec(L, W),                       # word-lattice embeddings
                 const_spec(params["emb_ln_g"]),         # embedding LN gamma
                 const_spec(params["emb_ln_b"]),         # embedding LN beta
                 const_spec(params["wlf_w"]),            # word2bert weight (bf16)
                 const_spec(params["wlf_b"])]            # word2bert bias
                + [layer_spec(a) for a in layer_args])

    kernel = partial(_fused_encoder_kernel, num_heads=num_heads,
                     head_dim=head_dim, bblk=batch_block, seq_len=L, hidden=H)

    return pl.pallas_call(
        kernel,
        out_shape=jax.ShapeDtypeStruct((B, L, H), jnp.float32),
        grid=(nb, num_layers),
        in_specs=in_specs,
        out_specs=pl.BlockSpec((batch_block, L, H), lambda b, l: (b, 0, 0)),
        scratch_shapes=[pltpu.VMEM((batch_block * L, H), jnp.float32)],  # activation carry
        compiler_params=pltpu.CompilerParams(
            dimension_semantics=("parallel", "arbitrary"),
            vmem_limit_bytes=32 * 1024 * 1024),
    )(emb, bias, seqs_word_embedding,
      params["emb_ln_g"], params["emb_ln_b"],
      params["wlf_w"], params["wlf_b"],
      *layer_args)


def reference_forward(params, seqs_char, seqs_word_embedding, att_mask,
                      num_heads, head_dim):
    """Pure-JAX reference with the same (bf16-matmul) semantics, for validation."""
    def mm(a, b):
        return jax.lax.dot_general(a.astype(jnp.bfloat16), b.astype(jnp.bfloat16),
                                   (((1,), (0,)), ((), ())),
                                   preferred_element_type=jnp.float32)

    def layer(x, bias, lw):
        q = mm(x, lw["wq"]) + lw["bq"]
        k = mm(x, lw["wk"]) + lw["bk"]
        v = mm(x, lw["wv"]) + lw["bv"]
        scale = 1.0 / math.sqrt(head_dim)
        parts = []
        for h in range(num_heads):
            sl = slice(h * head_dim, (h + 1) * head_dim)
            qh, kh, vh = q[:, sl], k[:, sl], v[:, sl]
            s = jax.lax.dot_general(qh.astype(jnp.bfloat16), kh.astype(jnp.bfloat16),
                                    (((1,), (1,)), ((), ())),
                                    preferred_element_type=jnp.float32) * scale + bias
            s = s - jnp.max(s, axis=-1, keepdims=True)
            p = jnp.exp(s)
            p = p / jnp.sum(p, axis=-1, keepdims=True)
            parts.append(mm(p, vh))
        ctx = jnp.concatenate(parts, axis=-1)
        attn_out = mm(ctx, lw["wo"]) + lw["bo"]
        x1 = _layer_norm(x + attn_out, lw["ln1_g"], lw["ln1_b"])
        hmid = _gelu(mm(x1, lw["w1"]) + lw["b1"])
        ffn = mm(hmid, lw["w2"]) + lw["b2"]
        return _layer_norm(x1 + ffn, lw["ln2_g"], lw["ln2_b"])

    B, L = seqs_char.shape
    emb = (params["tok_emb"][seqs_char]
           + params["pos_emb"][:L][None, :, :]
           + params["type_emb"][0][None, None, :])
    bias = ((1.0 - att_mask.astype(jnp.float32)) * (-10000.0)).reshape(B, 1, L)
    num_layers = params["wq"].shape[0]
    outs = []
    for b in range(B):
        x = _layer_norm(emb[b], params["emb_ln_g"], params["emb_ln_b"])
        for l in range(num_layers):
            lw = {name: params[name][l] for name in LAYER_KEYS}
            x = layer(x, bias[b], lw)
        proj = mm(seqs_word_embedding[b], params["wlf_w"]) + params["wlf_b"]
        outs.append(x + proj)
    return jnp.stack(outs, axis=0)


# ------------------------------- parameter init ---------------------------------

def init_params(key, *, vocab, max_pos, hidden, intermediate, word_size, num_layers):
    keys = iter(jax.random.split(key, 32))

    def nrm(shape, dtype=jnp.float32):
        return (0.02 * jax.random.normal(next(keys), shape, jnp.float32)).astype(dtype)

    NL = num_layers
    return {
        "tok_emb": nrm((vocab, hidden)),
        "pos_emb": nrm((max_pos, hidden)),
        "type_emb": nrm((2, hidden)),
        "emb_ln_g": 1.0 + nrm((1, hidden)),
        "emb_ln_b": nrm((1, hidden)),
        # stacked per-layer weights: bf16 MXU operands, f32 biases / LN params
        "wq": nrm((NL, hidden, hidden), jnp.bfloat16), "bq": nrm((NL, 1, hidden)),
        "wk": nrm((NL, hidden, hidden), jnp.bfloat16), "bk": nrm((NL, 1, hidden)),
        "wv": nrm((NL, hidden, hidden), jnp.bfloat16), "bv": nrm((NL, 1, hidden)),
        "wo": nrm((NL, hidden, hidden), jnp.bfloat16), "bo": nrm((NL, 1, hidden)),
        "ln1_g": 1.0 + nrm((NL, 1, hidden)), "ln1_b": nrm((NL, 1, hidden)),
        "w1": nrm((NL, hidden, intermediate), jnp.bfloat16),
        "b1": nrm((NL, 1, intermediate)),
        "w2": nrm((NL, intermediate, hidden), jnp.bfloat16),
        "b2": nrm((NL, 1, hidden)),
        "ln2_g": 1.0 + nrm((NL, 1, hidden)), "ln2_b": nrm((NL, 1, hidden)),
        # word2bert_linear: Linear(word_size -> hidden), stored input-major.
        "wlf_w": nrm((word_size, hidden), jnp.bfloat16),
        "wlf_b": nrm((1, hidden)),
    }


# ------------------------------------ main ---------------------------------------

if __name__ == "__main__":
    B, L, H = 2, 8, 128          # batch, seq length, bert hidden (lane-dense)
    WORD_SIZE = 50               # module default word embedding size
    NUM_HEADS, HEAD_DIM = 2, 64
    INTERMEDIATE = 512
    VOCAB, MAX_POS = 100, 64
    NUM_LAYERS = 2

    key = jax.random.PRNGKey(0)
    kp, k1, k2 = jax.random.split(key, 3)
    params = init_params(kp, vocab=VOCAB, max_pos=MAX_POS, hidden=H,
                         intermediate=INTERMEDIATE, word_size=WORD_SIZE,
                         num_layers=NUM_LAYERS)

    seqs_char = jax.random.randint(k1, (B, L), 1, VOCAB)                    # token ids
    seqs_word_embedding = jax.random.normal(k2, (B, L, WORD_SIZE), jnp.float32)
    att_mask = jnp.array([[1.0] * L,
                          [1.0] * 5 + [0.0] * (L - 5)], dtype=jnp.float32)  # (B, L)

    out = bert_wlf_forward(params, seqs_char, seqs_word_embedding, att_mask,
                           NUM_HEADS, HEAD_DIM)
    out = jax.block_until_ready(out)

    ref = reference_forward(params, seqs_char, seqs_word_embedding, att_mask,
                            NUM_HEADS, HEAD_DIM)
    ref = jax.block_until_ready(ref)

    assert out.shape == (B, L, H), out.shape
    # Kernel vs reference differ only by the approximate EUP reciprocal in softmax
    # and the (exact power-of-two) scale folding into the bf16 Q weights.
    np.testing.assert_allclose(np.asarray(out), np.asarray(ref), rtol=1e-2, atol=1e-2)
    print("KERNEL_OK")
</pallas_src>

<mosaic_0001>
module attributes {stable_mosaic.version = 11 : i64} {
  func.func @_fused_encoder_kernel(%arg0: i32, %arg1: i32, %arg2: memref<2x8x128xf32, #tpu.memory_space<vmem>>, %arg3: memref<2x1x8xf32, #tpu.memory_space<vmem>>, %arg4: memref<2x8x50xf32, #tpu.memory_space<vmem>>, %arg5: memref<1x128xf32, #tpu.memory_space<vmem>>, %arg6: memref<1x128xf32, #tpu.memory_space<vmem>>, %arg7: memref<50x128xbf16, #tpu.memory_space<vmem>>, %arg8: memref<1x128xf32, #tpu.memory_space<vmem>>, %arg9: memref<1x128x384xbf16, #tpu.memory_space<vmem>>, %arg10: memref<1x1x384xf32, #tpu.memory_space<vmem>>, %arg11: memref<1x128x128xbf16, #tpu.memory_space<vmem>>, %arg12: memref<1x1x128xf32, #tpu.memory_space<vmem>>, %arg13: memref<1x1x128xf32, #tpu.memory_space<vmem>>, %arg14: memref<1x1x128xf32, #tpu.memory_space<vmem>>, %arg15: memref<1x128x512xbf16, #tpu.memory_space<vmem>>, %arg16: memref<1x1x512xf32, #tpu.memory_space<vmem>>, %arg17: memref<1x512x128xbf16, #tpu.memory_space<vmem>>, %arg18: memref<1x1x128xf32, #tpu.memory_space<vmem>>, %arg19: memref<1x1x128xf32, #tpu.memory_space<vmem>>, %arg20: memref<1x1x128xf32, #tpu.memory_space<vmem>>, %arg21: memref<2x8x128xf32, #tpu.memory_space<vmem>>, %arg22: memref<16x128xf32, #tpu.memory_space<vmem>>) attributes {dimension_semantics = [#tpu.dimension_semantics<parallel>, #tpu.dimension_semantics<arbitrary>], iteration_bounds = array<i64: 1, 2>, scalar_prefetch = 0 : i64, scratch_operands = 1 : i64, tpu.core_type = #tpu.core_type<tc>, window_params = [{transform_indices = @transform_0, window_bounds = array<i64: 2, 8, 128>}, {transform_indices = @transform_1, window_bounds = array<i64: 2, 1, 8>}, {transform_indices = @transform_2, window_bounds = array<i64: 2, 8, 50>}, {pipeline_mode = #tpu.pipeline_mode<synchronous>, transform_indices = @transform_3, window_bounds = array<i64: 1, 128>}, {pipeline_mode = #tpu.pipeline_mode<synchronous>, transform_indices = @transform_4, window_bounds = array<i64: 1, 128>}, {pipeline_mode = #tpu.pipeline_mode<synchronous>, transform_indices = @transform_5, window_bounds = array<i64: 50, 128>}, {pipeline_mode = #tpu.pipeline_mode<synchronous>, transform_indices = @transform_6, window_bounds = array<i64: 1, 128>}, {transform_indices = @transform_7, window_bounds = array<i64: 1, 128, 384>}, {transform_indices = @transform_8, window_bounds = array<i64: 1, 1, 384>}, {transform_indices = @transform_9, window_bounds = array<i64: 1, 128, 128>}, {transform_indices = @transform_10, window_bounds = array<i64: 1, 1, 128>}, {transform_indices = @transform_11, window_bounds = array<i64: 1, 1, 128>}, {transform_indices = @transform_12, window_bounds = array<i64: 1, 1, 128>}, {transform_indices = @transform_13, window_bounds = array<i64: 1, 128, 512>}, {transform_indices = @transform_14, window_bounds = array<i64: 1, 1, 512>}, {transform_indices = @transform_15, window_bounds = array<i64: 1, 512, 128>}, {transform_indices = @transform_16, window_bounds = array<i64: 1, 1, 128>}, {transform_indices = @transform_17, window_bounds = array<i64: 1, 1, 128>}, {transform_indices = @transform_18, window_bounds = array<i64: 1, 1, 128>}, {transform_indices = @transform_19, window_bounds = array<i64: 2, 8, 128>}]} {
    %c0_i32 = arith.constant 0 : i32
    %0 = arith.cmpi eq, %arg1, %c0_i32 : i32
    %1 = arith.extui %0 : i1 to i32
    %c0_i32_0 = arith.constant 0 : i32
    %2 = arith.cmpi ne, %1, %c0_i32_0 : i32
    scf.if %2 {
      %c0_69 = arith.constant 0 : index
      %c0_70 = arith.constant 0 : index
      %c0_71 = arith.constant 0 : index
      %155 = vector.load %arg2[%c0_69, %c0_70, %c0_71] : memref<2x8x128xf32, #tpu.memory_space<vmem>>, vector<2x8x128xf32>
      %156 = vector.shape_cast %155 : vector<2x8x128xf32> to vector<16x128xf32>
      %c0_72 = arith.constant 0 : index
      %c0_73 = arith.constant 0 : index
      %157 = vector.load %arg5[%c0_72, %c0_73] : memref<1x128xf32, #tpu.memory_space<vmem>>, vector<1x128xf32>
      %c0_74 = arith.constant 0 : index
      %c0_75 = arith.constant 0 : index
      %158 = vector.load %arg6[%c0_74, %c0_75] : memref<1x128xf32, #tpu.memory_space<vmem>>, vector<1x128xf32>
      %cst_76 = arith.constant dense<0.000000e+00> : vector<16xf32>
      %159 = vector.multi_reduction <add>, %156, %cst_76 [1] : vector<16x128xf32> to vector<16xf32>
      %160 = vector.shape_cast %159 : vector<16xf32> to vector<16x1xf32>
      %cst_77 = arith.constant 1.280000e+02 : f32
      %161 = vector.broadcast %cst_77 : f32 to vector<16x1xf32>
      %162 = arith.divf %160, %161 : vector<16x1xf32>
      %163 = vector.broadcast %162 : vector<16x1xf32> to vector<16x128xf32>
      %164 = arith.subf %156, %163 : vector<16x128xf32>
      %165 = arith.mulf %164, %164 : vector<16x128xf32>
      %cst_78 = arith.constant dense<0.000000e+00> : vector<16xf32>
      %166 = vector.multi_reduction <add>, %165, %cst_78 [1] : vector<16x128xf32> to vector<16xf32>
      %167 = vector.shape_cast %166 : vector<16xf32> to vector<16x1xf32>
      %cst_79 = arith.constant 1.280000e+02 : f32
      %168 = vector.broadcast %cst_79 : f32 to vector<16x1xf32>
      %169 = arith.divf %167, %168 : vector<16x1xf32>
      %170 = vector.broadcast %162 : vector<16x1xf32> to vector<16x128xf32>
      %171 = arith.subf %156, %170 : vector<16x128xf32>
      %cst_80 = arith.constant 9.99999996E-13 : f32
      %172 = vector.broadcast %cst_80 : f32 to vector<16x1xf32>
      %173 = arith.addf %169, %172 : vector<16x1xf32>
      %174 = math.rsqrt %173 : vector<16x1xf32>
      %175 = vector.broadcast %174 : vector<16x1xf32> to vector<16x128xf32>
      %176 = arith.mulf %171, %175 : vector<16x128xf32>
      %177 = vector.broadcast %157 : vector<1x128xf32> to vector<16x128xf32>
      %178 = arith.mulf %176, %177 : vector<16x128xf32>
      %179 = vector.broadcast %158 : vector<1x128xf32> to vector<16x128xf32>
      %180 = arith.addf %178, %179 : vector<16x128xf32>
      %c0_81 = arith.constant 0 : index
      %c0_82 = arith.constant 0 : index
      %181 = vector.load %arg22[%c0_81, %c0_82] : memref<16x128xf32, #tpu.memory_space<vmem>>, vector<16x128xf32>
      tpu.vector_store %arg22[%c0_81, %c0_82], %180 {strides = array<i32>} : memref<16x128xf32, #tpu.memory_space<vmem>>, vector<16x128xf32>,
    } else {
    }
    %c0 = arith.constant 0 : index
    %c0_1 = arith.constant 0 : index
    %3 = vector.load %arg22[%c0, %c0_1] : memref<16x128xf32, #tpu.memory_space<vmem>>, vector<16x128xf32>
    %c0_2 = arith.constant 0 : index
    %c0_3 = arith.constant 0 : index
    %c0_4 = arith.constant 0 : index
    %4 = vector.load %arg3[%c0_2, %c0_3, %c0_4] : memref<2x1x8xf32, #tpu.memory_space<vmem>>, vector<2x1x8xf32>
    %5 = arith.truncf %3 : vector<16x128xf32> to vector<16x128xbf16>
    %c0_5 = arith.constant 0 : index
    %c0_6 = arith.constant 0 : index
    %c0_7 = arith.constant 0 : index
    %6 = vector.load %arg9[%c0_5, %c0_6, %c0_7] : memref<1x128x384xbf16, #tpu.memory_space<vmem>>, vector<1x128x384xbf16>
    %7 = vector.shape_cast %6 : vector<1x128x384xbf16> to vector<128x384xbf16>
    %cst = arith.constant dense<0.000000e+00> : vector<16x384xf32>
    %8 = tpu.matmul %5, %7, %cst {dimension_numbers = #tpu.dot_dimension_numbers<[1], [0], [0], [1], [0, 0, 1, 1], [], []>} : vector<16x128xbf16>, vector<128x384xbf16>, vector<16x384xf32> -> vector<16x384xf32>
    %c0_8 = arith.constant 0 : index
    %c0_9 = arith.constant 0 : index
    %c0_10 = arith.constant 0 : index
    %9 = vector.load %arg10[%c0_8, %c0_9, %c0_10] : memref<1x1x384xf32, #tpu.memory_space<vmem>>, vector<1x1x384xf32>
    %10 = vector.shape_cast %9 : vector<1x1x384xf32> to vector<1x384xf32>
    %11 = vector.broadcast %10 : vector<1x384xf32> to vector<16x384xf32>
    %12 = arith.addf %8, %11 : vector<16x384xf32>
    %13 = vector.extract_strided_slice %12 {offsets = [0, 0], sizes = [16, 128], strides = [1, 1]} : vector<16x384xf32> to vector<16x128xf32>
    %14 = vector.shape_cast %13 : vector<16x128xf32> to vector<2x8x128xf32>
    %15 = arith.truncf %14 : vector<2x8x128xf32> to vector<2x8x128xbf16>
    %16 = vector.extract_strided_slice %12 {offsets = [0, 128], sizes = [16, 128], strides = [1, 1]} : vector<16x384xf32> to vector<16x128xf32>
    %17 = vector.shape_cast %16 : vector<16x128xf32> to vector<2x8x128xf32>
    %18 = arith.truncf %17 : vector<2x8x128xf32> to vector<2x8x128xbf16>
    %19 = vector.extract_strided_slice %12 {offsets = [0, 256], sizes = [16, 128], strides = [1, 1]} : vector<16x384xf32> to vector<16x128xf32>
    %20 = vector.shape_cast %19 : vector<16x128xf32> to vector<2x8x128xf32>
    %21 = arith.truncf %20 : vector<2x8x128xf32> to vector<2x8x128xbf16>
    %22 = vector.extract_strided_slice %15 {offsets = [0, 0, 0], sizes = [2, 8, 64], strides = [1, 1, 1]} : vector<2x8x128xbf16> to vector<2x8x64xbf16>
    %23 = vector.extract_strided_slice %18 {offsets = [0, 0, 0], sizes = [2, 8, 64], strides = [1, 1, 1]} : vector<2x8x128xbf16> to vector<2x8x64xbf16>
    %24 = vector.extract_strided_slice %21 {offsets = [0, 0, 0], sizes = [2, 8, 64], strides = [1, 1, 1]} : vector<2x8x128xbf16> to vector<2x8x64xbf16>
    "tpu.trace_start"() <{level = 10 : i32, message = "bld,bmd->blm"}> : () -> ()
    %cst_11 = arith.constant dense<0.000000e+00> : vector<2x8x8xf32>
    %25 = tpu.matmul %22, %23, %cst_11 {dimension_numbers = #tpu.dot_dimension_numbers<[2], [2], [1], [1], [0, 0, 0, 1, 1, 1], [0], [0]>} : vector<2x8x64xbf16>, vector<2x8x64xbf16>, vector<2x8x8xf32> -> vector<2x8x8xf32>
    "tpu.trace_stop"() : () -> ()
    %26 = vector.broadcast %4 : vector<2x1x8xf32> to vector<2x8x8xf32>
    %27 = arith.addf %25, %26 : vector<2x8x8xf32>
    %cst_12 = arith.constant dense<0xFF800000> : vector<2x8xf32>
    %28 = vector.multi_reduction <maximumf>, %27, %cst_12 [2] : vector<2x8x8xf32> to vector<2x8xf32>
    %29 = vector.shape_cast %28 : vector<2x8xf32> to vector<2x8x1xf32>
    %30 = vector.broadcast %29 : vector<2x8x1xf32> to vector<2x8x8xf32>
    %31 = arith.subf %27, %30 : vector<2x8x8xf32>
    %32 = math.exp %31 : vector<2x8x8xf32>
    %cst_13 = arith.constant dense<0.000000e+00> : vector<2x8xf32>
    %33 = vector.multi_reduction <add>, %32, %cst_13 [2] : vector<2x8x8xf32> to vector<2x8xf32>
    %34 = vector.shape_cast %33 : vector<2x8xf32> to vector<2x8x1xf32>
    %35 = tpu.reciprocal %34 {approx = true} : vector<2x8x1xf32> -> vector<2x8x1xf32>
    %36 = vector.broadcast %35 : vector<2x8x1xf32> to vector<2x8x8xf32>
    %37 = arith.mulf %32, %36 : vector<2x8x8xf32>
    %38 = arith.truncf %37 : vector<2x8x8xf32> to vector<2x8x8xbf16>
    "tpu.trace_start"() <{level = 10 : i32, message = "blm,bmd->bld"}> : () -> ()
    %cst_14 = arith.constant dense<0.000000e+00> : vector<2x8x64xf32>
    %39 = tpu.matmul %38, %24, %cst_14 {dimension_numbers = #tpu.dot_dimension_numbers<[2], [1], [1], [2], [0, 0, 0, 1, 1, 2], [0], [0]>} : vector<2x8x8xbf16>, vector<2x8x64xbf16>, vector<2x8x64xf32> -> vector<2x8x64xf32>
    "tpu.trace_stop"() : () -> ()
    %40 = vector.extract_strided_slice %15 {offsets = [0, 0, 64], sizes = [2, 8, 64], strides = [1, 1, 1]} : vector<2x8x128xbf16> to vector<2x8x64xbf16>
    %41 = vector.extract_strided_slice %18 {offsets = [0, 0, 64], sizes = [2, 8, 64], strides = [1, 1, 1]} : vector<2x8x128xbf16> to vector<2x8x64xbf16>
    %42 = vector.extract_strided_slice %21 {offsets = [0, 0, 64], sizes = [2, 8, 64], strides = [1, 1, 1]} : vector<2x8x128xbf16> to vector<2x8x64xbf16>
    "tpu.trace_start"() <{level = 10 : i32, message = "bld,bmd->blm"}> : () -> ()
    %cst_15 = arith.constant dense<0.000000e+00> : vector<2x8x8xf32>
    %43 = tpu.matmul %40, %41, %cst_15 {dimension_numbers = #tpu.dot_dimension_numbers<[2], [2], [1], [1], [0, 0, 0, 1, 1, 1], [0], [0]>} : vector<2x8x64xbf16>, vector<2x8x64xbf16>, vector<2x8x8xf32> -> vector<2x8x8xf32>
    "tpu.trace_stop"() : () -> ()
    %44 = vector.broadcast %4 : vector<2x1x8xf32> to vector<2x8x8xf32>
    %45 = arith.addf %43, %44 : vector<2x8x8xf32>
    %cst_16 = arith.constant dense<0xFF800000> : vector<2x8xf32>
    %46 = vector.multi_reduction <maximumf>, %45, %cst_16 [2] : vector<2x8x8xf32> to vector<2x8xf32>
    %47 = vector.shape_cast %46 : vector<2x8xf32> to vector<2x8x1xf32>
    %48 = vector.broadcast %47 : vector<2x8x1xf32> to vector<2x8x8xf32>
    %49 = arith.subf %45, %48 : vector<2x8x8xf32>
    %50 = math.exp %49 : vector<2x8x8xf32>
    %cst_17 = arith.constant dense<0.000000e+00> : vector<2x8xf32>
    %51 = vector.multi_reduction <add>, %50, %cst_17 [2] : vector<2x8x8xf32> to vector<2x8xf32>
    %52 = vector.shape_cast %51 : vector<2x8xf32> to vector<2x8x1xf32>
    %53 = tpu.reciprocal %52 {approx = true} : vector<2x8x1xf32> -> vector<2x8x1xf32>
    %54 = vector.broadcast %53 : vector<2x8x1xf32> to vector<2x8x8xf32>
    %55 = arith.mulf %50, %54 : vector<2x8x8xf32>
    %56 = arith.truncf %55 : vector<2x8x8xf32> to vector<2x8x8xbf16>
    "tpu.trace_start"() <{level = 10 : i32, message = "blm,bmd->bld"}> : () -> ()
    %cst_18 = arith.constant dense<0.000000e+00> : vector<2x8x64xf32>
    %57 = tpu.matmul %56, %42, %cst_18 {dimension_numbers = #tpu.dot_dimension_numbers<[2], [1], [1], [2], [0, 0, 0, 1, 1, 2], [0], [0]>} : vector<2x8x8xbf16>, vector<2x8x64xbf16>, vector<2x8x64xf32> -> vector<2x8x64xf32>
    "tpu.trace_stop"() : () -> ()
    %58 = tpu.concatenate %39, %57 in 2 : vector<2x8x64xf32>, vector<2x8x64xf32> -> vector<2x8x128xf32>
    %59 = vector.shape_cast %58 : vector<2x8x128xf32> to vector<16x128xf32>
    %60 = arith.truncf %59 : vector<16x128xf32> to vector<16x128xbf16>
    %c0_19 = arith.constant 0 : index
    %c0_20 = arith.constant 0 : index
    %c0_21 = arith.constant 0 : index
    %61 = vector.load %arg11[%c0_19, %c0_20, %c0_21] : memref<1x128x128xbf16, #tpu.memory_space<vmem>>, vector<1x128x128xbf16>
    %62 = vector.shape_cast %61 : vector<1x128x128xbf16> to vector<128x128xbf16>
    %cst_22 = arith.constant dense<0.000000e+00> : vector<16x128xf32>
    %63 = tpu.matmul %60, %62, %cst_22 {dimension_numbers = #tpu.dot_dimension_numbers<[1], [0], [0], [1], [0, 0, 1, 1], [], []>} : vector<16x128xbf16>, vector<128x128xbf16>, vector<16x128xf32> -> vector<16x128xf32>
    %c0_23 = arith.constant 0 : index
    %c0_24 = arith.constant 0 : index
    %c0_25 = arith.constant 0 : index
    %64 = vector.load %arg12[%c0_23, %c0_24, %c0_25] : memref<1x1x128xf32, #tpu.memory_space<vmem>>, vector<1x1x128xf32>
    %65 = vector.shape_cast %64 : vector<1x1x128xf32> to vector<1x128xf32>
    %66 = vector.broadcast %65 : vector<1x128xf32> to vector<16x128xf32>
    %67 = arith.addf %63, %66 : vector<16x128xf32>
    %68 = arith.addf %3, %67 : vector<16x128xf32>
    %c0_26 = arith.constant 0 : index
    %c0_27 = arith.constant 0 : index
    %c0_28 = arith.constant 0 : index
    %69 = vector.load %arg13[%c0_26, %c0_27, %c0_28] : memref<1x1x128xf32, #tpu.memory_space<vmem>>, vector<1x1x128xf32>
    %70 = vector.shape_cast %69 : vector<1x1x128xf32> to vector<1x128xf32>
    %c0_29 = arith.constant 0 : index
    %c0_30 = arith.constant 0 : index
    %c0_31 = arith.constant 0 : index
    %71 = vector.load %arg14[%c0_29, %c0_30, %c0_31] : memref<1x1x128xf32, #tpu.memory_space<vmem>>, vector<1x1x128xf32>
    %72 = vector.shape_cast %71 : vector<1x1x128xf32> to vector<1x128xf32>
    %cst_32 = arith.constant dense<0.000000e+00> : vector<16xf32>
    %73 = vector.multi_reduction <add>, %68, %cst_32 [1] : vector<16x128xf32> to vector<16xf32>
    %74 = vector.shape_cast %73 : vector<16xf32> to vector<16x1xf32>
    %cst_33 = arith.constant 1.280000e+02 : f32
    %75 = vector.broadcast %cst_33 : f32 to vector<16x1xf32>
    %76 = arith.divf %74, %75 : vector<16x1xf32>
    %77 = vector.broadcast %76 : vector<16x1xf32> to vector<16x128xf32>
    %78 = arith.subf %68, %77 : vector<16x128xf32>
    %79 = arith.mulf %78, %78 : vector<16x128xf32>
    %cst_34 = arith.constant dense<0.000000e+00> : vector<16xf32>
    %80 = vector.multi_reduction <add>, %79, %cst_34 [1] : vector<16x128xf32> to vector<16xf32>
    %81 = vector.shape_cast %80 : vector<16xf32> to vector<16x1xf32>
    %cst_35 = arith.constant 1.280000e+02 : f32
    %82 = vector.broadcast %cst_35 : f32 to vector<16x1xf32>
    %83 = arith.divf %81, %82 : vector<16x1xf32>
    %84 = vector.broadcast %76 : vector<16x1xf32> to vector<16x128xf32>
    %85 = arith.subf %68, %84 : vector<16x128xf32>
    %cst_36 = arith.constant 9.99999996E-13 : f32
    %86 = vector.broadcast %cst_36 : f32 to vector<16x1xf32>
    %87 = arith.addf %83, %86 : vector<16x1xf32>
    %88 = math.rsqrt %87 : vector<16x1xf32>
    %89 = vector.broadcast %88 : vector<16x1xf32> to vector<16x128xf32>
    %90 = arith.mulf %85, %89 : vector<16x128xf32>
    %91 = vector.broadcast %70 : vector<1x128xf32> to vector<16x128xf32>
    %92 = arith.mulf %90, %91 : vector<16x128xf32>
    %93 = vector.broadcast %72 : vector<1x128xf32> to vector<16x128xf32>
    %94 = arith.addf %92, %93 : vector<16x128xf32>
    %95 = arith.truncf %94 : vector<16x128xf32> to vector<16x128xbf16>
    %c0_37 = arith.constant 0 : index
    %c0_38 = arith.constant 0 : index
    %c0_39 = arith.constant 0 : index
    %96 = vector.load %arg15[%c0_37, %c0_38, %c0_39] : memref<1x128x512xbf16, #tpu.memory_space<vmem>>, vector<1x128x512xbf16>
    %97 = vector.shape_cast %96 : vector<1x128x512xbf16> to vector<128x512xbf16>
    %cst_40 = arith.constant dense<0.000000e+00> : vector<16x512xf32>
    %98 = tpu.matmul %95, %97, %cst_40 {dimension_numbers = #tpu.dot_dimension_numbers<[1], [0], [0], [1], [0, 0, 1, 1], [], []>} : vector<16x128xbf16>, vector<128x512xbf16>, vector<16x512xf32> -> vector<16x512xf32>
    %c0_41 = arith.constant 0 : index
    %c0_42 = arith.constant 0 : index
    %c0_43 = arith.constant 0 : index
    %99 = vector.load %arg16[%c0_41, %c0_42, %c0_43] : memref<1x1x512xf32, #tpu.memory_space<vmem>>, vector<1x1x512xf32>
    %100 = vector.shape_cast %99 : vector<1x1x512xf32> to vector<1x512xf32>
    %101 = vector.broadcast %100 : vector<1x512xf32> to vector<16x512xf32>
    %102 = arith.addf %98, %101 : vector<16x512xf32>
    %cst_44 = arith.constant 5.000000e-01 : f32
    %103 = vector.broadcast %cst_44 : f32 to vector<16x512xf32>
    %104 = arith.mulf %103, %102 : vector<16x512xf32>
    %cst_45 = arith.constant 4.471500e-02 : f32
    %105 = vector.broadcast %cst_45 : f32 to vector<16x512xf32>
    %106 = arith.mulf %105, %102 : vector<16x512xf32>
    %107 = arith.mulf %106, %102 : vector<16x512xf32>
    %108 = arith.mulf %107, %102 : vector<16x512xf32>
    %109 = arith.addf %102, %108 : vector<16x512xf32>
    %cst_46 = arith.constant 0.797884583 : f32
    %110 = vector.broadcast %cst_46 : f32 to vector<16x512xf32>
    %111 = arith.mulf %110, %109 : vector<16x512xf32>
    %112 = math.tanh %111 : vector<16x512xf32>
    %cst_47 = arith.constant 1.000000e+00 : f32
    %113 = vector.broadcast %cst_47 : f32 to vector<16x512xf32>
    %114 = arith.addf %113, %112 : vector<16x512xf32>
    %115 = arith.mulf %104, %114 : vector<16x512xf32>
    %116 = arith.truncf %115 : vector<16x512xf32> to vector<16x512xbf16>
    %c0_48 = arith.constant 0 : index
    %c0_49 = arith.constant 0 : index
    %c0_50 = arith.constant 0 : index
    %117 = vector.load %arg17[%c0_48, %c0_49, %c0_50] : memref<1x512x128xbf16, #tpu.memory_space<vmem>>, vector<1x512x128xbf16>
    %118 = vector.shape_cast %117 : vector<1x512x128xbf16> to vector<512x128xbf16>
    %cst_51 = arith.constant dense<0.000000e+00> : vector<16x128xf32>
    %119 = tpu.matmul %116, %118, %cst_51 {dimension_numbers = #tpu.dot_dimension_numbers<[1], [0], [0], [1], [0, 0, 1, 1], [], []>} : vector<16x512xbf16>, vector<512x128xbf16>, vector<16x128xf32> -> vector<16x128xf32>
    %c0_52 = arith.constant 0 : index
    %c0_53 = arith.constant 0 : index
    %c0_54 = arith.constant 0 : index
    %120 = vector.load %arg18[%c0_52, %c0_53, %c0_54] : memref<1x1x128xf32, #tpu.memory_space<vmem>>, vector<1x1x128xf32>
    %121 = vector.shape_cast %120 : vector<1x1x128xf32> to vector<1x128xf32>
    %122 = vector.broadcast %121 : vector<1x128xf32> to vector<16x128xf32>
    %123 = arith.addf %119, %122 : vector<16x128xf32>
    %124 = arith.addf %94, %123 : vector<16x128xf32>
    %c0_55 = arith.constant 0 : index
    %c0_56 = arith.constant 0 : index
    %c0_57 = arith.constant 0 : index
    %125 = vector.load %arg19[%c0_55, %c0_56, %c0_57] : memref<1x1x128xf32, #tpu.memory_space<vmem>>, vector<1x1x128xf32>
    %126 = vector.shape_cast %125 : vector<1x1x128xf32> to vector<1x128xf32>
    %c0_58 = arith.constant 0 : index
    %c0_59 = arith.constant 0 : index
    %c0_60 = arith.constant 0 : index
    %127 = vector.load %arg20[%c0_58, %c0_59, %c0_60] : memref<1x1x128xf32, #tpu.memory_space<vmem>>, vector<1x1x128xf32>
    %128 = vector.shape_cast %127 : vector<1x1x128xf32> to vector<1x128xf32>
    %cst_61 = arith.constant dense<0.000000e+00> : vector<16xf32>
    %129 = vector.multi_reduction <add>, %124, %cst_61 [1] : vector<16x128xf32> to vector<16xf32>
    %130 = vector.shape_cast %129 : vector<16xf32> to vector<16x1xf32>
    %cst_62 = arith.constant 1.280000e+02 : f32
    %131 = vector.broadcast %cst_62 : f32 to vector<16x1xf32>
    %132 = arith.divf %130, %131 : vector<16x1xf32>
    %133 = vector.broadcast %132 : vector<16x1xf32> to vector<16x128xf32>
    %134 = arith.subf %124, %133 : vector<16x128xf32>
    %135 = arith.mulf %134, %134 : vector<16x128xf32>
    %cst_63 = arith.constant dense<0.000000e+00> : vector<16xf32>
    %136 = vector.multi_reduction <add>, %135, %cst_63 [1] : vector<16x128xf32> to vector<16xf32>
    %137 = vector.shape_cast %136 : vector<16xf32> to vector<16x1xf32>
    %cst_64 = arith.constant 1.280000e+02 : f32
    %138 = vector.broadcast %cst_64 : f32 to vector<16x1xf32>
    %139 = arith.divf %137, %138 : vector<16x1xf32>
    %140 = vector.broadcast %132 : vector<16x1xf32> to vector<16x128xf32>
    %141 = arith.subf %124, %140 : vector<16x128xf32>
    %cst_65 = arith.constant 9.99999996E-13 : f32
    %142 = vector.broadcast %cst_65 : f32 to vector<16x1xf32>
    %143 = arith.addf %139, %142 : vector<16x1xf32>
    %144 = math.rsqrt %143 : vector<16x1xf32>
    %145 = vector.broadcast %144 : vector<16x1xf32> to vector<16x128xf32>
    %146 = arith.mulf %141, %145 : vector<16x128xf32>
    %147 = vector.broadcast %126 : vector<1x128xf32> to vector<16x128xf32>
    %148 = arith.mulf %146, %147 : vector<16x128xf32>
    %149 = vector.broadcast %128 : vector<1x128xf32> to vector<16x128xf32>
    %150 = arith.addf %148, %149 : vector<16x128xf32>
    %c0_66 = arith.constant 0 : index
    %c0_67 = arith.constant 0 : index
    %151 = vector.load %arg22[%c0_66, %c0_67] : memref<16x128xf32, #tpu.memory_space<vmem>>, vector<16x128xf32>
    tpu.vector_store %arg22[%c0_66, %c0_67], %150 {strides = array<i32>} : memref<16x128xf32, #tpu.memory_space<vmem>>, vector<16x128xf32>,
    %c1_i32 = arith.constant 1 : i32
    %152 = arith.cmpi eq, %arg1, %c1_i32 : i32
    %153 = arith.extui %152 : i1 to i32
    %c0_i32_68 = arith.constant 0 : i32
    %154 = arith.cmpi ne, %153, %c0_i32_68 : i32
    scf.if %154 {
      %155 = vector.shape_cast %150 : vector<16x128xf32> to vector<2x8x128xf32>
      %c0_69 = arith.constant 0 : index
      %c0_70 = arith.constant 0 : index
      %c0_71 = arith.constant 0 : index
      %156 = vector.load %arg4[%c0_69, %c0_70, %c0_71] : memref<2x8x50xf32, #tpu.memory_space<vmem>>, vector<1x8x50xf32>
      %157 = vector.shape_cast %156 : vector<1x8x50xf32> to vector<8x50xf32>
      %158 = arith.truncf %157 : vector<8x50xf32> to vector<8x50xbf16>
      %c0_72 = arith.constant 0 : index
      %c0_73 = arith.constant 0 : index
      %159 = vector.load %arg7[%c0_72, %c0_73] : memref<50x128xbf16, #tpu.memory_space<vmem>>, vector<50x128xbf16>
      %cst_74 = arith.constant dense<0.000000e+00> : vector<8x128xf32>
      %160 = tpu.matmul %158, %159, %cst_74 {dimension_numbers = #tpu.dot_dimension_numbers<[1], [0], [0], [1], [0, 0, 1, 1], [], []>} : vector<8x50xbf16>, vector<50x128xbf16>, vector<8x128xf32> -> vector<8x128xf32>
      %c0_75 = arith.constant 0 : index
      %c0_76 = arith.constant 0 : index
      %161 = vector.load %arg8[%c0_75, %c0_76] : memref<1x128xf32, #tpu.memory_space<vmem>>, vector<1x128xf32>
      %162 = vector.broadcast %161 : vector<1x128xf32> to vector<8x128xf32>
      %163 = arith.addf %160, %162 : vector<8x128xf32>
      %164 = vector.extract_strided_slice %155 {offsets = [0, 0, 0], sizes = [1, 8, 128], strides = [1, 1, 1]} : vector<2x8x128xf32> to vector<1x8x128xf32>
      %165 = vector.shape_cast %164 : vector<1x8x128xf32> to vector<8x128xf32>
      %166 = arith.addf %165, %163 : vector<8x128xf32>
      %c0_77 = arith.constant 0 : index
      %c0_78 = arith.constant 0 : index
      %c0_79 = arith.constant 0 : index
      %167 = vector.load %arg21[%c0_77, %c0_78, %c0_79] : memref<2x8x128xf32, #tpu.memory_space<vmem>>, vector<1x8x128xf32>
      %168 = vector.shape_cast %167 : vector<1x8x128xf32> to vector<8x128xf32>
      %169 = vector.shape_cast %166 : vector<8x128xf32> to vector<1x8x128xf32>
      tpu.vector_store %arg21[%c0_77, %c0_78, %c0_79], %169 {strides = array<i32>} : memref<2x8x128xf32, #tpu.memory_space<vmem>>, vector<1x8x128xf32>,
      %c1 = arith.constant 1 : index
      %c0_80 = arith.constant 0 : index
      %c0_81 = arith.constant 0 : index
      %170 = vector.load %arg4[%c1, %c0_80, %c0_81] : memref<2x8x50xf32, #tpu.memory_space<vmem>>, vector<1x8x50xf32>
      %171 = vector.shape_cast %170 : vector<1x8x50xf32> to vector<8x50xf32>
      %172 = arith.truncf %171 : vector<8x50xf32> to vector<8x50xbf16>
      %c0_82 = arith.constant 0 : index
      %c0_83 = arith.constant 0 : index
      %173 = vector.load %arg7[%c0_82, %c0_83] : memref<50x128xbf16, #tpu.memory_space<vmem>>, vector<50x128xbf16>
      %cst_84 = arith.constant dense<0.000000e+00> : vector<8x128xf32>
      %174 = tpu.matmul %172, %173, %cst_84 {dimension_numbers = #tpu.dot_dimension_numbers<[1], [0], [0], [1], [0, 0, 1, 1], [], []>} : vector<8x50xbf16>, vector<50x128xbf16>, vector<8x128xf32> -> vector<8x128xf32>
      %c0_85 = arith.constant 0 : index
      %c0_86 = arith.constant 0 : index
      %175 = vector.load %arg8[%c0_85, %c0_86] : memref<1x128xf32, #tpu.memory_space<vmem>>, vector<1x128xf32>
      %176 = vector.broadcast %175 : vector<1x128xf32> to vector<8x128xf32>
      %177 = arith.addf %174, %176 : vector<8x128xf32>
      %178 = vector.extract_strided_slice %155 {offsets = [1, 0, 0], sizes = [1, 8, 128], strides = [1, 1, 1]} : vector<2x8x128xf32> to vector<1x8x128xf32>
      %179 = vector.shape_cast %178 : vector<1x8x128xf32> to vector<8x128xf32>
      %180 = arith.addf %179, %177 : vector<8x128xf32>
      %c1_87 = arith.constant 1 : index
      %c0_88 = arith.constant 0 : index
      %c0_89 = arith.constant 0 : index
      %181 = vector.load %arg21[%c1_87, %c0_88, %c0_89] : memref<2x8x128xf32, #tpu.memory_space<vmem>>, vector<1x8x128xf32>
      %182 = vector.shape_cast %181 : vector<1x8x128xf32> to vector<8x128xf32>
      %183 = vector.shape_cast %180 : vector<8x128xf32> to vector<1x8x128xf32>
      tpu.vector_store %arg21[%c1_87, %c0_88, %c0_89], %183 {strides = array<i32>} : memref<2x8x128xf32, #tpu.memory_space<vmem>>, vector<1x8x128xf32>,
    } else {
    }
    return
  }
  func.func @transform_0(%arg0: i32, %arg1: i32) -> (i32, i32, i32) {
    %c0_i32 = arith.constant 0 : i32
    %c0_i32_0 = arith.constant 0 : i32
    %c0_i32_1 = arith.constant 0 : i32
    return %arg0, %c0_i32, %c0_i32_0 : i32, i32, i32
  }
  func.func @transform_1(%arg0: i32, %arg1: i32) -> (i32, i32, i32) {
    %c0_i32 = arith.constant 0 : i32
    %c0_i32_0 = arith.constant 0 : i32
    %c0_i32_1 = arith.constant 0 : i32
    return %arg0, %c0_i32, %c0_i32_0 : i32, i32, i32
  }
  func.func @transform_2(%arg0: i32, %arg1: i32) -> (i32, i32, i32) {
    %c0_i32 = arith.constant 0 : i32
    %c0_i32_0 = arith.constant 0 : i32
    %c0_i32_1 = arith.constant 0 : i32
    return %arg0, %c0_i32, %c0_i32_0 : i32, i32, i32
  }
  func.func @transform_3(%arg0: i32, %arg1: i32) -> (i32, i32) {
    %c0_i32 = arith.constant 0 : i32
    %c0_i32_0 = arith.constant 0 : i32
    %c0_i32_1 = arith.constant 0 : i32
    return %c0_i32, %c0_i32_0 : i32, i32
  }
  func.func @transform_4(%arg0: i32, %arg1: i32) -> (i32, i32) {
    %c0_i32 = arith.constant 0 : i32
    %c0_i32_0 = arith.constant 0 : i32
    %c0_i32_1 = arith.constant 0 : i32
    return %c0_i32, %c0_i32_0 : i32, i32
  }
  func.func @transform_5(%arg0: i32, %arg1: i32) -> (i32, i32) {
    %c0_i32 = arith.constant 0 : i32
    %c0_i32_0 = arith.constant 0 : i32
    %c0_i32_1 = arith.constant 0 : i32
    return %c0_i32, %c0_i32_0 : i32, i32
  }
  func.func @transform_6(%arg0: i32, %arg1: i32) -> (i32, i32) {
    %c0_i32 = arith.constant 0 : i32
    %c0_i32_0 = arith.constant 0 : i32
    %c0_i32_1 = arith.constant 0 : i32
    return %c0_i32, %c0_i32_0 : i32, i32
  }
  func.func @transform_7(%arg0: i32, %arg1: i32) -> (i32, i32, i32) {
    %c0_i32 = arith.constant 0 : i32
    %c0_i32_0 = arith.constant 0 : i32
    %c0_i32_1 = arith.constant 0 : i32
    return %arg1, %c0_i32, %c0_i32_0 : i32, i32, i32
  }
  func.func @transform_8(%arg0: i32, %arg1: i32) -> (i32, i32, i32) {
    %c0_i32 = arith.constant 0 : i32
    %c0_i32_0 = arith.constant 0 : i32
    %c0_i32_1 = arith.constant 0 : i32
    return %arg1, %c0_i32, %c0_i32_0 : i32, i32, i32
  }
  func.func @transform_9(%arg0: i32, %arg1: i32) -> (i32, i32, i32) {
    %c0_i32 = arith.constant 0 : i32
    %c0_i32_0 = arith.constant 0 : i32
    %c0_i32_1 = arith.constant 0 : i32
    return %arg1, %c0_i32, %c0_i32_0 : i32, i32, i32
  }
  func.func @transform_10(%arg0: i32, %arg1: i32) -> (i32, i32, i32) {
    %c0_i32 = arith.constant 0 : i32
    %c0_i32_0 = arith.constant 0 : i32
    %c0_i32_1 = arith.constant 0 : i32
    return %arg1, %c0_i32, %c0_i32_0 : i32, i32, i32
  }
  func.func @transform_11(%arg0: i32, %arg1: i32) -> (i32, i32, i32) {
    %c0_i32 = arith.constant 0 : i32
    %c0_i32_0 = arith.constant 0 : i32
    %c0_i32_1 = arith.constant 0 : i32
    return %arg1, %c0_i32, %c0_i32_0 : i32, i32, i32
  }
  func.func @transform_12(%arg0: i32, %arg1: i32) -> (i32, i32, i32) {
    %c0_i32 = arith.constant 0 : i32
    %c0_i32_0 = arith.constant 0 : i32
    %c0_i32_1 = arith.constant 0 : i32
    return %arg1, %c0_i32, %c0_i32_0 : i32, i32, i32
  }
  func.func @transform_13(%arg0: i32, %arg1: i32) -> (i32, i32, i32) {
    %c0_i32 = arith.constant 0 : i32
    %c0_i32_0 = arith.constant 0 : i32
    %c0_i32_1 = arith.constant 0 : i32
    return %arg1, %c0_i32, %c0_i32_0 : i32, i32, i32
  }
  func.func @transform_14(%arg0: i32, %arg1: i32) -> (i32, i32, i32) {
    %c0_i32 = arith.constant 0 : i32
    %c0_i32_0 = arith.constant 0 : i32
    %c0_i32_1 = arith.constant 0 : i32
    return %arg1, %c0_i32, %c0_i32_0 : i32, i32, i32
  }
  func.func @transform_15(%arg0: i32, %arg1: i32) -> (i32, i32, i32) {
    %c0_i32 = arith.constant 0 : i32
    %c0_i32_0 = arith.constant 0 : i32
    %c0_i32_1 = arith.constant 0 : i32
    return %arg1, %c0_i32, %c0_i32_0 : i32, i32, i32
  }
  func.func @transform_16(%arg0: i32, %arg1: i32) -> (i32, i32, i32) {
    %c0_i32 = arith.constant 0 : i32
    %c0_i32_0 = arith.constant 0 : i32
    %c0_i32_1 = arith.constant 0 : i32
    return %arg1, %c0_i32, %c0_i32_0 : i32, i32, i32
  }
  func.func @transform_17(%arg0: i32, %arg1: i32) -> (i32, i32, i32) {
    %c0_i32 = arith.constant 0 : i32
    %c0_i32_0 = arith.constant 0 : i32
    %c0_i32_1 = arith.constant 0 : i32
    return %arg1, %c0_i32, %c0_i32_0 : i32, i32, i32
  }
  func.func @transform_18(%arg0: i32, %arg1: i32) -> (i32, i32, i32) {
    %c0_i32 = arith.constant 0 : i32
    %c0_i32_0 = arith.constant 0 : i32
    %c0_i32_1 = arith.constant 0 : i32
    return %arg1, %c0_i32, %c0_i32_0 : i32, i32, i32
  }
  func.func @transform_19(%arg0: i32, %arg1: i32) -> (i32, i32, i32) {
    %c0_i32 = arith.constant 0 : i32
    %c0_i32_0 = arith.constant 0 : i32
    %c0_i32_1 = arith.constant 0 : i32
    return %arg0, %c0_i32, %c0_i32_0 : i32, i32, i32
  }
}

</mosaic_0001>

<llo_original>
// kernel: tpu_custom_call.1
$region0: #{tpu_custom_call.1}
  #allocation0 [shape = 'u32[]', space=smem, size = 0x4, offset = 0x4, fixed_abs, tag = 'smem constant byte address 0x4 - core index']
  #allocation1 [shape = 'u32[144,128]{1,0:T(1,128)}', space=vmem, size = 0x12000, scoped, tag = 'internal scratch']
  #allocation2 [shape = 'f32[16,128]{1,0:T(8,128)}', space=vmem, size = 0x2000, scoped, tag = 'scratch operand']
  %s0 = inlined_call_operand.hbm [shape: f32[2,8,128], index: 0, kind: input, shape index: {}]
  %s1 = inlined_call_operand.hbm [shape: f32[2,1,8], index: 1, kind: input, shape index: {}]
  %s2 = inlined_call_operand.hbm [shape: f32[2,8,50], index: 2, kind: input, shape index: {}]
  %s3 = inlined_call_operand.hbm [shape: f32[1,128], index: 3, kind: input, shape index: {}]
  %s4 = inlined_call_operand.hbm [shape: f32[1,128], index: 4, kind: input, shape index: {}]
  %s5 = inlined_call_operand.hbm [shape: bf16[50,128], index: 5, kind: input, shape index: {}]
  %s6 = inlined_call_operand.hbm [shape: f32[1,128], index: 6, kind: input, shape index: {}]
  %s7 = inlined_call_operand.hbm [shape: bf16[2,128,384], index: 7, kind: input, shape index: {}]
  %s8 = inlined_call_operand.vmem [shape: f32[2,1,384], index: 8, kind: input, shape index: {}]
  %s9 = inlined_call_operand.hbm [shape: bf16[2,128,128], index: 9, kind: input, shape index: {}]
  %s10 = inlined_call_operand.vmem [shape: f32[2,1,128], index: 10, kind: input, shape index: {}]
  %s11 = inlined_call_operand.vmem [shape: f32[2,1,128], index: 11, kind: input, shape index: {}]
  %s12 = inlined_call_operand.vmem [shape: f32[2,1,128], index: 12, kind: input, shape index: {}]
  %s13 = inlined_call_operand.hbm [shape: bf16[2,128,512], index: 13, kind: input, shape index: {}]
  %s14 = inlined_call_operand.vmem [shape: f32[2,1,512], index: 14, kind: input, shape index: {}]
  %s15 = inlined_call_operand.hbm [shape: bf16[2,512,128], index: 15, kind: input, shape index: {}]
  %s16 = inlined_call_operand.vmem [shape: f32[2,1,128], index: 16, kind: input, shape index: {}]
  %s17 = inlined_call_operand.vmem [shape: f32[2,1,128], index: 17, kind: input, shape index: {}]
  %s18 = inlined_call_operand.vmem [shape: f32[2,1,128], index: 18, kind: input, shape index: {}]
  %s19 = inlined_call_operand.hbm [shape: f32[2,8,128], index: 19, kind: output, shape index: {}]
  %s20 = sld [smem:[#allocation0]]
  $region161: #{tpu_custom_call.1} parent=0
    _
  %s22 = ssub.s32 1, %s20
  %s23 = scalar_select 0, %s22, %s20
  $region1: #{tpu_custom_call.1} parent=0
    #allocation3 [shape = 'u8[8192]{0}', space=vmem, size = 0x2000, scoped, tag = 'input window, operand 0, single buffered']
    #allocation4 [shape = 's32[2]{0}', space=sflag, size = 0x8, scoped, tag = 'scoped memory for tpu_custom_call.1']
    #allocation5 [shape = 's32[2]{0}', space=sflag, size = 0x8, scoped, tag = 'scoped memory for tpu_custom_call.1']
    #allocation6 [shape = 'u8[1024]{0}', space=vmem, size = 0x400, scoped, tag = 'input window, operand 1, single buffered']
    #allocation7 [shape = 's32[1]{0}', space=sflag, size = 0x4, scoped, tag = 'scoped memory for tpu_custom_call.1']
    #allocation8 [shape = 'u8[8192]{0}', space=vmem, size = 0x2000, scoped, tag = 'input window, operand 2, single buffered']
    #allocation9 [shape = 'u8[512]{0}', space=vmem, size = 0x400, scoped, tag = 'input window, operand 3, single buffered']
    #allocation10 [shape = 's32[1]{0}', space=sflag, size = 0x4, scoped, tag = 'scoped memory for tpu_custom_call.1']
    #allocation11 [shape = 'u8[512]{0}', space=vmem, size = 0x400, scoped, tag = 'input window, operand 4, single buffered']
    #allocation12 [shape = 'u8[14336]{0}', space=vmem, size = 0x3800, scoped, tag = 'input window, operand 5, single buffered']
    #allocation13 [shape = 's32[1]{0}', space=sflag, size = 0x4, scoped, tag = 'scoped memory for tpu_custom_call.1']
    #allocation14 [shape = 'u8[512]{0}', space=vmem, size = 0x400, scoped, tag = 'input window, operand 6, single buffered']
    #allocation15 [shape = 'u8[196608]{0}', space=vmem, size = 0x30000, scoped, tag = 'input window, operand 7']
    #allocation16 [shape = 's32[2]{0}', space=sflag, size = 0x8, scoped, tag = 'scoped memory for tpu_custom_call.1']
    #allocation17 [shape = 'u8[65536]{0}', space=vmem, size = 0x10000, scoped, tag = 'input window, operand 9']
    #allocation18 [shape = 'u8[262144]{0}', space=vmem, size = 0x40000, scoped, tag = 'input window, operand 13']
    #allocation19 [shape = 's32[2]{0}', space=sflag, size = 0x8, scoped, tag = 'scoped memory for tpu_custom_call.1']
    #allocation20 [shape = 'u8[262144]{0}', space=vmem, size = 0x40000, scoped, tag = 'input window, operand 15']
    #allocation21 [shape = 'u8[8192]{0}', space=vmem, size = 0x2000, scoped, tag = 'output window, operand 0, single buffered']
    %24 = vsyncpa [#allocation4], 0
    %25 = vsyncpa [#allocation7], 0
    %26 = vsyncpa [#allocation10], 0
    %27 = vsyncpa [#allocation13], 0
    %28 = vsyncpa [#allocation16], 0
    %s29 = scalar_lea.sflag [#allocation16], 1
    %30 = vsyncpa %s29, 0
    %31 = vsyncpa [#allocation19], 0
    %s32 = scalar_lea.sflag [#allocation19], 1
    %33 = vsyncpa %s32, 0
    %34 = vsyncpa [#allocation5], 0
    loop: start=0, step=1, limit=4
    $region2: #{tpu_custom_call.1} parent=1 // loop_pre_header
      _
    $region3: #{tpu_custom_call.1} parent=1 // loop_header
      %s36 = sphi 0, %s40
      %p37 = scmp.ge.s32.totalorder %s36, 4
      %s43 = sphi 0, %s55
      %s44 = sphi 0, %s51
      %s45 = sphi 0, %s43
      %s46 = sphi 0, %s44
      %s47 = sphi 0, %s45
      %s48 = sphi 0, %s46
      %s58 = sphi 0, %s60
      %s61 = sphi 0, %s58
      %s62 = sphi 0, %s61
      %s78 = sphi 0, %s62
      %s84 = sphi 0, %s86
      %s87 = sphi 0, %s84
      %s88 = sphi 0, %s87
      %s104 = sphi 0, %s88
      %s110 = sphi 0, %s112
      %s113 = sphi 0, %s110
      %s114 = sphi 0, %s113
      %s130 = sphi 0, %s114
      %s134 = sphi 0, %s134
      %s136 = sphi 0, %s134
      %s137 = sphi 0, %s136
      %s151 = sphi 0, %s137
      %s155 = sphi 0, %s155
      %s157 = sphi 0, %s155
      %s158 = sphi 0, %s157
      %s172 = sphi 0, %s158
      %s176 = sphi 0, %s176
      %s178 = sphi 0, %s176
      %s179 = sphi 0, %s178
      %s193 = sphi 0, %s179
      %s197 = sphi 0, %s197
      %s199 = sphi 0, %s197
      %s200 = sphi 0, %s199
      %s214 = sphi 0, %s200
      %s220 = sphi 0, %s222
      %s223 = sphi 0, %s220
      %s224 = sphi 0, %s223
      %s240 = sphi 0, %s224
      %s246 = sphi 0, %s248
      %s249 = sphi 0, %s246
      %s250 = sphi 0, %s249
      %s266 = sphi 0, %s250
      %s272 = sphi 0, %s274
      %s275 = sphi 0, %s272
      %s276 = sphi 0, %s275
      %s292 = sphi 0, %s276
      %s298 = sphi 0, %s300
      %s301 = sphi 0, %s298
      %s302 = sphi 0, %s301
      %s318 = sphi 0, %s302
      %s324 = sphi 0, %s326
      %s327 = sphi 0, %s324
      %s328 = sphi 0, %s327
      %s344 = sphi 0, %s328
      %s350 = sphi 0, %s352
      %s353 = sphi 0, %s350
      %s354 = sphi 0, %s353
      %s370 = sphi 0, %s354
      %s376 = sphi 0, %s378
      %s379 = sphi 0, %s376
      %s380 = sphi 0, %s379
      %s396 = sphi 0, %s380
      %s402 = sphi 0, %s404
      %s405 = sphi 0, %s402
      %s406 = sphi 0, %s405
      %s422 = sphi 0, %s406
      %s428 = sphi 0, %s430
      %s431 = sphi 0, %s428
      %s432 = sphi 0, %s431
      %s448 = sphi 0, %s432
      %s454 = sphi 0, %s456
      %s457 = sphi 0, %s454
      %s458 = sphi 0, %s457
      %s474 = sphi 0, %s458
      %s480 = sphi 0, %s482
      %s483 = sphi 0, %s480
      %s484 = sphi 0, %s483
      %s500 = sphi 0, %s484
      %s506 = sphi 0, %s508
      %s509 = sphi 0, %s506
      %s510 = sphi 0, %s509
      %s526 = sphi 0, %s510
      %s532 = sphi 0, %s534
      %s535 = sphi 0, %s532
      %s536 = sphi 0, %s535
      %s552 = sphi 0, %s536
    $region4: #{tpu_custom_call.1} parent=1 // loop_header_branch
      %39 = sbr.rel (%p37) target = $region8
    $region5: #{tpu_custom_call.1} parent=1 // loop_body
      %s41 = ssub.s32 %s36, 1
      %s42 = ssub.s32 %s36, 2
      %s49 = sadd.s32 1, %s44
      %p50 = scmp.ge.s32.totalorder %s49, 2
      %s51 = scalar_select %p50, 0, %s49
      %s52 = sadd.s32 1, %s43
      %s53 = scalar_select %p50, %s52, %s43
      %p54 = scmp.ge.s32.totalorder %s53, 1
      %s55 = scalar_select %p54, 0, %s53
      %s56 = ssub.s32 %s43, %s55
      %p57 = scmp.eq.s32.totalorder %s56, 0
      %s59 = sadd.s32 %s58, 1
      %s60 = scalar_select %p57, %s58, %s59
      %p63 = pneg %p57
      %p64 = scmp.eq.s32.totalorder %s36, 1
      %p65 = por %p63, %p64
      %p66 = scmp.ne.s32.totalorder %s58, %s61
      %p67 = scmp.eq.s32.totalorder %s36, 0
      %p68 = por %p66, %p67
      %p69 = scmp.ne.s32.totalorder %s58, %s61
      %p70 = scmp.eq.s32.totalorder %s41, 1
      %p71 = por %p69, %p70
      %p72 = scmp.ne.s32.totalorder %s61, %s62
      %p73 = scmp.eq.s32.totalorder %s41, 0
      %p74 = por %p72, %p73
      %p75 = scmp.ne.s32.totalorder %s61, %s62
      %p76 = scmp.eq.s32.totalorder %s42, 1
      %p77 = por %p75, %p76
      %p79 = scmp.ne.s32.totalorder %s62, %s78
      %p80 = scmp.eq.s32.totalorder %s42, 0
      %p81 = por %p79, %p80
      %s82 = ssub.s32 %s43, %s55
      %p83 = scmp.eq.s32.totalorder %s82, 0
      %s85 = sadd.s32 %s84, 1
      %s86 = scalar_select %p83, %s84, %s85
      %p89 = pneg %p83
      %p90 = scmp.eq.s32.totalorder %s36, 1
      %p91 = por %p89, %p90
      %p92 = scmp.ne.s32.totalorder %s84, %s87
      %p93 = scmp.eq.s32.totalorder %s36, 0
      %p94 = por %p92, %p93
      %p95 = scmp.ne.s32.totalorder %s84, %s87
      %p96 = scmp.eq.s32.totalorder %s41, 1
      %p97 = por %p95, %p96
      %p98 = scmp.ne.s32.totalorder %s87, %s88
      %p99 = scmp.eq.s32.totalorder %s41, 0
      %p100 = por %p98, %p99
      %p101 = scmp.ne.s32.totalorder %s87, %s88
      %p102 = scmp.eq.s32.totalorder %s42, 1
      %p103 = por %p101, %p102
      %p105 = scmp.ne.s32.totalorder %s88, %s104
      %p106 = scmp.eq.s32.totalorder %s42, 0
      %p107 = por %p105, %p106
      %s108 = ssub.s32 %s43, %s55
      %p109 = scmp.eq.s32.totalorder %s108, 0
      %s111 = sadd.s32 %s110, 1
      %s112 = scalar_select %p109, %s110, %s111
      %p115 = pneg %p109
      %p116 = scmp.eq.s32.totalorder %s36, 1
      %p117 = por %p115, %p116
      %p118 = scmp.ne.s32.totalorder %s110, %s113
      %p119 = scmp.eq.s32.totalorder %s36, 0
      %p120 = por %p118, %p119
      %p121 = scmp.ne.s32.totalorder %s110, %s113
      %p122 = scmp.eq.s32.totalorder %s41, 1
      %p123 = por %p121, %p122
      %p124 = scmp.ne.s32.totalorder %s113, %s114
      %p125 = scmp.eq.s32.totalorder %s41, 0
      %p126 = por %p124, %p125
      %p127 = scmp.ne.s32.totalorder %s113, %s114
      %p128 = scmp.eq.s32.totalorder %s42, 1
      %p129 = por %p127, %p128
      %p131 = scmp.ne.s32.totalorder %s114, %s130
      %p132 = scmp.eq.s32.totalorder %s42, 0
      %p133 = por %p131, %p132
      %s135 = sadd.s32 %s134, 1
      %p138 = scmp.eq.s32.totalorder %s36, 1
      %p139 = scmp.ne.s32.totalorder %s134, %s136
      %p140 = scmp.eq.s32.totalorder %s36, 0
      %p141 = por %p139, %p140
      %p142 = scmp.ne.s32.totalorder %s134, %s136
      %p143 = scmp.eq.s32.totalorder %s41, 1
      %p144 = por %p142, %p143
      %p145 = scmp.ne.s32.totalorder %s136, %s137
      %p146 = scmp.eq.s32.totalorder %s41, 0
      %p147 = por %p145, %p146
      %p148 = scmp.ne.s32.totalorder %s136, %s137
      %p149 = scmp.eq.s32.totalorder %s42, 1
      %p150 = por %p148, %p149
      %p152 = scmp.ne.s32.totalorder %s137, %s151
      %p153 = scmp.eq.s32.totalorder %s42, 0
      %p154 = por %p152, %p153
      %s156 = sadd.s32 %s155, 1
      %p159 = scmp.eq.s32.totalorder %s36, 1
      %p160 = scmp.ne.s32.totalorder %s155, %s157
      %p161 = scmp.eq.s32.totalorder %s36, 0
      %p162 = por %p160, %p161
      %p163 = scmp.ne.s32.totalorder %s155, %s157
      %p164 = scmp.eq.s32.totalorder %s41, 1
      %p165 = por %p163, %p164
      %p166 = scmp.ne.s32.totalorder %s157, %s158
      %p167 = scmp.eq.s32.totalorder %s41, 0
      %p168 = por %p166, %p167
      %p169 = scmp.ne.s32.totalorder %s157, %s158
      %p170 = scmp.eq.s32.totalorder %s42, 1
      %p171 = por %p169, %p170
      %p173 = scmp.ne.s32.totalorder %s158, %s172
      %p174 = scmp.eq.s32.totalorder %s42, 0
      %p175 = por %p173, %p174
      %s177 = sadd.s32 %s176, 1
      %p180 = scmp.eq.s32.totalorder %s36, 1
      %p181 = scmp.ne.s32.totalorder %s176, %s178
      %p182 = scmp.eq.s32.totalorder %s36, 0
      %p183 = por %p181, %p182
      %p184 = scmp.ne.s32.totalorder %s176, %s178
      %p185 = scmp.eq.s32.totalorder %s41, 1
      %p186 = por %p184, %p185
      %p187 = scmp.ne.s32.totalorder %s178, %s179
      %p188 = scmp.eq.s32.totalorder %s41, 0
      %p189 = por %p187, %p188
      %p190 = scmp.ne.s32.totalorder %s178, %s179
      %p191 = scmp.eq.s32.totalorder %s42, 1
      %p192 = por %p190, %p191
      %p194 = scmp.ne.s32.totalorder %s179, %s193
      %p195 = scmp.eq.s32.totalorder %s42, 0
      %p196 = por %p194, %p195
      %s198 = sadd.s32 %s197, 1
      %p201 = scmp.eq.s32.totalorder %s36, 1
      %p202 = scmp.ne.s32.totalorder %s197, %s199
      %p203 = scmp.eq.s32.totalorder %s36, 0
      %p204 = por %p202, %p203
      %p205 = scmp.ne.s32.totalorder %s197, %s199
      %p206 = scmp.eq.s32.totalorder %s41, 1
      %p207 = por %p205, %p206
      %p208 = scmp.ne.s32.totalorder %s199, %s200
      %p209 = scmp.eq.s32.totalorder %s41, 0
      %p210 = por %p208, %p209
      %p211 = scmp.ne.s32.totalorder %s199, %s200
      %p212 = scmp.eq.s32.totalorder %s42, 1
      %p213 = por %p211, %p212
      %p215 = scmp.ne.s32.totalorder %s200, %s214
      %p216 = scmp.eq.s32.totalorder %s42, 0
      %p217 = por %p215, %p216
      %s218 = ssub.s32 %s44, %s51
      %p219 = scmp.eq.s32.totalorder %s218, 0
      %s221 = sadd.s32 %s220, 1
      %s222 = scalar_select %p219, %s220, %s221
      %p225 = pneg %p219
      %p226 = scmp.eq.s32.totalorder %s36, 1
      %p227 = por %p225, %p226
      %p228 = scmp.ne.s32.totalorder %s220, %s223
      %p229 = scmp.eq.s32.totalorder %s36, 0
      %p230 = por %p228, %p229
      %p231 = scmp.ne.s32.totalorder %s220, %s223
      %p232 = scmp.eq.s32.totalorder %s41, 1
      %p233 = por %p231, %p232
      %p234 = scmp.ne.s32.totalorder %s223, %s224
      %p235 = scmp.eq.s32.totalorder %s41, 0
      %p236 = por %p234, %p235
      %p237 = scmp.ne.s32.totalorder %s223, %s224
      %p238 = scmp.eq.s32.totalorder %s42, 1
      %p239 = por %p237, %p238
      %p241 = scmp.ne.s32.totalorder %s224, %s240
      %p242 = scmp.eq.s32.totalorder %s42, 0
      %p243 = por %p241, %p242
      %s244 = ssub.s32 %s44, %s51
      %p245 = scmp.eq.s32.totalorder %s244, 0
      %s247 = sadd.s32 %s246, 1
      %s248 = scalar_select %p245, %s246, %s247
      %p251 = pneg %p245
      %p252 = scmp.eq.s32.totalorder %s36, 1
      %p253 = por %p251, %p252
      %p254 = scmp.ne.s32.totalorder %s246, %s249
      %p255 = scmp.eq.s32.totalorder %s36, 0
      %p256 = por %p254, %p255
      %p257 = scmp.ne.s32.totalorder %s246, %s249
      %p258 = scmp.eq.s32.totalorder %s41, 1
      %p259 = por %p257, %p258
      %p260 = scmp.ne.s32.totalorder %s249, %s250
      %p261 = scmp.eq.s32.totalorder %s41, 0
      %p262 = por %p260, %p261
      %p263 = scmp.ne.s32.totalorder %s249, %s250
      %p264 = scmp.eq.s32.totalorder %s42, 1
      %p265 = por %p263, %p264
      %p267 = scmp.ne.s32.totalorder %s250, %s266
      %p268 = scmp.eq.s32.totalorder %s42, 0
      %p269 = por %p267, %p268
      %s270 = ssub.s32 %s44, %s51
      %p271 = scmp.eq.s32.totalorder %s270, 0
      %s273 = sadd.s32 %s272, 1
      %s274 = scalar_select %p271, %s272, %s273
      %p277 = pneg %p271
      %p278 = scmp.eq.s32.totalorder %s36, 1
      %p279 = por %p277, %p278
      %p280 = scmp.ne.s32.totalorder %s272, %s275
      %p281 = scmp.eq.s32.totalorder %s36, 0
      %p282 = por %p280, %p281
      %p283 = scmp.ne.s32.totalorder %s272, %s275
      %p284 = scmp.eq.s32.totalorder %s41, 1
      %p285 = por %p283, %p284
      %p286 = scmp.ne.s32.totalorder %s275, %s276
      %p287 = scmp.eq.s32.totalorder %s41, 0
      %p288 = por %p286, %p287
      %p289 = scmp.ne.s32.totalorder %s275, %s276
      %p290 = scmp.eq.s32.totalorder %s42, 1
      %p291 = por %p289, %p290
      %p293 = scmp.ne.s32.totalorder %s276, %s292
      %p294 = scmp.eq.s32.totalorder %s42, 0
      %p295 = por %p293, %p294
      %s296 = ssub.s32 %s44, %s51
      %p297 = scmp.eq.s32.totalorder %s296, 0
      %s299 = sadd.s32 %s298, 1
      %s300 = scalar_select %p297, %s298, %s299
      %p303 = pneg %p297
      %p304 = scmp.eq.s32.totalorder %s36, 1
      %p305 = por %p303, %p304
      %p306 = scmp.ne.s32.totalorder %s298, %s301
      %p307 = scmp.eq.s32.totalorder %s36, 0
      %p308 = por %p306, %p307
      %p309 = scmp.ne.s32.totalorder %s298, %s301
      %p310 = scmp.eq.s32.totalorder %s41, 1
      %p311 = por %p309, %p310
      %p312 = scmp.ne.s32.totalorder %s301, %s302
      %p313 = scmp.eq.s32.totalorder %s41, 0
      %p314 = por %p312, %p313
      %p315 = scmp.ne.s32.totalorder %s301, %s302
      %p316 = scmp.eq.s32.totalorder %s42, 1
      %p317 = por %p315, %p316
      %p319 = scmp.ne.s32.totalorder %s302, %s318
      %p320 = scmp.eq.s32.totalorder %s42, 0
      %p321 = por %p319, %p320
      %s322 = ssub.s32 %s44, %s51
      %p323 = scmp.eq.s32.totalorder %s322, 0
      %s325 = sadd.s32 %s324, 1
      %s326 = scalar_select %p323, %s324, %s325
      %p329 = pneg %p323
      %p330 = scmp.eq.s32.totalorder %s36, 1
      %p331 = por %p329, %p330
      %p332 = scmp.ne.s32.totalorder %s324, %s327
      %p333 = scmp.eq.s32.totalorder %s36, 0
      %p334 = por %p332, %p333
      %p335 = scmp.ne.s32.totalorder %s324, %s327
      %p336 = scmp.eq.s32.totalorder %s41, 1
      %p337 = por %p335, %p336
      %p338 = scmp.ne.s32.totalorder %s327, %s328
      %p339 = scmp.eq.s32.totalorder %s41, 0
      %p340 = por %p338, %p339
      %p341 = scmp.ne.s32.totalorder %s327, %s328
      %p342 = scmp.eq.s32.totalorder %s42, 1
      %p343 = por %p341, %p342
      %p345 = scmp.ne.s32.totalorder %s328, %s344
      %p346 = scmp.eq.s32.totalorder %s42, 0
      %p347 = por %p345, %p346
      %s348 = ssub.s32 %s44, %s51
      %p349 = scmp.eq.s32.totalorder %s348, 0
      %s351 = sadd.s32 %s350, 1
      %s352 = scalar_select %p349, %s350, %s351
      %p355 = pneg %p349
      %p356 = scmp.eq.s32.totalorder %s36, 1
      %p357 = por %p355, %p356
      %p358 = scmp.ne.s32.totalorder %s350, %s353
      %p359 = scmp.eq.s32.totalorder %s36, 0
      %p360 = por %p358, %p359
      %p361 = scmp.ne.s32.totalorder %s350, %s353
      %p362 = scmp.eq.s32.totalorder %s41, 1
      %p363 = por %p361, %p362
      %p364 = scmp.ne.s32.totalorder %s353, %s354
      %p365 = scmp.eq.s32.totalorder %s41, 0
      %p366 = por %p364, %p365
      %p367 = scmp.ne.s32.totalorder %s353, %s354
      %p368 = scmp.eq.s32.totalorder %s42, 1
      %p369 = por %p367, %p368
      %p371 = scmp.ne.s32.totalorder %s354, %s370
      %p372 = scmp.eq.s32.totalorder %s42, 0
      %p373 = por %p371, %p372
      %s374 = ssub.s32 %s44, %s51
      %p375 = scmp.eq.s32.totalorder %s374, 0
      %s377 = sadd.s32 %s376, 1
      %s378 = scalar_select %p375, %s376, %s377
      %p381 = pneg %p375
      %p382 = scmp.eq.s32.totalorder %s36, 1
      %p383 = por %p381, %p382
      %p384 = scmp.ne.s32.totalorder %s376, %s379
      %p385 = scmp.eq.s32.totalorder %s36, 0
      %p386 = por %p384, %p385
      %p387 = scmp.ne.s32.totalorder %s376, %s379
      %p388 = scmp.eq.s32.totalorder %s41, 1
      %p389 = por %p387, %p388
      %p390 = scmp.ne.s32.totalorder %s379, %s380
      %p391 = scmp.eq.s32.totalorder %s41, 0
      %p392 = por %p390, %p391
      %p393 = scmp.ne.s32.totalorder %s379, %s380
      %p394 = scmp.eq.s32.totalorder %s42, 1
      %p395 = por %p393, %p394
      %p397 = scmp.ne.s32.totalorder %s380, %s396
      %p398 = scmp.eq.s32.totalorder %s42, 0
      %p399 = por %p397, %p398
      %s400 = ssub.s32 %s44, %s51
      %p401 = scmp.eq.s32.totalorder %s400, 0
      %s403 = sadd.s32 %s402, 1
      %s404 = scalar_select %p401, %s402, %s403
      %p407 = pneg %p401
      %p408 = scmp.eq.s32.totalorder %s36, 1
      %p409 = por %p407, %p408
      %p410 = scmp.ne.s32.totalorder %s402, %s405
      %p411 = scmp.eq.s32.totalorder %s36, 0
      %p412 = por %p410, %p411
      %p413 = scmp.ne.s32.totalorder %s402, %s405
      %p414 = scmp.eq.s32.totalorder %s41, 1
      %p415 = por %p413, %p414
      %p416 = scmp.ne.s32.totalorder %s405, %s406
      %p417 = scmp.eq.s32.totalorder %s41, 0
      %p418 = por %p416, %p417
      %p419 = scmp.ne.s32.totalorder %s405, %s406
      %p420 = scmp.eq.s32.totalorder %s42, 1
      %p421 = por %p419, %p420
      %p423 = scmp.ne.s32.totalorder %s406, %s422
      %p424 = scmp.eq.s32.totalorder %s42, 0
      %p425 = por %p423, %p424
      %s426 = ssub.s32 %s44, %s51
      %p427 = scmp.eq.s32.totalorder %s426, 0
      %s429 = sadd.s32 %s428, 1
      %s430 = scalar_select %p427, %s428, %s429
      %p433 = pneg %p427
      %p434 = scmp.eq.s32.totalorder %s36, 1
      %p435 = por %p433, %p434
      %p436 = scmp.ne.s32.totalorder %s428, %s431
      %p437 = scmp.eq.s32.totalorder %s36, 0
      %p438 = por %p436, %p437
      %p439 = scmp.ne.s32.totalorder %s428, %s431
      %p440 = scmp.eq.s32.totalorder %s41, 1
      %p441 = por %p439, %p440
      %p442 = scmp.ne.s32.totalorder %s431, %s432
      %p443 = scmp.eq.s32.totalorder %s41, 0
      %p444 = por %p442, %p443
      %p445 = scmp.ne.s32.totalorder %s431, %s432
      %p446 = scmp.eq.s32.totalorder %s42, 1
      %p447 = por %p445, %p446
      %p449 = scmp.ne.s32.totalorder %s432, %s448
      %p450 = scmp.eq.s32.totalorder %s42, 0
      %p451 = por %p449, %p450
      %s452 = ssub.s32 %s44, %s51
      %p453 = scmp.eq.s32.totalorder %s452, 0
      %s455 = sadd.s32 %s454, 1
      %s456 = scalar_select %p453, %s454, %s455
      %p459 = pneg %p453
      %p460 = scmp.eq.s32.totalorder %s36, 1
      %p461 = por %p459, %p460
      %p462 = scmp.ne.s32.totalorder %s454, %s457
      %p463 = scmp.eq.s32.totalorder %s36, 0
      %p464 = por %p462, %p463
      %p465 = scmp.ne.s32.totalorder %s454, %s457
      %p466 = scmp.eq.s32.totalorder %s41, 1
      %p467 = por %p465, %p466
      %p468 = scmp.ne.s32.totalorder %s457, %s458
      %p469 = scmp.eq.s32.totalorder %s41, 0
      %p470 = por %p468, %p469
      %p471 = scmp.ne.s32.totalorder %s457, %s458
      %p472 = scmp.eq.s32.totalorder %s42, 1
      %p473 = por %p471, %p472
      %p475 = scmp.ne.s32.totalorder %s458, %s474
      %p476 = scmp.eq.s32.totalorder %s42, 0
      %p477 = por %p475, %p476
      %s478 = ssub.s32 %s44, %s51
      %p479 = scmp.eq.s32.totalorder %s478, 0
      %s481 = sadd.s32 %s480, 1
      %s482 = scalar_select %p479, %s480, %s481
      %p485 = pneg %p479
      %p486 = scmp.eq.s32.totalorder %s36, 1
      %p487 = por %p485, %p486
      %p488 = scmp.ne.s32.totalorder %s480, %s483
      %p489 = scmp.eq.s32.totalorder %s36, 0
      %p490 = por %p488, %p489
      %p491 = scmp.ne.s32.totalorder %s480, %s483
      %p492 = scmp.eq.s32.totalorder %s41, 1
      %p493 = por %p491, %p492
      %p494 = scmp.ne.s32.totalorder %s483, %s484
      %p495 = scmp.eq.s32.totalorder %s41, 0
      %p496 = por %p494, %p495
      %p497 = scmp.ne.s32.totalorder %s483, %s484
      %p498 = scmp.eq.s32.totalorder %s42, 1
      %p499 = por %p497, %p498
      %p501 = scmp.ne.s32.totalorder %s484, %s500
      %p502 = scmp.eq.s32.totalorder %s42, 0
      %p503 = por %p501, %p502
      %s504 = ssub.s32 %s44, %s51
      %p505 = scmp.eq.s32.totalorder %s504, 0
      %s507 = sadd.s32 %s506, 1
      %s508 = scalar_select %p505, %s506, %s507
      %p511 = pneg %p505
      %p512 = scmp.eq.s32.totalorder %s36, 1
      %p513 = por %p511, %p512
      %p514 = scmp.ne.s32.totalorder %s506, %s509
      %p515 = scmp.eq.s32.totalorder %s36, 0
      %p516 = por %p514, %p515
      %p517 = scmp.ne.s32.totalorder %s506, %s509
      %p518 = scmp.eq.s32.totalorder %s41, 1
      %p519 = por %p517, %p518
      %p520 = scmp.ne.s32.totalorder %s509, %s510
      %p521 = scmp.eq.s32.totalorder %s41, 0
      %p522 = por %p520, %p521
      %p523 = scmp.ne.s32.totalorder %s509, %s510
      %p524 = scmp.eq.s32.totalorder %s42, 1
      %p525 = por %p523, %p524
      %p527 = scmp.ne.s32.totalorder %s510, %s526
      %p528 = scmp.eq.s32.totalorder %s42, 0
      %p529 = por %p527, %p528
      %s530 = ssub.s32 %s43, %s55
      %p531 = scmp.eq.s32.totalorder %s530, 0
      %s533 = sadd.s32 %s532, 1
      %s534 = scalar_select %p531, %s532, %s533
      %p537 = pneg %p531
      %p538 = scmp.eq.s32.totalorder %s36, 1
      %p539 = por %p537, %p538
      %p540 = scmp.ne.s32.totalorder %s532, %s535
      %p541 = scmp.eq.s32.totalorder %s36, 0
      %p542 = por %p540, %p541
      %p543 = scmp.ne.s32.totalorder %s532, %s535
      %p544 = scmp.eq.s32.totalorder %s41, 1
      %p545 = por %p543, %p544
      %p546 = scmp.ne.s32.totalorder %s535, %s536
      %p547 = scmp.eq.s32.totalorder %s41, 0
      %p548 = por %p546, %p547
      %p549 = scmp.ne.s32.totalorder %s535, %s536
      %p550 = scmp.eq.s32.totalorder %s42, 1
      %p551 = por %p549, %p550
      %p553 = scmp.ne.s32.totalorder %s536, %s552
      %p554 = scmp.eq.s32.totalorder %s42, 0
      %p555 = por %p553, %p554
      %p556 = scmp.le.s32.totalorder 1, %s36
      %p557 = scmp.lt.s32.totalorder %s36, 3
      %p558 = pnand %p556, %p557
      %p559 = pneg %p558
      // Predicated region
      $region9: #{tpu_custom_call.1} parent=5 // pred_check
        _
      $region10: #{tpu_custom_call.1} parent=5 // pred_check_branch
        %561 = sbr.rel (%p558) target = $region12
      $region11: #{tpu_custom_call.1} parent=5 // pred_region
        %s562 = ssub.s32 %s36, 1
        // Predicated region
        $region13: #{tpu_custom_call.1} parent=11 // pred_check
          %p563 = pneg %p74
        $region14: #{tpu_custom_call.1} parent=11 // pred_check_branch
          %565 = sbr.rel (%p563) target = $region16
        $region15: #{tpu_custom_call.1} parent=11 // pred_region
          %s566 = smul.u32 2, %s45
          %s568 = ssub.s32 256, 256
          %569 = vsyncadd [#allocation4], %s568
          %s570 = smul.addr %s566, 128
          %s571 = scalar_lea.hbm %s0, %s570
          %s572 = sshll.u32 [#allocation3], 4
          %s573 = int_to_ptr.vmem [resolvable:$true] %s572
          %578 = dma.hbm_to_vmem [thread:$0]  %s571, 256, %s573, [#allocation4], 128, 128, 8
        $region16: #{tpu_custom_call.1} parent=11 // pred_fallthru
          _
        // Predicated region
        $region17: #{tpu_custom_call.1} parent=11 // pred_check
          %p579 = pneg %p100
        $region18: #{tpu_custom_call.1} parent=11 // pred_check_branch
          %581 = sbr.rel (%p579) target = $region20
        $region19: #{tpu_custom_call.1} parent=11 // pred_region
          %s582 = smul.u32 2, %s45
          %s584 = ssub.s32 32, 32
          %585 = vsyncadd [#allocation7], %s584
          %s586 = smul.addr %s582, 16
          %s587 = scalar_lea.hbm %s1, %s586
          %s588 = sshll.u32 [#allocation6], 4
          %s589 = int_to_ptr.vmem [resolvable:$true] %s588
          %594 = dma.hbm_to_vmem [thread:$0]  %s587, 32, %s589, [#allocation7], 16, 16, 1
        $region20: #{tpu_custom_call.1} parent=11 // pred_fallthru
          _
        // Predicated region
        $region21: #{tpu_custom_call.1} parent=11 // pred_check
          %p595 = pneg %p126
        $region22: #{tpu_custom_call.1} parent=11 // pred_check_branch
          %597 = sbr.rel (%p595) target = $region24
        $region23: #{tpu_custom_call.1} parent=11 // pred_region
          %s598 = smul.u32 2, %s45
          %s600 = ssub.s32 256, 256
          %601 = vsyncadd [#allocation7], %s600
          %s602 = smul.addr %s598, 128
          %s603 = scalar_lea.hbm %s2, %s602
          %s604 = sshll.u32 [#allocation8], 4
          %s605 = int_to_ptr.vmem [resolvable:$true] %s604
          %610 = dma.hbm_to_vmem [thread:$0]  %s603, 256, %s605, [#allocation7], 128, 128, 8
        $region24: #{tpu_custom_call.1} parent=11 // pred_fallthru
          _
        // Predicated region
        $region25: #{tpu_custom_call.1} parent=11 // pred_check
          %p611 = pneg %p147
        $region26: #{tpu_custom_call.1} parent=11 // pred_check_branch
          %613 = sbr.rel (%p611) target = $region28
        $region27: #{tpu_custom_call.1} parent=11 // pred_region
          %s615 = ssub.s32 16, 16
          %616 = vsyncadd [#allocation10], %s615
          %s618 = sshll.u32 [#allocation9], 4
          %s619 = int_to_ptr.vmem [resolvable:$true] %s618
          %621 = dma.hbm_to_vmem [thread:$0]  %s3, 16, %s619, [#allocation10]
        $region28: #{tpu_custom_call.1} parent=11 // pred_fallthru
          _
        // Predicated region
        $region29: #{tpu_custom_call.1} parent=11 // pred_check
          %p622 = pneg %p168
        $region30: #{tpu_custom_call.1} parent=11 // pred_check_branch
          %624 = sbr.rel (%p622) target = $region32
        $region31: #{tpu_custom_call.1} parent=11 // pred_region
          %s626 = ssub.s32 16, 16
          %627 = vsyncadd [#allocation10], %s626
          %s629 = sshll.u32 [#allocation11], 4
          %s630 = int_to_ptr.vmem [resolvable:$true] %s629
          %632 = dma.hbm_to_vmem [thread:$0]  %s4, 16, %s630, [#allocation10]
        $region32: #{tpu_custom_call.1} parent=11 // pred_fallthru
          _
        // Predicated region
        $region33: #{tpu_custom_call.1} parent=11 // pred_check
          %p633 = pneg %p189
        $region34: #{tpu_custom_call.1} parent=11 // pred_check_branch
          %635 = sbr.rel (%p633) target = $region36
        $region35: #{tpu_custom_call.1} parent=11 // pred_region
          %s637 = ssub.s32 448, 448
          %638 = vsyncadd [#allocation13], %s637
          %s639 = sshll.u32 [#allocation12], 4
          %s640 = int_to_ptr.vmem [resolvable:$true] %s639
          %645 = dma.hbm_to_vmem [thread:$0]  %s5, 448, %s640, [#allocation13], 64, 64, 4
        $region36: #{tpu_custom_call.1} parent=11 // pred_fallthru
          _
        // Predicated region
        $region37: #{tpu_custom_call.1} parent=11 // pred_check
          %p646 = pneg %p210
        $region38: #{tpu_custom_call.1} parent=11 // pred_check_branch
          %648 = sbr.rel (%p646) target = $region40
        $region39: #{tpu_custom_call.1} parent=11 // pred_region
          %s650 = ssub.s32 16, 16
          %651 = vsyncadd [#allocation13], %s650
          %s653 = sshll.u32 [#allocation14], 4
          %s654 = int_to_ptr.vmem [resolvable:$true] %s653
          %656 = dma.hbm_to_vmem [thread:$0]  %s6, 16, %s654, [#allocation13]
        $region40: #{tpu_custom_call.1} parent=11 // pred_fallthru
          _
      $region12: #{tpu_custom_call.1} parent=5 // pred_fallthru
        _
      %p657 = scmp.lt.s32.totalorder %s36, 2
      // Predicated region
      $region41: #{tpu_custom_call.1} parent=5 // pred_check
        %p658 = pneg %p657
      $region42: #{tpu_custom_call.1} parent=5 // pred_check_branch
        %660 = sbr.rel (%p658) target = $region44
      $region43: #{tpu_custom_call.1} parent=5 // pred_region
        // Predicated region
        $region45: #{tpu_custom_call.1} parent=43 // pred_check
          %p661 = pneg %p230
        $region46: #{tpu_custom_call.1} parent=43 // pred_check_branch
          %663 = sbr.rel (%p661) target = $region48
        $region47: #{tpu_custom_call.1} parent=43 // pred_region
          %s664 = sand.u32 %s36, 1
          %s665 = scalar_lea.sflag [#allocation16], %s664
          %s666 = sand.u32 %s220, 1
          %s667 = smul.addr %s666, 192
          %s668 = scalar_lea.vmem [#allocation15], %s667
          %s670 = ssub.s32 3072, 3072
          %671 = vsyncadd %s665, %s670
          %s672 = smul.addr %s44, 48
          %s673 = smul.addr %s672, 64
          %s674 = scalar_lea.hbm %s7, %s673
          %s675 = sshll.u32 %s668, 4
          %s676 = int_to_ptr.vmem [resolvable:$true] %s675
          %681 = dma.hbm_to_vmem [thread:$0]  %s674, 3072, %s676, %s665, 192, 192, 12
        $region48: #{tpu_custom_call.1} parent=43 // pred_fallthru
          _
        // Predicated region
        $region49: #{tpu_custom_call.1} parent=43 // pred_check
          %p682 = pneg %p256
        $region50: #{tpu_custom_call.1} parent=43 // pred_check_branch
          %684 = sbr.rel (%p682) target = $region52
        $region51: #{tpu_custom_call.1} parent=43 // pred_region
          %p685 = scmp.lt.s32.totalorder %s44, 1
          %s686 = scalar_select %p685, %s44, 1
          %s687 = smul.addr %s686, 3
          %s688 = scalar_lea.vmem %s8, %s687
        $region52: #{tpu_custom_call.1} parent=43 // pred_fallthru
          _
        // Predicated region
        $region53: #{tpu_custom_call.1} parent=43 // pred_check
          %p689 = pneg %p282
        $region54: #{tpu_custom_call.1} parent=43 // pred_check_branch
          %691 = sbr.rel (%p689) target = $region56
        $region55: #{tpu_custom_call.1} parent=43 // pred_region
          %s692 = sand.u32 %s36, 1
          %s693 = scalar_lea.sflag [#allocation16], %s692
          %s694 = sand.u32 %s272, 1
          %s695 = smul.addr %s694, 64
          %s696 = scalar_lea.vmem [#allocation17], %s695
          %s698 = ssub.s32 1024, 1024
          %699 = vsyncadd %s693, %s698
          %s700 = smul.addr %s44, 16
          %s701 = smul.addr %s700, 64
          %s702 = scalar_lea.hbm %s9, %s701
          %s703 = sshll.u32 %s696, 4
          %s704 = int_to_ptr.vmem [resolvable:$true] %s703
          %709 = dma.hbm_to_vmem [thread:$0]  %s702, 1024, %s704, %s693, 64, 64, 4
        $region56: #{tpu_custom_call.1} parent=43 // pred_fallthru
          _
        // Predicated region
        $region57: #{tpu_custom_call.1} parent=43 // pred_check
          %p710 = pneg %p308
        $region58: #{tpu_custom_call.1} parent=43 // pred_check_branch
          %712 = sbr.rel (%p710) target = $region60
        $region59: #{tpu_custom_call.1} parent=43 // pred_region
          %p713 = scmp.lt.s32.totalorder %s44, 1
          %s714 = scalar_select %p713, %s44, 1
          %s715 = scalar_lea.vmem %s10, %s714
        $region60: #{tpu_custom_call.1} parent=43 // pred_fallthru
          _
        // Predicated region
        $region61: #{tpu_custom_call.1} parent=43 // pred_check
          %p716 = pneg %p334
        $region62: #{tpu_custom_call.1} parent=43 // pred_check_branch
          %718 = sbr.rel (%p716) target = $region64
        $region63: #{tpu_custom_call.1} parent=43 // pred_region
          %p719 = scmp.lt.s32.totalorder %s44, 1
          %s720 = scalar_select %p719, %s44, 1
          %s721 = scalar_lea.vmem %s11, %s720
        $region64: #{tpu_custom_call.1} parent=43 // pred_fallthru
          _
        // Predicated region
        $region65: #{tpu_custom_call.1} parent=43 // pred_check
          %p722 = pneg %p360
        $region66: #{tpu_custom_call.1} parent=43 // pred_check_branch
          %724 = sbr.rel (%p722) target = $region68
        $region67: #{tpu_custom_call.1} parent=43 // pred_region
          %p725 = scmp.lt.s32.totalorder %s44, 1
          %s726 = scalar_select %p725, %s44, 1
          %s727 = scalar_lea.vmem %s12, %s726
        $region68: #{tpu_custom_call.1} parent=43 // pred_fallthru
          _
        // Predicated region
        $region69: #{tpu_custom_call.1} parent=43 // pred_check
          %p728 = pneg %p386
        $region70: #{tpu_custom_call.1} parent=43 // pred_check_branch
          %730 = sbr.rel (%p728) target = $region72
        $region71: #{tpu_custom_call.1} parent=43 // pred_region
          %s731 = sand.u32 %s36, 1
          %s732 = scalar_lea.sflag [#allocation19], %s731
          %s733 = sand.u32 %s376, 1
          %s734 = smul.addr %s733, 256
          %s735 = scalar_lea.vmem [#allocation18], %s734
          %s737 = ssub.s32 4096, 4096
          %738 = vsyncadd %s732, %s737
          %s739 = smul.addr %s44, 64
          %s740 = smul.addr %s739, 64
          %s741 = scalar_lea.hbm %s13, %s740
          %s742 = sshll.u32 %s735, 4
          %s743 = int_to_ptr.vmem [resolvable:$true] %s742
          %748 = dma.hbm_to_vmem [thread:$0]  %s741, 4096, %s743, %s732, 256, 256, 16
        $region72: #{tpu_custom_call.1} parent=43 // pred_fallthru
          _
        // Predicated region
        $region73: #{tpu_custom_call.1} parent=43 // pred_check
          %p749 = pneg %p412
        $region74: #{tpu_custom_call.1} parent=43 // pred_check_branch
          %751 = sbr.rel (%p749) target = $region76
        $region75: #{tpu_custom_call.1} parent=43 // pred_region
          %p752 = scmp.lt.s32.totalorder %s44, 1
          %s753 = scalar_select %p752, %s44, 1
          %s754 = smul.addr %s753, 4
          %s755 = scalar_lea.vmem %s14, %s754
        $region76: #{tpu_custom_call.1} parent=43 // pred_fallthru
          _
        // Predicated region
        $region77: #{tpu_custom_call.1} parent=43 // pred_check
          %p756 = pneg %p438
        $region78: #{tpu_custom_call.1} parent=43 // pred_check_branch
          %758 = sbr.rel (%p756) target = $region80
        $region79: #{tpu_custom_call.1} parent=43 // pred_region
          %s759 = sand.u32 %s36, 1
          %s760 = scalar_lea.sflag [#allocation19], %s759
          %s761 = sand.u32 %s428, 1
          %s762 = smul.addr %s761, 256
          %s763 = scalar_lea.vmem [#allocation20], %s762
          %s765 = ssub.s32 4096, 4096
          %766 = vsyncadd %s760, %s765
          %s767 = smul.addr %s44, 64
          %s768 = smul.addr %s767, 64
          %s769 = scalar_lea.hbm %s15, %s768
          %s770 = sshll.u32 %s763, 4
          %s771 = int_to_ptr.vmem [resolvable:$true] %s770
          %776 = dma.hbm_to_vmem [thread:$0]  %s769, 4096, %s771, %s760, 64, 64, 4
        $region80: #{tpu_custom_call.1} parent=43 // pred_fallthru
          _
        // Predicated region
        $region81: #{tpu_custom_call.1} parent=43 // pred_check
          %p777 = pneg %p464
        $region82: #{tpu_custom_call.1} parent=43 // pred_check_branch
          %779 = sbr.rel (%p777) target = $region84
        $region83: #{tpu_custom_call.1} parent=43 // pred_region
          %p780 = scmp.lt.s32.totalorder %s44, 1
          %s781 = scalar_select %p780, %s44, 1
          %s782 = scalar_lea.vmem %s16, %s781
        $region84: #{tpu_custom_call.1} parent=43 // pred_fallthru
          _
        // Predicated region
        $region85: #{tpu_custom_call.1} parent=43 // pred_check
          %p783 = pneg %p490
        $region86: #{tpu_custom_call.1} parent=43 // pred_check_branch
          %785 = sbr.rel (%p783) target = $region88
        $region87: #{tpu_custom_call.1} parent=43 // pred_region
          %p786 = scmp.lt.s32.totalorder %s44, 1
          %s787 = scalar_select %p786, %s44, 1
          %s788 = scalar_lea.vmem %s17, %s787
        $region88: #{tpu_custom_call.1} parent=43 // pred_fallthru
          _
        // Predicated region
        $region89: #{tpu_custom_call.1} parent=43 // pred_check
          %p789 = pneg %p516
        $region90: #{tpu_custom_call.1} parent=43 // pred_check_branch
          %791 = sbr.rel (%p789) target = $region92
        $region91: #{tpu_custom_call.1} parent=43 // pred_region
          %p792 = scmp.lt.s32.totalorder %s44, 1
          %s793 = scalar_select %p792, %s44, 1
          %s794 = scalar_lea.vmem %s18, %s793
        $region92: #{tpu_custom_call.1} parent=43 // pred_fallthru
          _
      $region44: #{tpu_custom_call.1} parent=5 // pred_fallthru
        _
      %p795 = scmp.le.s32.totalorder 1, %s36
      %p796 = scmp.lt.s32.totalorder %s36, 3
      %p797 = pnand %p795, %p796
      %p798 = pneg %p797
      // Predicated region
      $region93: #{tpu_custom_call.1} parent=5 // pred_check
        _
      $region94: #{tpu_custom_call.1} parent=5 // pred_check_branch
        %800 = sbr.rel (%p797) target = $region96
      $region95: #{tpu_custom_call.1} parent=5 // pred_region
        %s801 = ssub.s32 %s36, 1
        // Predicated region
        $region97: #{tpu_custom_call.1} parent=95 // pred_check
          %p802 = pneg %p74
        $region98: #{tpu_custom_call.1} parent=95 // pred_check_branch
          %804 = sbr.rel (%p802) target = $region100
        $region99: #{tpu_custom_call.1} parent=95 // pred_region
          %805 = dma.done [#allocation4], 256
        $region100: #{tpu_custom_call.1} parent=95 // pred_fallthru
          _
        // Predicated region
        $region101: #{tpu_custom_call.1} parent=95 // pred_check
          %p806 = pneg %p100
        $region102: #{tpu_custom_call.1} parent=95 // pred_check_branch
          %808 = sbr.rel (%p806) target = $region104
        $region103: #{tpu_custom_call.1} parent=95 // pred_region
          %809 = dma.done [#allocation7], 32
        $region104: #{tpu_custom_call.1} parent=95 // pred_fallthru
          _
        // Predicated region
        $region105: #{tpu_custom_call.1} parent=95 // pred_check
          %p810 = pneg %p126
        $region106: #{tpu_custom_call.1} parent=95 // pred_check_branch
          %812 = sbr.rel (%p810) target = $region108
        $region107: #{tpu_custom_call.1} parent=95 // pred_region
          %813 = dma.done [#allocation7], 256
        $region108: #{tpu_custom_call.1} parent=95 // pred_fallthru
          _
        // Predicated region
        $region109: #{tpu_custom_call.1} parent=95 // pred_check
          %p814 = pneg %p147
        $region110: #{tpu_custom_call.1} parent=95 // pred_check_branch
          %816 = sbr.rel (%p814) target = $region112
        $region111: #{tpu_custom_call.1} parent=95 // pred_region
          %817 = dma.done [#allocation10], 16
        $region112: #{tpu_custom_call.1} parent=95 // pred_fallthru
          _
        // Predicated region
        $region113: #{tpu_custom_call.1} parent=95 // pred_check
          %p818 = pneg %p168
        $region114: #{tpu_custom_call.1} parent=95 // pred_check_branch
          %820 = sbr.rel (%p818) target = $region116
        $region115: #{tpu_custom_call.1} parent=95 // pred_region
          %821 = dma.done [#allocation10], 16
        $region116: #{tpu_custom_call.1} parent=95 // pred_fallthru
          _
        // Predicated region
        $region117: #{tpu_custom_call.1} parent=95 // pred_check
          %p822 = pneg %p189
        $region118: #{tpu_custom_call.1} parent=95 // pred_check_branch
          %824 = sbr.rel (%p822) target = $region120
        $region119: #{tpu_custom_call.1} parent=95 // pred_region
          %825 = dma.done [#allocation13], 448
        $region120: #{tpu_custom_call.1} parent=95 // pred_fallthru
          _
        // Predicated region
        $region121: #{tpu_custom_call.1} parent=95 // pred_check
          %p826 = pneg %p210
        $region122: #{tpu_custom_call.1} parent=95 // pred_check_branch
          %828 = sbr.rel (%p826) target = $region124
        $region123: #{tpu_custom_call.1} parent=95 // pred_region
          %829 = dma.done [#allocation13], 16
        $region124: #{tpu_custom_call.1} parent=95 // pred_fallthru
          _
        %s830 = sand.u32 %s41, 1
        %s831 = scalar_lea.sflag [#allocation16], %s830
        %s832 = sand.u32 %s223, 1
        %s833 = smul.addr %s832, 192
        %s834 = scalar_lea.vmem [#allocation15], %s833
        // Predicated region
        $region125: #{tpu_custom_call.1} parent=95 // pred_check
          %p835 = pneg %p236
        $region126: #{tpu_custom_call.1} parent=95 // pred_check_branch
          %837 = sbr.rel (%p835) target = $region128
        $region127: #{tpu_custom_call.1} parent=95 // pred_region
          %838 = dma.done %s831, 3072
        $region128: #{tpu_custom_call.1} parent=95 // pred_fallthru
          _
        %s839 = sand.u32 %s41, 1
        %s840 = scalar_lea.sflag [#allocation16], %s839
        %s841 = sand.u32 %s275, 1
        %s842 = smul.addr %s841, 64
        %s843 = scalar_lea.vmem [#allocation17], %s842
        // Predicated region
        $region129: #{tpu_custom_call.1} parent=95 // pred_check
          %p844 = pneg %p288
        $region130: #{tpu_custom_call.1} parent=95 // pred_check_branch
          %846 = sbr.rel (%p844) target = $region132
        $region131: #{tpu_custom_call.1} parent=95 // pred_region
          %847 = dma.done %s840, 1024
        $region132: #{tpu_custom_call.1} parent=95 // pred_fallthru
          _
        %s848 = sand.u32 %s41, 1
        %s849 = scalar_lea.sflag [#allocation19], %s848
        %s850 = sand.u32 %s379, 1
        %s851 = smul.addr %s850, 256
        %s852 = scalar_lea.vmem [#allocation18], %s851
        // Predicated region
        $region133: #{tpu_custom_call.1} parent=95 // pred_check
          %p853 = pneg %p392
        $region134: #{tpu_custom_call.1} parent=95 // pred_check_branch
          %855 = sbr.rel (%p853) target = $region136
        $region135: #{tpu_custom_call.1} parent=95 // pred_region
          %856 = dma.done %s849, 4096
        $region136: #{tpu_custom_call.1} parent=95 // pred_fallthru
          _
        %s857 = sand.u32 %s41, 1
        %s858 = scalar_lea.sflag [#allocation19], %s857
        %s859 = sand.u32 %s431, 1
        %s860 = smul.addr %s859, 256
        %s861 = scalar_lea.vmem [#allocation20], %s860
        // Predicated region
        $region137: #{tpu_custom_call.1} parent=95 // pred_check
          %p862 = pneg %p444
        $region138: #{tpu_custom_call.1} parent=95 // pred_check_branch
          %864 = sbr.rel (%p862) target = $region140
        $region139: #{tpu_custom_call.1} parent=95 // pred_region
          %865 = dma.done %s858, 4096
        $region140: #{tpu_custom_call.1} parent=95 // pred_fallthru
          _
        %p866 = pneg %p74
        %p867 = pneg %p71
        %p868 = pneg %p100
        %p869 = pneg %p97
        %p870 = pneg %p126
        %p871 = pneg %p123
        %p872 = pneg %p147
        %p873 = pneg %p144
        %p874 = pneg %p168
        %p875 = pneg %p165
        %p876 = pneg %p189
        %p877 = pneg %p186
        %p878 = pneg %p210
        %p879 = pneg %p207
        %s880 = sand.u32 %s41, 1
        %s881 = scalar_lea.sflag [#allocation16], %s880
        %s882 = sand.u32 %s223, 1
        %s883 = smul.addr %s882, 192
        %s884 = scalar_lea.vmem [#allocation15], %s883
        %p885 = pneg %p236
        %p886 = pneg %p233
        %p887 = scmp.lt.s32.totalorder %s46, 1
        %s888 = scalar_select %p887, %s46, 1
        %s889 = smul.addr %s888, 3
        %s890 = scalar_lea.vmem %s8, %s889
        %p891 = pneg %p262
        %p892 = pneg %p259
        %s893 = sand.u32 %s41, 1
        %s894 = scalar_lea.sflag [#allocation16], %s893
        %s895 = sand.u32 %s275, 1
        %s896 = smul.addr %s895, 64
        %s897 = scalar_lea.vmem [#allocation17], %s896
        %p898 = pneg %p288
        %p899 = pneg %p285
        %p900 = scmp.lt.s32.totalorder %s46, 1
        %s901 = scalar_select %p900, %s46, 1
        %s902 = scalar_lea.vmem %s10, %s901
        %p903 = pneg %p314
        %p904 = pneg %p311
        %p905 = scmp.lt.s32.totalorder %s46, 1
        %s906 = scalar_select %p905, %s46, 1
        %s907 = scalar_lea.vmem %s11, %s906
        %p908 = pneg %p340
        %p909 = pneg %p337
        %p910 = scmp.lt.s32.totalorder %s46, 1
        %s911 = scalar_select %p910, %s46, 1
        %s912 = scalar_lea.vmem %s12, %s911
        %p913 = pneg %p366
        %p914 = pneg %p363
        %s915 = sand.u32 %s41, 1
        %s916 = scalar_lea.sflag [#allocation19], %s915
        %s917 = sand.u32 %s379, 1
        %s918 = smul.addr %s917, 256
        %s919 = scalar_lea.vmem [#allocation18], %s918
        %p920 = pneg %p392
        %p921 = pneg %p389
        %p922 = scmp.lt.s32.totalorder %s46, 1
        %s923 = scalar_select %p922, %s46, 1
        %s924 = smul.addr %s923, 4
        %s925 = scalar_lea.vmem %s14, %s924
        %p926 = pneg %p418
        %p927 = pneg %p415
        %s928 = sand.u32 %s41, 1
        %s929 = scalar_lea.sflag [#allocation19], %s928
        %s930 = sand.u32 %s431, 1
        %s931 = smul.addr %s930, 256
        %s932 = scalar_lea.vmem [#allocation20], %s931
        %p933 = pneg %p444
        %p934 = pneg %p441
        %p935 = scmp.lt.s32.totalorder %s46, 1
        %s936 = scalar_select %p935, %s46, 1
        %s937 = scalar_lea.vmem %s16, %s936
        %p938 = pneg %p470
        %p939 = pneg %p467
        %p940 = scmp.lt.s32.totalorder %s46, 1
        %s941 = scalar_select %p940, %s46, 1
        %s942 = scalar_lea.vmem %s17, %s941
        %p943 = pneg %p496
        %p944 = pneg %p493
        %p945 = scmp.lt.s32.totalorder %s46, 1
        %s946 = scalar_select %p945, %s46, 1
        %s947 = scalar_lea.vmem %s18, %s946
        %p948 = pneg %p522
        %p949 = pneg %p519
        %p950 = pneg %p548
        %p951 = pneg %p545
        %s952 = smul.u32 2, %s45
        %s953 = smul.u32 2, %s45
        %s954 = smul.u32 2, %s45
        %p955 = scmp.lt.s32.totalorder %s46, 1
        %s956 = scalar_select %p955, %s46, 1
        %s957 = smul.addr %s956, 3
        %s958 = scalar_lea.vmem %s8, %s957
        %p959 = scmp.lt.s32.totalorder %s46, 1
        %s960 = scalar_select %p959, %s46, 1
        %s961 = scalar_lea.vmem %s10, %s960
        %p962 = scmp.lt.s32.totalorder %s46, 1
        %s963 = scalar_select %p962, %s46, 1
        %s964 = scalar_lea.vmem %s11, %s963
        %p965 = scmp.lt.s32.totalorder %s46, 1
        %s966 = scalar_select %p965, %s46, 1
        %s967 = scalar_lea.vmem %s12, %s966
        %p968 = scmp.lt.s32.totalorder %s46, 1
        %s969 = scalar_select %p968, %s46, 1
        %s970 = smul.addr %s969, 4
        %s971 = scalar_lea.vmem %s14, %s970
        %p972 = scmp.lt.s32.totalorder %s46, 1
        %s973 = scalar_select %p972, %s46, 1
        %s974 = scalar_lea.vmem %s16, %s973
        %p975 = scmp.lt.s32.totalorder %s46, 1
        %s976 = scalar_select %p975, %s46, 1
        %s977 = scalar_lea.vmem %s17, %s976
        %p978 = scmp.lt.s32.totalorder %s46, 1
        %s979 = scalar_select %p978, %s46, 1
        %s980 = scalar_lea.vmem %s18, %s979
        %s981 = smul.u32 2, %s45
        %p983 = scmp.eq.s32.totalorder %s46, 0
        // Predicated region
        $region141: #{tpu_custom_call.1} parent=95 // pred_check
          %p984 = pneg %p983
        $region142: #{tpu_custom_call.1} parent=95 // pred_check_branch
          %986 = sbr.rel (%p984) target = $region144
        $region143: #{tpu_custom_call.1} parent=95 // pred_region
          %v987 = vld [vmem:[#allocation3] sm:$0xff]
          %v988 = vld [vmem:[#allocation3 + $0x8] sm:$0xff]
          %v989 = vld [vmem:[#allocation9] sm:$0x1]
          %v990 = vld [vmem:[#allocation11] sm:$0x1]
          %991 = vadd.xlane.f32.xlu0 %v987
          %v992 = vpop.xlane.xlu0 %991
          %993 = vadd.xlane.f32.xlu0 %v988
          %v994 = vpop.xlane.xlu0 %993
          %v995 = vrcp.pop 128.0
          %v996 = vmul.f32 %v992, %v995
          %v997 = vmul.f32 %v994, %v995
          %v998 = vsub.f32 %v987, %v996
          %v999 = vsub.f32 %v988, %v997
          %v1000 = vmul.f32 %v998, %v998
          %v1001 = vmul.f32 %v999, %v999
          %1002 = vadd.xlane.f32.xlu0 %v1000
          %v1003 = vpop.xlane.xlu0 %1002
          %1004 = vadd.xlane.f32.xlu0 %v1001
          %v1005 = vpop.xlane.xlu0 %1004
          %v1006 = vmul.f32 %v1003, %v995
          %v1007 = vmul.f32 %v1005, %v995
          %v1008 = vadd.f32 %v1006, 1e-12
          %v1009 = vadd.f32 %v1007, 1e-12
          %v1010 = vrsqrt.pop %v1008
          %v1011 = vrsqrt.pop %v1009
          %v1012 = vmul.f32 %v998, %v1010
          %v1013 = vmul.f32 %v999, %v1011
          %v1015 = vlaneseq
          %v1016 = vshrl.u32 %v1015, 7
          %v1017 = vsub.s32 0, %v1016
          %v1018 = vrot.slane %v989, %v1017
          %v1020 = vmul.f32 %v1012, %v1018
          %v1021 = vmul.f32 %v1013, %v1018
          %v1023 = vlaneseq
          %v1024 = vshrl.u32 %v1023, 7
          %v1025 = vsub.s32 0, %v1024
          %v1026 = vrot.slane %v990, %v1025
          %v1028 = vadd.f32 %v1020, %v1026
          %v1029 = vadd.f32 %v1021, %v1026
          %1030 = vst [vmem:[#allocation2] sm:$0xff] %v1028
          %1031 = vst [vmem:[#allocation2 + $0x8] sm:$0xff] %v1029
        $region144: #{tpu_custom_call.1} parent=95 // pred_fallthru
          _
        %v1032 = vld [vmem:[#allocation2] sm:$0xff]
        %v1033 = vld [vmem:[#allocation2 + $0x8] sm:$0xff]
        %v1034 = vld [vmem:[#allocation6] sm:$0x1]
        %v1035 = vld [vmem:[#allocation6 + $0x1] sm:$0x1]
        %v1036 = vpack.c.bf16 %v1033, %v1032
        %v1037 = vld [vmem:[%s834] sm:$0xff]
        %v1038 = vld [vmem:[%s834 + $0x8] sm:$0xf]
        %v1039 = vld [vmem:[%s834 + $0xc] sm:$0xff]
        %v1040 = vld [vmem:[%s834 + $0x14] sm:$0xf]
        %v1041 = vld [vmem:[%s834 + $0x18] sm:$0xff]
        %v1042 = vld [vmem:[%s834 + $0x20] sm:$0xf]
        %v1043 = vld [vmem:[%s834 + $0x24] sm:$0xff]
        %v1044 = vld [vmem:[%s834 + $0x2c] sm:$0xf]
        %v1045 = vld [vmem:[%s834 + $0x30] sm:$0xff]
        %v1046 = vld [vmem:[%s834 + $0x38] sm:$0xf]
        %v1047 = vld [vmem:[%s834 + $0x3c] sm:$0xff]
        %v1048 = vld [vmem:[%s834 + $0x44] sm:$0xf]
        %v1049 = vld [vmem:[%s834 + $0x48] sm:$0xff]
        %v1050 = vld [vmem:[%s834 + $0x50] sm:$0xf]
        %v1051 = vld [vmem:[%s834 + $0x54] sm:$0xff]
        %v1052 = vld [vmem:[%s834 + $0x5c] sm:$0xf]
        %v1053 = vld [vmem:[%s834 + $0x60] sm:$0xff]
        %v1054 = vld [vmem:[%s834 + $0x68] sm:$0xf]
        %v1055 = vld [vmem:[%s834 + $0x6c] sm:$0xff]
        %v1056 = vld [vmem:[%s834 + $0x74] sm:$0xf]
        %v1057 = vld [vmem:[%s834 + $0x78] sm:$0xff]
        %v1058 = vld [vmem:[%s834 + $0x80] sm:$0xf]
        %v1059 = vld [vmem:[%s834 + $0x84] sm:$0xff]
        %v1060 = vld [vmem:[%s834 + $0x8c] sm:$0xf]
        %v1061 = vld [vmem:[%s834 + $0x90] sm:$0xff]
        %v1062 = vld [vmem:[%s834 + $0x98] sm:$0xf]
        %v1063 = vld [vmem:[%s834 + $0x9c] sm:$0xff]
        %v1064 = vld [vmem:[%s834 + $0xa4] sm:$0xf]
        %v1065 = vld [vmem:[%s834 + $0xa8] sm:$0xff]
        %v1066 = vld [vmem:[%s834 + $0xb0] sm:$0xf]
        %v1067 = vld [vmem:[%s834 + $0xb4] sm:$0xff]
        %v1068 = vld [vmem:[%s834 + $0xbc] sm:$0xf]
        %v1069 = vld [vmem:[%s958] sm:$0x7]
        %v1071 = vlaneseq
        %v1072 = vshrl.u32 %v1071, 7
        %v1073 = vsub.s32 0, %v1072
        %v1074 = vrot.slane %v1069, %v1073
        %v1075 = vlaneseq
        %v1076 = vshrl.u32 %v1075, 7
        %v1077 = vsub.s32 1, %v1076
        %v1078 = vrot.slane %v1069, %v1077
        %v1079 = vlaneseq
        %v1080 = vshrl.u32 %v1079, 7
        %v1081 = vsub.s32 2, %v1080
        %v1082 = vrot.slane %v1069, %v1081
        %v1118 = vunpack.c.l.b16 %v1037
        %v1119 = vunpack.c.h.b16 %v1037
        %v1120 = vunpack.c.l.b16 %v1038
        %v1121 = vunpack.c.l.b16 %v1039
        %v1122 = vunpack.c.h.b16 %v1039
        %v1123 = vunpack.c.l.b16 %v1040
        %v1124 = vunpack.c.l.b16 %v1041
        %v1125 = vunpack.c.h.b16 %v1041
        %v1126 = vunpack.c.l.b16 %v1042
        %v1127 = vunpack.c.l.b16 %v1043
        %v1128 = vunpack.c.h.b16 %v1043
        %v1129 = vunpack.c.l.b16 %v1044
        %v1130 = vunpack.c.l.b16 %v1045
        %v1131 = vunpack.c.h.b16 %v1045
        %v1132 = vunpack.c.l.b16 %v1046
        %v1133 = vunpack.c.l.b16 %v1047
        %v1134 = vunpack.c.h.b16 %v1047
        %v1135 = vunpack.c.l.b16 %v1048
        %v1136 = vunpack.c.l.b16 %v1049
        %v1137 = vunpack.c.h.b16 %v1049
        %v1138 = vunpack.c.l.b16 %v1050
        %v1139 = vunpack.c.l.b16 %v1051
        %v1140 = vunpack.c.h.b16 %v1051
        %v1141 = vunpack.c.l.b16 %v1052
        %v1142 = vunpack.c.l.b16 %v1053
        %v1143 = vunpack.c.h.b16 %v1053
        %v1144 = vunpack.c.l.b16 %v1054
        %v1145 = vunpack.c.l.b16 %v1055
        %v1146 = vunpack.c.h.b16 %v1055
        %v1147 = vunpack.c.l.b16 %v1056
        %v1148 = vunpack.c.l.b16 %v1057
        %v1149 = vunpack.c.h.b16 %v1057
        %v1150 = vunpack.c.l.b16 %v1058
        %v1151 = vunpack.c.l.b16 %v1059
        %v1152 = vunpack.c.h.b16 %v1059
        %v1153 = vunpack.c.l.b16 %v1060
        %v1154 = vunpack.c.l.b16 %v1061
        %v1155 = vunpack.c.h.b16 %v1061
        %v1156 = vunpack.c.l.b16 %v1062
        %v1157 = vunpack.c.l.b16 %v1063
        %v1158 = vunpack.c.h.b16 %v1063
        %v1159 = vunpack.c.l.b16 %v1064
        %v1160 = vunpack.c.l.b16 %v1065
        %v1161 = vunpack.c.h.b16 %v1065
        %v1162 = vunpack.c.l.b16 %v1066
        %v1163 = vunpack.c.l.b16 %v1067
        %v1164 = vunpack.c.h.b16 %v1067
        %v1165 = vunpack.c.l.b16 %v1068
        %v1166 = vpack.c.b16 %v1121, %v1118
        %v1167 = vpack.c.b16 %v1122, %v1119
        %v1168 = vpack.c.b16 %v1123, %v1120
        %v1169 = vpack.c.b16 %v1127, %v1124
        %v1170 = vpack.c.b16 %v1128, %v1125
        %v1171 = vpack.c.b16 %v1129, %v1126
        %v1172 = vpack.c.b16 %v1133, %v1130
        %v1173 = vpack.c.b16 %v1134, %v1131
        %v1174 = vpack.c.b16 %v1135, %v1132
        %v1175 = vpack.c.b16 %v1139, %v1136
        %v1176 = vpack.c.b16 %v1140, %v1137
        %v1177 = vpack.c.b16 %v1141, %v1138
        %v1178 = vpack.c.b16 %v1145, %v1142
        %v1179 = vpack.c.b16 %v1146, %v1143
        %v1180 = vpack.c.b16 %v1147, %v1144
        %v1181 = vpack.c.b16 %v1151, %v1148
        %v1182 = vpack.c.b16 %v1152, %v1149
        %v1183 = vpack.c.b16 %v1153, %v1150
        %v1184 = vpack.c.b16 %v1157, %v1154
        %v1185 = vpack.c.b16 %v1158, %v1155
        %v1186 = vpack.c.b16 %v1159, %v1156
        %v1187 = vpack.c.b16 %v1163, %v1160
        %v1188 = vpack.c.b16 %v1164, %v1161
        %v1189 = vpack.c.b16 %v1165, %v1162
        %1214 = vmatprep.subr.bf16.mxu0 %v1188
        %1215 = vmatpush1.bf16.msra.mxu0 %v1187
        %1216 = vmatprep.subr.bf16.mxu0 %v1185
        %1217 = vmatpush1.bf16.msra.mxu0 %v1184
        %1218 = vmatprep.subr.bf16.mxu0 %v1182
        %1219 = vmatpush1.bf16.msra.mxu0 %v1181
        %1220 = vmatprep.subr.bf16.mxu0 %v1179
        %1221 = vmatpush1.bf16.msra.mxu0 %v1178
        %1222 = vmatprep.subr.bf16.mxu0 %v1176
        %1223 = vmatpush1.bf16.msra.mxu0 %v1175
        %1224 = vmatprep.subr.bf16.mxu0 %v1173
        %1225 = vmatpush1.bf16.msra.mxu0 %v1172
        %1226 = vmatprep.subr.bf16.mxu0 %v1170
        %1227 = vmatpush1.bf16.msra.mxu0 %v1169
        %1228 = vmatprep.subr.bf16.mxu0 %v1167
        %1229 = vmatpush1.bf16.msra.mxu0 %v1166
        %1230 = vmatprep.subr.bf16.mxu0 0
        %1231 = vmatpush2.bf16.msra.mxu0 0
        %1232 = vmatprep.subr.bf16.mxu0 0
        %1233 = vmatpush2.bf16.msra.mxu0 0
        %1234 = vmatprep.subr.bf16.mxu0 0
        %1235 = vmatpush2.bf16.msra.mxu0 0
        %1236 = vmatprep.subr.bf16.mxu0 0
        %1237 = vmatpush2.bf16.msra.mxu0 0
        %1238 = vmatprep.subr.bf16.mxu0 0
        %1239 = vmatpush2.bf16.msra.mxu0 0
        %1240 = vmatprep.subr.bf16.mxu0 0
        %1241 = vmatpush2.bf16.msra.mxu0 0
        %1242 = vmatprep.subr.bf16.mxu0 0
        %1243 = vmatpush2.bf16.msra.mxu0 0
        %1244 = vmatprep.subr.bf16.mxu0 0
        %1245 = vmatpush2.bf16.msra.mxu0 0
        %1246 = vmatprep.mubr.bf16.mxu0 0
        %1247 = vmatmul.mubr.bf16.gmra.mxu0 %v1036
        %v1248 = vpop.f32.mrf.mxu0
        %v1249 = vadd.f32 %v1074, %v1248
        %v1250 = vpop.f32.mrf.mxu0
        %v1251 = vadd.f32 %v1078, %v1250
        %v1252 = vpop.f32.mrf.mxu0
        %v1253 = vadd.f32 %v1074, %v1252
        %v1254 = vpop.f32.mrf.mxu0
        %v1255 = vadd.f32 %v1078, %v1254
        %1256 = vdwg.mxu0
        %1257 = vmatprep.subr.bf16.mxu0 0
        %1258 = vmatpush1.bf16.msra.mxu0 %v1189
        %1259 = vmatprep.subr.bf16.mxu0 0
        %1260 = vmatpush1.bf16.msra.mxu0 %v1186
        %1261 = vmatprep.subr.bf16.mxu0 0
        %1262 = vmatpush1.bf16.msra.mxu0 %v1183
        %1263 = vmatprep.subr.bf16.mxu0 0
        %1264 = vmatpush1.bf16.msra.mxu0 %v1180
        %1265 = vmatprep.subr.bf16.mxu0 0
        %1266 = vmatpush1.bf16.msra.mxu0 %v1177
        %1267 = vmatprep.subr.bf16.mxu0 0
        %1268 = vmatpush1.bf16.msra.mxu0 %v1174
        %1269 = vmatprep.subr.bf16.mxu0 0
        %1270 = vmatpush1.bf16.msra.mxu0 %v1171
        %1271 = vmatprep.subr.bf16.mxu0 0
        %1272 = vmatpush1.bf16.msra.mxu0 %v1168
        %1273 = vmatprep.subr.bf16.mxu0 0
        %1274 = vmatpush2.bf16.msra.mxu0 0
        %1275 = vmatprep.subr.bf16.mxu0 0
        %1276 = vmatpush2.bf16.msra.mxu0 0
        %1277 = vmatprep.subr.bf16.mxu0 0
        %1278 = vmatpush2.bf16.msra.mxu0 0
        %1279 = vmatprep.subr.bf16.mxu0 0
        %1280 = vmatpush2.bf16.msra.mxu0 0
        %1281 = vmatprep.subr.bf16.mxu0 0
        %1282 = vmatpush2.bf16.msra.mxu0 0
        %1283 = vmatprep.subr.bf16.mxu0 0
        %1284 = vmatpush2.bf16.msra.mxu0 0
        %1285 = vmatprep.subr.bf16.mxu0 0
        %1286 = vmatpush2.bf16.msra.mxu0 0
        %1287 = vmatprep.subr.bf16.mxu0 0
        %1288 = vmatpush2.bf16.msra.mxu0 0
        %1289 = vmatprep.mubr.bf16.mxu0 0
        %1290 = vmatmul.mubr.bf16.gmra.mxu0 %v1036
        %v1291 = vpop.f32.mrf.mxu0
        %v1292 = vadd.f32 %v1082, %v1291
        %v1293 = vpop.f32.mrf.mxu0
        %v1294 = vpop.f32.mrf.mxu0
        %v1295 = vadd.f32 %v1082, %v1294
        %v1296 = vpop.f32.mrf.mxu0
        %1297 = vdwg.mxu0
        %v1298 = vpack.c.bf16 %v1249, %v1249
        %v1299 = vpack.c.bf16 %v1253, %v1253
        %v1300 = vpack.c.bf16 %v1251, %v1251
        %v1301 = vpack.c.bf16 %v1255, %v1255
        %v1302 = vpack.c.bf16 %v1292, %v1292
        %v1303 = vpack.c.bf16 %v1295, %v1295
        %v1306 = vlaneseq
        %v1307 = vshrl.u32 %v1306, 7
        %v1308 = vsub.s32 0, %v1307
        %v1309 = vrot.slane %v1034, %v1308
        %v1310 = vlaneseq
        %v1311 = vshrl.u32 %v1310, 7
        %v1312 = vsub.s32 0, %v1311
        %v1313 = vrot.slane %v1035, %v1312
        %vm1316 = vcmask 523264
        %v1318 = vsel %vm1316, %v1298, 0
        %v1321 = vsel %vm1316, %v1300, 0
        %1323 = vmatprep.subr.bf16.mxu0 0
        %1324 = vmatpush1.bf16.xpose.msra.mxu0 0
        %1325 = vmatprep.subr.bf16.mxu0 0
        %1326 = vmatpush1.bf16.xpose.msra.mxu0 0
        %1327 = vmatprep.subr.bf16.mxu0 0
        %1328 = vmatpush1.bf16.xpose.msra.mxu0 0
        %1329 = vmatprep.subr.bf16.mxu0 0
        %1330 = vmatpush1.bf16.xpose.msra.mxu0 0
        %1331 = vmatprep.subr.bf16.mxu0 0
        %1332 = vmatpush1.bf16.xpose.msra.mxu0 0
        %1333 = vmatprep.subr.bf16.mxu0 0
        %1334 = vmatpush1.bf16.xpose.msra.mxu0 0
        %1335 = vmatprep.subr.bf16.mxu0 0
        %1336 = vmatpush1.bf16.xpose.msra.mxu0 0
        %1337 = vmatprep.subr.bf16.mxu0 0
        %1338 = vmatpush1.bf16.xpose.msra.mxu0 %v1321
        %1339 = vmatprep.subr.bf16.mxu0 0
        %1340 = vmatpush2.bf16.xpose.msra.mxu0 0
        %1341 = vmatprep.subr.bf16.mxu0 0
        %1342 = vmatpush2.bf16.xpose.msra.mxu0 0
        %1343 = vmatprep.subr.bf16.mxu0 0
        %1344 = vmatpush2.bf16.xpose.msra.mxu0 0
        %1345 = vmatprep.subr.bf16.mxu0 0
        %1346 = vmatpush2.bf16.xpose.msra.mxu0 0
        %1347 = vmatprep.subr.bf16.mxu0 0
        %1348 = vmatpush2.bf16.xpose.msra.mxu0 0
        %1349 = vmatprep.subr.bf16.mxu0 0
        %1350 = vmatpush2.bf16.xpose.msra.mxu0 0
        %1351 = vmatprep.subr.bf16.mxu0 0
        %1352 = vmatpush2.bf16.xpose.msra.mxu0 0
        %1353 = vmatprep.subr.bf16.mxu0 0
        %1354 = vmatpush2.bf16.xpose.msra.mxu0 0
        %1355 = vmatprep.mubr.bf16.mxu0 0
        %1356 = vmatmul.mubr.bf16.gmra.mxu0 %v1318
        %v1357 = vpop.f32.mrf.mxu0
        %v1358 = vadd.f32 %v1309, %v1357
        %v1359 = vpop.f32.mrf.mxu0
        %v1360 = vpop.f32.mrf.mxu0
        %v1361 = vpop.f32.mrf.mxu0
        %1362 = vdwg.mxu0
        %v1364 = vsel %vm1316, %v1299, 0
        %v1367 = vsel %vm1316, %v1301, 0
        %1369 = vmatprep.subr.bf16.mxu0 0
        %1370 = vmatpush1.bf16.xpose.msra.mxu0 0
        %1371 = vmatprep.subr.bf16.mxu0 0
        %1372 = vmatpush1.bf16.xpose.msra.mxu0 0
        %1373 = vmatprep.subr.bf16.mxu0 0
        %1374 = vmatpush1.bf16.xpose.msra.mxu0 0
        %1375 = vmatprep.subr.bf16.mxu0 0
        %1376 = vmatpush1.bf16.xpose.msra.mxu0 0
        %1377 = vmatprep.subr.bf16.mxu0 0
        %1378 = vmatpush1.bf16.xpose.msra.mxu0 0
        %1379 = vmatprep.subr.bf16.mxu0 0
        %1380 = vmatpush1.bf16.xpose.msra.mxu0 0
        %1381 = vmatprep.subr.bf16.mxu0 0
        %1382 = vmatpush1.bf16.xpose.msra.mxu0 0
        %1383 = vmatprep.subr.bf16.mxu0 0
        %1384 = vmatpush1.bf16.xpose.msra.mxu0 %v1367
        %1385 = vmatprep.subr.bf16.mxu0 0
        %1386 = vmatpush2.bf16.xpose.msra.mxu0 0
        %1387 = vmatprep.subr.bf16.mxu0 0
        %1388 = vmatpush2.bf16.xpose.msra.mxu0 0
        %1389 = vmatprep.subr.bf16.mxu0 0
        %1390 = vmatpush2.bf16.xpose.msra.mxu0 0
        %1391 = vmatprep.subr.bf16.mxu0 0
        %1392 = vmatpush2.bf16.xpose.msra.mxu0 0
        %1393 = vmatprep.subr.bf16.mxu0 0
        %1394 = vmatpush2.bf16.xpose.msra.mxu0 0
        %1395 = vmatprep.subr.bf16.mxu0 0
        %1396 = vmatpush2.bf16.xpose.msra.mxu0 0
        %1397 = vmatprep.subr.bf16.mxu0 0
        %1398 = vmatpush2.bf16.xpose.msra.mxu0 0
        %1399 = vmatprep.subr.bf16.mxu0 0
        %1400 = vmatpush2.bf16.xpose.msra.mxu0 0
        %1401 = vmatprep.mubr.bf16.mxu0 0
        %1402 = vmatmul.mubr.bf16.gmra.mxu0 %v1364
        %v1403 = vpop.f32.mrf.mxu0
        %v1404 = vadd.f32 %v1313, %v1403
        %v1405 = vpop.f32.mrf.mxu0
        %v1406 = vpop.f32.mrf.mxu0
        %v1407 = vpop.f32.mrf.mxu0
        %1408 = vdwg.mxu0
        %vm1409 = vcmask 64512
        %v1410 = vsel %vm1409, %v1358, -inf
        %1411 = vmax.xlane.f32.xlu0 %v1410
        %v1412 = vpop.xlane.xlu0 %1411
        %v1413 = vsel %vm1409, %v1404, -inf
        %1414 = vmax.xlane.f32.xlu0 %v1413
        %v1415 = vpop.xlane.xlu0 %1414
        %v1416 = vsub.f32 %v1358, %v1412
        %v1417 = vsub.f32 %v1404, %v1415
        %v1418 = vmul.f32 %v1416, 1.442695
        %v1419 = vpow.pop %v1418
        %v1420 = vmul.f32 %v1417, 1.442695
        %v1421 = vpow.pop %v1420
        %v1422 = vsel %vm1409, %v1419, 0.0
        %1423 = vadd.xlane.f32.xlu0 %v1422
        %v1424 = vpop.xlane.xlu0 %1423
        %v1425 = vsel %vm1409, %v1421, 0.0
        %1426 = vadd.xlane.f32.xlu0 %v1425
        %v1427 = vpop.xlane.xlu0 %1426
        %v1428 = vrcp.pop %v1424
        %v1429 = vrcp.pop %v1427
        %v1430 = vmul.f32 %v1419, %v1428
        %v1431 = vmul.f32 %v1421, %v1429
        %v1432 = vpack.c.bf16 %v1430, %v1430
        %v1433 = vpack.c.bf16 %v1431, %v1431
        %v1435 = vsel %vm1409, %v1432, 0
        %vm1437 = vcmask 1043456
        %v1439 = vsel %vm1437, %v1302, 0
        %1441 = vmatprep.subr.bf16.mxu0 0
        %1442 = vmatpush1.bf16.msra.mxu0 0
        %1443 = vmatprep.subr.bf16.mxu0 0
        %1444 = vmatpush1.bf16.msra.mxu0 0
        %1445 = vmatprep.subr.bf16.mxu0 0
        %1446 = vmatpush1.bf16.msra.mxu0 0
        %1447 = vmatprep.subr.bf16.mxu0 0
        %1448 = vmatpush1.bf16.msra.mxu0 0
        %1449 = vmatprep.subr.bf16.mxu0 0
        %1450 = vmatpush1.bf16.msra.mxu0 0
        %1451 = vmatprep.subr.bf16.mxu0 0
        %1452 = vmatpush1.bf16.msra.mxu0 0
        %1453 = vmatprep.subr.bf16.mxu0 0
        %1454 = vmatpush1.bf16.msra.mxu0 0
        %1455 = vmatprep.subr.bf16.mxu0 0
        %1456 = vmatpush1.bf16.msra.mxu0 %v1439
        %1457 = vmatprep.subr.bf16.mxu0 0
        %1458 = vmatpush2.bf16.msra.mxu0 0
        %1459 = vmatprep.subr.bf16.mxu0 0
        %1460 = vmatpush2.bf16.msra.mxu0 0
        %1461 = vmatprep.subr.bf16.mxu0 0
        %1462 = vmatpush2.bf16.msra.mxu0 0
        %1463 = vmatprep.subr.bf16.mxu0 0
        %1464 = vmatpush2.bf16.msra.mxu0 0
        %1465 = vmatprep.subr.bf16.mxu0 0
        %1466 = vmatpush2.bf16.msra.mxu0 0
        %1467 = vmatprep.subr.bf16.mxu0 0
        %1468 = vmatpush2.bf16.msra.mxu0 0
        %1469 = vmatprep.subr.bf16.mxu0 0
        %1470 = vmatpush2.bf16.msra.mxu0 0
        %1471 = vmatprep.subr.bf16.mxu0 0
        %1472 = vmatpush2.bf16.msra.mxu0 0
        %1473 = vmatprep.mubr.bf16.mxu0 0
        %1474 = vmatmul.mubr.bf16.gmra.mxu0 %v1435
        %v1475 = vpop.f32.mrf.mxu0
        %v1476 = vadd.f32 0.0, %v1475
        %v1477 = vpop.f32.mrf.mxu0
        %v1478 = vpop.f32.mrf.mxu0
        %v1479 = vpop.f32.mrf.mxu0
        %1480 = vdwg.mxu0
        %v1482 = vsel %vm1409, %v1433, 0
        %v1485 = vsel %vm1437, %v1303, 0
        %1487 = vmatprep.subr.bf16.mxu0 0
        %1488 = vmatpush1.bf16.msra.mxu0 0
        %1489 = vmatprep.subr.bf16.mxu0 0
        %1490 = vmatpush1.bf16.msra.mxu0 0
        %1491 = vmatprep.subr.bf16.mxu0 0
        %1492 = vmatpush1.bf16.msra.mxu0 0
        %1493 = vmatprep.subr.bf16.mxu0 0
        %1494 = vmatpush1.bf16.msra.mxu0 0
        %1495 = vmatprep.subr.bf16.mxu0 0
        %1496 = vmatpush1.bf16.msra.mxu0 0
        %1497 = vmatprep.subr.bf16.mxu0 0
        %1498 = vmatpush1.bf16.msra.mxu0 0
        %1499 = vmatprep.subr.bf16.mxu0 0
        %1500 = vmatpush1.bf16.msra.mxu0 0
        %1501 = vmatprep.subr.bf16.mxu0 0
        %1502 = vmatpush1.bf16.msra.mxu0 %v1485
        %1503 = vmatprep.subr.bf16.mxu0 0
        %1504 = vmatpush2.bf16.msra.mxu0 0
        %1505 = vmatprep.subr.bf16.mxu0 0
        %1506 = vmatpush2.bf16.msra.mxu0 0
        %1507 = vmatprep.subr.bf16.mxu0 0
        %1508 = vmatpush2.bf16.msra.mxu0 0
        %1509 = vmatprep.subr.bf16.mxu0 0
        %1510 = vmatpush2.bf16.msra.mxu0 0
        %1511 = vmatprep.subr.bf16.mxu0 0
        %1512 = vmatpush2.bf16.msra.mxu0 0
        %1513 = vmatprep.subr.bf16.mxu0 0
        %1514 = vmatpush2.bf16.msra.mxu0 0
        %1515 = vmatprep.subr.bf16.mxu0 0
        %1516 = vmatpush2.bf16.msra.mxu0 0
        %1517 = vmatprep.subr.bf16.mxu0 0
        %1518 = vmatpush2.bf16.msra.mxu0 0
        %1519 = vmatprep.mubr.bf16.mxu0 0
        %1520 = vmatmul.mubr.bf16.gmra.mxu0 %v1482
        %v1521 = vpop.f32.mrf.mxu0
        %v1522 = vadd.f32 0.0, %v1521
        %v1523 = vpop.f32.mrf.mxu0
        %v1524 = vpop.f32.mrf.mxu0
        %v1525 = vpop.f32.mrf.mxu0
        %1526 = vdwg.mxu0
        %1528 = vrot.lane.b32.xlu0 %v1298, 64
        %v1529 = vpop.permute.xlu0 %1528
        %1531 = vrot.lane.b32.xlu0 %v1300, 64
        %v1532 = vpop.permute.xlu0 %1531
        %v1534 = vsel %vm1316, %v1529, 0
        %v1537 = vsel %vm1316, %v1532, 0
        %1539 = vmatprep.subr.bf16.mxu0 0
        %1540 = vmatpush1.bf16.xpose.msra.mxu0 0
        %1541 = vmatprep.subr.bf16.mxu0 0
        %1542 = vmatpush1.bf16.xpose.msra.mxu0 0
        %1543 = vmatprep.subr.bf16.mxu0 0
        %1544 = vmatpush1.bf16.xpose.msra.mxu0 0
        %1545 = vmatprep.subr.bf16.mxu0 0
        %1546 = vmatpush1.bf16.xpose.msra.mxu0 0
        %1547 = vmatprep.subr.bf16.mxu0 0
        %1548 = vmatpush1.bf16.xpose.msra.mxu0 0
        %1549 = vmatprep.subr.bf16.mxu0 0
        %1550 = vmatpush1.bf16.xpose.msra.mxu0 0
        %1551 = vmatprep.subr.bf16.mxu0 0
        %1552 = vmatpush1.bf16.xpose.msra.mxu0 0
        %1553 = vmatprep.subr.bf16.mxu0 0
        %1554 = vmatpush1.bf16.xpose.msra.mxu0 %v1537
        %1555 = vmatprep.subr.bf16.mxu0 0
        %1556 = vmatpush2.bf16.xpose.msra.mxu0 0
        %1557 = vmatprep.subr.bf16.mxu0 0
        %1558 = vmatpush2.bf16.xpose.msra.mxu0 0
        %1559 = vmatprep.subr.bf16.mxu0 0
        %1560 = vmatpush2.bf16.xpose.msra.mxu0 0
        %1561 = vmatprep.subr.bf16.mxu0 0
        %1562 = vmatpush2.bf16.xpose.msra.mxu0 0
        %1563 = vmatprep.subr.bf16.mxu0 0
        %1564 = vmatpush2.bf16.xpose.msra.mxu0 0
        %1565 = vmatprep.subr.bf16.mxu0 0
        %1566 = vmatpush2.bf16.xpose.msra.mxu0 0
        %1567 = vmatprep.subr.bf16.mxu0 0
        %1568 = vmatpush2.bf16.xpose.msra.mxu0 0
        %1569 = vmatprep.subr.bf16.mxu0 0
        %1570 = vmatpush2.bf16.xpose.msra.mxu0 0
        %1571 = vmatprep.mubr.bf16.mxu0 0
        %1572 = vmatmul.mubr.bf16.gmra.mxu0 %v1534
        %v1573 = vpop.f32.mrf.mxu0
        %v1574 = vadd.f32 %v1309, %v1573
        %v1575 = vpop.f32.mrf.mxu0
        %v1576 = vpop.f32.mrf.mxu0
        %v1577 = vpop.f32.mrf.mxu0
        %1578 = vdwg.mxu0
        %1580 = vrot.lane.b32.xlu0 %v1299, 64
        %v1581 = vpop.permute.xlu0 %1580
        %1583 = vrot.lane.b32.xlu0 %v1301, 64
        %v1584 = vpop.permute.xlu0 %1583
        %v1586 = vsel %vm1316, %v1581, 0
        %v1589 = vsel %vm1316, %v1584, 0
        %1591 = vmatprep.subr.bf16.mxu0 0
        %1592 = vmatpush1.bf16.xpose.msra.mxu0 0
        %1593 = vmatprep.subr.bf16.mxu0 0
        %1594 = vmatpush1.bf16.xpose.msra.mxu0 0
        %1595 = vmatprep.subr.bf16.mxu0 0
        %1596 = vmatpush1.bf16.xpose.msra.mxu0 0
        %1597 = vmatprep.subr.bf16.mxu0 0
        %1598 = vmatpush1.bf16.xpose.msra.mxu0 0
        %1599 = vmatprep.subr.bf16.mxu0 0
        %1600 = vmatpush1.bf16.xpose.msra.mxu0 0
        %1601 = vmatprep.subr.bf16.mxu0 0
        %1602 = vmatpush1.bf16.xpose.msra.mxu0 0
        %1603 = vmatprep.subr.bf16.mxu0 0
        %1604 = vmatpush1.bf16.xpose.msra.mxu0 0
        %1605 = vmatprep.subr.bf16.mxu0 0
        %1606 = vmatpush1.bf16.xpose.msra.mxu0 %v1589
        %1607 = vmatprep.subr.bf16.mxu0 0
        %1608 = vmatpush2.bf16.xpose.msra.mxu0 0
        %1609 = vmatprep.subr.bf16.mxu0 0
        %1610 = vmatpush2.bf16.xpose.msra.mxu0 0
        %1611 = vmatprep.subr.bf16.mxu0 0
        %1612 = vmatpush2.bf16.xpose.msra.mxu0 0
        %1613 = vmatprep.subr.bf16.mxu0 0
        %1614 = vmatpush2.bf16.xpose.msra.mxu0 0
        %1615 = vmatprep.subr.bf16.mxu0 0
        %1616 = vmatpush2.bf16.xpose.msra.mxu0 0
        %1617 = vmatprep.subr.bf16.mxu0 0
        %1618 = vmatpush2.bf16.xpose.msra.mxu0 0
        %1619 = vmatprep.subr.bf16.mxu0 0
        %1620 = vmatpush2.bf16.xpose.msra.mxu0 0
        %1621 = vmatprep.subr.bf16.mxu0 0
        %1622 = vmatpush2.bf16.xpose.msra.mxu0 0
        %1623 = vmatprep.mubr.bf16.mxu0 0
        %1624 = vmatmul.mubr.bf16.gmra.mxu0 %v1586
        %v1625 = vpop.f32.mrf.mxu0
        %v1626 = vadd.f32 %v1313, %v1625
        %v1627 = vpop.f32.mrf.mxu0
        %v1628 = vpop.f32.mrf.mxu0
        %v1629 = vpop.f32.mrf.mxu0
        %1630 = vdwg.mxu0
        %v1631 = vsel %vm1409, %v1574, -inf
        %1632 = vmax.xlane.f32.xlu0 %v1631
        %v1633 = vpop.xlane.xlu0 %1632
        %v1634 = vsel %vm1409, %v1626, -inf
        %1635 = vmax.xlane.f32.xlu0 %v1634
        %v1636 = vpop.xlane.xlu0 %1635
        %v1637 = vsub.f32 %v1574, %v1633
        %v1638 = vsub.f32 %v1626, %v1636
        %v1639 = vmul.f32 %v1637, 1.442695
        %v1640 = vpow.pop %v1639
        %v1641 = vmul.f32 %v1638, 1.442695
        %v1642 = vpow.pop %v1641
        %v1643 = vsel %vm1409, %v1640, 0.0
        %1644 = vadd.xlane.f32.xlu0 %v1643
        %v1645 = vpop.xlane.xlu0 %1644
        %v1646 = vsel %vm1409, %v1642, 0.0
        %1647 = vadd.xlane.f32.xlu0 %v1646
        %v1648 = vpop.xlane.xlu0 %1647
        %v1649 = vrcp.pop %v1645
        %v1650 = vrcp.pop %v1648
        %v1651 = vmul.f32 %v1640, %v1649
        %v1652 = vmul.f32 %v1642, %v1650
        %v1653 = vpack.c.bf16 %v1651, %v1651
        %v1654 = vpack.c.bf16 %v1652, %v1652
        %1656 = vrot.lane.b32.xlu0 %v1302, 64
        %v1657 = vpop.permute.xlu0 %1656
        %v1659 = vsel %vm1409, %v1653, 0
        %v1662 = vsel %vm1437, %v1657, 0
        %1664 = vmatprep.subr.bf16.mxu0 0
        %1665 = vmatpush1.bf16.msra.mxu0 0
        %1666 = vmatprep.subr.bf16.mxu0 0
        %1667 = vmatpush1.bf16.msra.mxu0 0
        %1668 = vmatprep.subr.bf16.mxu0 0
        %1669 = vmatpush1.bf16.msra.mxu0 0
        %1670 = vmatprep.subr.bf16.mxu0 0
        %1671 = vmatpush1.bf16.msra.mxu0 0
        %1672 = vmatprep.subr.bf16.mxu0 0
        %1673 = vmatpush1.bf16.msra.mxu0 0
        %1674 = vmatprep.subr.bf16.mxu0 0
        %1675 = vmatpush1.bf16.msra.mxu0 0
        %1676 = vmatprep.subr.bf16.mxu0 0
        %1677 = vmatpush1.bf16.msra.mxu0 0
        %1678 = vmatprep.subr.bf16.mxu0 0
        %1679 = vmatpush1.bf16.msra.mxu0 %v1662
        %1680 = vmatprep.subr.bf16.mxu0 0
        %1681 = vmatpush2.bf16.msra.mxu0 0
        %1682 = vmatprep.subr.bf16.mxu0 0
        %1683 = vmatpush2.bf16.msra.mxu0 0
        %1684 = vmatprep.subr.bf16.mxu0 0
        %1685 = vmatpush2.bf16.msra.mxu0 0
        %1686 = vmatprep.subr.bf16.mxu0 0
        %1687 = vmatpush2.bf16.msra.mxu0 0
        %1688 = vmatprep.subr.bf16.mxu0 0
        %1689 = vmatpush2.bf16.msra.mxu0 0
        %1690 = vmatprep.subr.bf16.mxu0 0
        %1691 = vmatpush2.bf16.msra.mxu0 0
        %1692 = vmatprep.subr.bf16.mxu0 0
        %1693 = vmatpush2.bf16.msra.mxu0 0
        %1694 = vmatprep.subr.bf16.mxu0 0
        %1695 = vmatpush2.bf16.msra.mxu0 0
        %1696 = vmatprep.mubr.bf16.mxu0 0
        %1697 = vmatmul.mubr.bf16.gmra.mxu0 %v1659
        %v1698 = vpop.f32.mrf.mxu0
        %v1699 = vadd.f32 0.0, %v1698
        %v1700 = vpop.f32.mrf.mxu0
        %v1701 = vpop.f32.mrf.mxu0
        %v1702 = vpop.f32.mrf.mxu0
        %1703 = vdwg.mxu0
        %1705 = vrot.lane.b32.xlu0 %v1303, 64
        %v1706 = vpop.permute.xlu0 %1705
        %v1708 = vsel %vm1409, %v1654, 0
        %v1711 = vsel %vm1437, %v1706, 0
        %1713 = vmatprep.subr.bf16.mxu0 0
        %1714 = vmatpush1.bf16.msra.mxu0 0
        %1715 = vmatprep.subr.bf16.mxu0 0
        %1716 = vmatpush1.bf16.msra.mxu0 0
        %1717 = vmatprep.subr.bf16.mxu0 0
        %1718 = vmatpush1.bf16.msra.mxu0 0
        %1719 = vmatprep.subr.bf16.mxu0 0
        %1720 = vmatpush1.bf16.msra.mxu0 0
        %1721 = vmatprep.subr.bf16.mxu0 0
        %1722 = vmatpush1.bf16.msra.mxu0 0
        %1723 = vmatprep.subr.bf16.mxu0 0
        %1724 = vmatpush1.bf16.msra.mxu0 0
        %1725 = vmatprep.subr.bf16.mxu0 0
        %1726 = vmatpush1.bf16.msra.mxu0 0
        %1727 = vmatprep.subr.bf16.mxu0 0
        %1728 = vmatpush1.bf16.msra.mxu0 %v1711
        %1729 = vmatprep.subr.bf16.mxu0 0
        %1730 = vmatpush2.bf16.msra.mxu0 0
        %1731 = vmatprep.subr.bf16.mxu0 0
        %1732 = vmatpush2.bf16.msra.mxu0 0
        %1733 = vmatprep.subr.bf16.mxu0 0
        %1734 = vmatpush2.bf16.msra.mxu0 0
        %1735 = vmatprep.subr.bf16.mxu0 0
        %1736 = vmatpush2.bf16.msra.mxu0 0
        %1737 = vmatprep.subr.bf16.mxu0 0
        %1738 = vmatpush2.bf16.msra.mxu0 0
        %1739 = vmatprep.subr.bf16.mxu0 0
        %1740 = vmatpush2.bf16.msra.mxu0 0
        %1741 = vmatprep.subr.bf16.mxu0 0
        %1742 = vmatpush2.bf16.msra.mxu0 0
        %1743 = vmatprep.subr.bf16.mxu0 0
        %1744 = vmatpush2.bf16.msra.mxu0 0
        %1745 = vmatprep.mubr.bf16.mxu0 0
        %1746 = vmatmul.mubr.bf16.gmra.mxu0 %v1708
        %v1747 = vpop.f32.mrf.mxu0
        %v1748 = vadd.f32 0.0, %v1747
        %v1749 = vpop.f32.mrf.mxu0
        %v1750 = vpop.f32.mrf.mxu0
        %v1751 = vpop.f32.mrf.mxu0
        %1752 = vdwg.mxu0
        %1755 = vrot.lane.b32.xlu0 %v1699, 64
        %v1756 = vpop.permute.xlu0 %1755
        %1757 = vrot.lane.b32.xlu0 %v1748, 64
        %v1758 = vpop.permute.xlu0 %1757
        %v1761 = vsel %vm1316, %v1476, %v1756
        %v1762 = vsel %vm1316, %v1522, %v1758
        %v1763 = vpack.c.bf16 %v1762, %v1761
        %v1764 = vld [vmem:[%s843] sm:$0xf]
        %v1765 = vld [vmem:[%s843 + $0x4] sm:$0xf]
        %v1766 = vld [vmem:[%s843 + $0x8] sm:$0xf]
        %v1767 = vld [vmem:[%s843 + $0xc] sm:$0xf]
        %v1768 = vld [vmem:[%s843 + $0x10] sm:$0xf]
        %v1769 = vld [vmem:[%s843 + $0x14] sm:$0xf]
        %v1770 = vld [vmem:[%s843 + $0x18] sm:$0xf]
        %v1771 = vld [vmem:[%s843 + $0x1c] sm:$0xf]
        %v1772 = vld [vmem:[%s843 + $0x20] sm:$0xf]
        %v1773 = vld [vmem:[%s843 + $0x24] sm:$0xf]
        %v1774 = vld [vmem:[%s843 + $0x28] sm:$0xf]
        %v1775 = vld [vmem:[%s843 + $0x2c] sm:$0xf]
        %v1776 = vld [vmem:[%s843 + $0x30] sm:$0xf]
        %v1777 = vld [vmem:[%s843 + $0x34] sm:$0xf]
        %v1778 = vld [vmem:[%s843 + $0x38] sm:$0xf]
        %v1779 = vld [vmem:[%s843 + $0x3c] sm:$0xf]
        %v1780 = vld [vmem:[%s961] sm:$0x1]
        %v1782 = vlaneseq
        %v1783 = vshrl.u32 %v1782, 7
        %v1784 = vsub.s32 0, %v1783
        %v1785 = vrot.slane %v1780, %v1784
        %v1803 = vunpack.c.l.b16 %v1764
        %v1804 = vunpack.c.l.b16 %v1765
        %v1805 = vunpack.c.l.b16 %v1766
        %v1806 = vunpack.c.l.b16 %v1767
        %v1807 = vunpack.c.l.b16 %v1768
        %v1808 = vunpack.c.l.b16 %v1769
        %v1809 = vunpack.c.l.b16 %v1770
        %v1810 = vunpack.c.l.b16 %v1771
        %v1811 = vunpack.c.l.b16 %v1772
        %v1812 = vunpack.c.l.b16 %v1773
        %v1813 = vunpack.c.l.b16 %v1774
        %v1814 = vunpack.c.l.b16 %v1775
        %v1815 = vunpack.c.l.b16 %v1776
        %v1816 = vunpack.c.l.b16 %v1777
        %v1817 = vunpack.c.l.b16 %v1778
        %v1818 = vunpack.c.l.b16 %v1779
        %v1819 = vpack.c.b16 %v1804, %v1803
        %v1820 = vpack.c.b16 %v1806, %v1805
        %v1821 = vpack.c.b16 %v1808, %v1807
        %v1822 = vpack.c.b16 %v1810, %v1809
        %v1823 = vpack.c.b16 %v1812, %v1811
        %v1824 = vpack.c.b16 %v1814, %v1813
        %v1825 = vpack.c.b16 %v1816, %v1815
        %v1826 = vpack.c.b16 %v1818, %v1817
        %1835 = vmatprep.subr.bf16.mxu0 0
        %1836 = vmatpush1.bf16.msra.mxu0 %v1826
        %1837 = vmatprep.subr.bf16.mxu0 0
        %1838 = vmatpush1.bf16.msra.mxu0 %v1825
        %1839 = vmatprep.subr.bf16.mxu0 0
        %1840 = vmatpush1.bf16.msra.mxu0 %v1824
        %1841 = vmatprep.subr.bf16.mxu0 0
        %1842 = vmatpush1.bf16.msra.mxu0 %v1823
        %1843 = vmatprep.subr.bf16.mxu0 0
        %1844 = vmatpush1.bf16.msra.mxu0 %v1822
        %1845 = vmatprep.subr.bf16.mxu0 0
        %1846 = vmatpush1.bf16.msra.mxu0 %v1821
        %1847 = vmatprep.subr.bf16.mxu0 0
        %1848 = vmatpush1.bf16.msra.mxu0 %v1820
        %1849 = vmatprep.subr.bf16.mxu0 0
        %1850 = vmatpush1.bf16.msra.mxu0 %v1819
        %1851 = vmatprep.subr.bf16.mxu0 0
        %1852 = vmatpush2.bf16.msra.mxu0 0
        %1853 = vmatprep.subr.bf16.mxu0 0
        %1854 = vmatpush2.bf16.msra.mxu0 0
        %1855 = vmatprep.subr.bf16.mxu0 0
        %1856 = vmatpush2.bf16.msra.mxu0 0
        %1857 = vmatprep.subr.bf16.mxu0 0
        %1858 = vmatpush2.bf16.msra.mxu0 0
        %1859 = vmatprep.subr.bf16.mxu0 0
        %1860 = vmatpush2.bf16.msra.mxu0 0
        %1861 = vmatprep.subr.bf16.mxu0 0
        %1862 = vmatpush2.bf16.msra.mxu0 0
        %1863 = vmatprep.subr.bf16.mxu0 0
        %1864 = vmatpush2.bf16.msra.mxu0 0
        %1865 = vmatprep.subr.bf16.mxu0 0
        %1866 = vmatpush2.bf16.msra.mxu0 0
        %1867 = vmatprep.mubr.bf16.mxu0 0
        %1868 = vmatmul.mubr.bf16.gmra.mxu0 %v1763
        %v1869 = vpop.f32.mrf.mxu0
        %v1870 = vadd.f32 %v1785, %v1869
        %v1871 = vpop.f32.mrf.mxu0
        %v1872 = vpop.f32.mrf.mxu0
        %v1873 = vadd.f32 %v1785, %v1872
        %v1874 = vpop.f32.mrf.mxu0
        %1875 = vdwg.mxu0
        %v1876 = vadd.f32 %v1032, %v1870
        %v1877 = vadd.f32 %v1033, %v1873
        %v1878 = vld [vmem:[%s964] sm:$0x1]
        %v1879 = vld [vmem:[%s967] sm:$0x1]
        %1880 = vadd.xlane.f32.xlu0 %v1876
        %v1881 = vpop.xlane.xlu0 %1880
        %1882 = vadd.xlane.f32.xlu0 %v1877
        %v1883 = vpop.xlane.xlu0 %1882
        %v1884 = vrcp.pop 128.0
        %v1885 = vmul.f32 %v1881, %v1884
        %v1886 = vmul.f32 %v1883, %v1884
        %v1887 = vsub.f32 %v1876, %v1885
        %v1888 = vsub.f32 %v1877, %v1886
        %v1889 = vmul.f32 %v1887, %v1887
        %v1890 = vmul.f32 %v1888, %v1888
        %1891 = vadd.xlane.f32.xlu0 %v1889
        %v1892 = vpop.xlane.xlu0 %1891
        %1893 = vadd.xlane.f32.xlu0 %v1890
        %v1894 = vpop.xlane.xlu0 %1893
        %v1895 = vmul.f32 %v1892, %v1884
        %v1896 = vmul.f32 %v1894, %v1884
        %v1897 = vadd.f32 %v1895, 1e-12
        %v1898 = vadd.f32 %v1896, 1e-12
        %v1899 = vrsqrt.pop %v1897
        %v1900 = vrsqrt.pop %v1898
        %v1901 = vmul.f32 %v1887, %v1899
        %v1902 = vmul.f32 %v1888, %v1900
        %v1904 = vlaneseq
        %v1905 = vshrl.u32 %v1904, 7
        %v1906 = vsub.s32 0, %v1905
        %v1907 = vrot.slane %v1878, %v1906
        %v1909 = vmul.f32 %v1901, %v1907
        %v1910 = vmul.f32 %v1902, %v1907
        %v1912 = vlaneseq
        %v1913 = vshrl.u32 %v1912, 7
        %v1914 = vsub.s32 0, %v1913
        %v1915 = vrot.slane %v1879, %v1914
        %v1917 = vadd.f32 %v1909, %v1915
        %v1918 = vadd.f32 %v1910, %v1915
        %v1919 = vpack.c.bf16 %v1918, %v1917
        %v1920 = vld [vmem:[%s852] sm:$0xff]
        %v1921 = vld [vmem:[%s852 + $0x8] sm:$0xff]
        %v1922 = vld [vmem:[%s852 + $0x10] sm:$0xff]
        %v1923 = vld [vmem:[%s852 + $0x18] sm:$0xff]
        %v1924 = vld [vmem:[%s852 + $0x20] sm:$0xff]
        %v1925 = vld [vmem:[%s852 + $0x28] sm:$0xff]
        %v1926 = vld [vmem:[%s852 + $0x30] sm:$0xff]
        %v1927 = vld [vmem:[%s852 + $0x38] sm:$0xff]
        %v1928 = vld [vmem:[%s852 + $0x40] sm:$0xff]
        %v1929 = vld [vmem:[%s852 + $0x48] sm:$0xff]
        %v1930 = vld [vmem:[%s852 + $0x50] sm:$0xff]
        %v1931 = vld [vmem:[%s852 + $0x58] sm:$0xff]
        %v1932 = vld [vmem:[%s852 + $0x60] sm:$0xff]
        %v1933 = vld [vmem:[%s852 + $0x68] sm:$0xff]
        %v1934 = vld [vmem:[%s852 + $0x70] sm:$0xff]
        %v1935 = vld [vmem:[%s852 + $0x78] sm:$0xff]
        %v1936 = vld [vmem:[%s852 + $0x80] sm:$0xff]
        %v1937 = vld [vmem:[%s852 + $0x88] sm:$0xff]
        %v1938 = vld [vmem:[%s852 + $0x90] sm:$0xff]
        %v1939 = vld [vmem:[%s852 + $0x98] sm:$0xff]
        %v1940 = vld [vmem:[%s852 + $0xa0] sm:$0xff]
        %v1941 = vld [vmem:[%s852 + $0xa8] sm:$0xff]
        %v1942 = vld [vmem:[%s852 + $0xb0] sm:$0xff]
        %v1943 = vld [vmem:[%s852 + $0xb8] sm:$0xff]
        %v1944 = vld [vmem:[%s852 + $0xc0] sm:$0xff]
        %v1945 = vld [vmem:[%s852 + $0xc8] sm:$0xff]
        %v1946 = vld [vmem:[%s852 + $0xd0] sm:$0xff]
        %v1947 = vld [vmem:[%s852 + $0xd8] sm:$0xff]
        %v1948 = vld [vmem:[%s852 + $0xe0] sm:$0xff]
        %v1949 = vld [vmem:[%s852 + $0xe8] sm:$0xff]
        %v1950 = vld [vmem:[%s852 + $0xf0] sm:$0xff]
        %v1951 = vld [vmem:[%s852 + $0xf8] sm:$0xff]
        %v1952 = vld [vmem:[%s971] sm:$0xf]
        %v1954 = vlaneseq
        %v1955 = vshrl.u32 %v1954, 7
        %v1956 = vsub.s32 0, %v1955
        %v1957 = vrot.slane %v1952, %v1956
        %v1958 = vlaneseq
        %v1959 = vshrl.u32 %v1958, 7
        %v1960 = vsub.s32 1, %v1959
        %v1961 = vrot.slane %v1952, %v1960
        %v1962 = vlaneseq
        %v1963 = vshrl.u32 %v1962, 7
        %v1964 = vsub.s32 2, %v1963
        %v1965 = vrot.slane %v1952, %v1964
        %v1966 = vlaneseq
        %v1967 = vshrl.u32 %v1966, 7
        %v1968 = vsub.s32 3, %v1967
        %v1969 = vrot.slane %v1952, %v1968
        %v2006 = vunpack.c.l.b16 %v1920
        %v2007 = vunpack.c.h.b16 %v1920
        %v2008 = vunpack.c.l.b16 %v1921
        %v2009 = vunpack.c.h.b16 %v1921
        %v2010 = vunpack.c.l.b16 %v1922
        %v2011 = vunpack.c.h.b16 %v1922
        %v2012 = vunpack.c.l.b16 %v1923
        %v2013 = vunpack.c.h.b16 %v1923
        %v2014 = vunpack.c.l.b16 %v1924
        %v2015 = vunpack.c.h.b16 %v1924
        %v2016 = vunpack.c.l.b16 %v1925
        %v2017 = vunpack.c.h.b16 %v1925
        %v2018 = vunpack.c.l.b16 %v1926
        %v2019 = vunpack.c.h.b16 %v1926
        %v2020 = vunpack.c.l.b16 %v1927
        %v2021 = vunpack.c.h.b16 %v1927
        %v2022 = vunpack.c.l.b16 %v1928
        %v2023 = vunpack.c.h.b16 %v1928
        %v2024 = vunpack.c.l.b16 %v1929
        %v2025 = vunpack.c.h.b16 %v1929
        %v2026 = vunpack.c.l.b16 %v1930
        %v2027 = vunpack.c.h.b16 %v1930
        %v2028 = vunpack.c.l.b16 %v1931
        %v2029 = vunpack.c.h.b16 %v1931
        %v2030 = vunpack.c.l.b16 %v1932
        %v2031 = vunpack.c.h.b16 %v1932
        %v2032 = vunpack.c.l.b16 %v1933
        %v2033 = vunpack.c.h.b16 %v1933
        %v2034 = vunpack.c.l.b16 %v1934
        %v2035 = vunpack.c.h.b16 %v1934
        %v2036 = vunpack.c.l.b16 %v1935
        %v2037 = vunpack.c.h.b16 %v1935
        %v2038 = vunpack.c.l.b16 %v1936
        %v2039 = vunpack.c.h.b16 %v1936
        %v2040 = vunpack.c.l.b16 %v1937
        %v2041 = vunpack.c.h.b16 %v1937
        %v2042 = vunpack.c.l.b16 %v1938
        %v2043 = vunpack.c.h.b16 %v1938
        %v2044 = vunpack.c.l.b16 %v1939
        %v2045 = vunpack.c.h.b16 %v1939
        %v2046 = vunpack.c.l.b16 %v1940
        %v2047 = vunpack.c.h.b16 %v1940
        %v2048 = vunpack.c.l.b16 %v1941
        %v2049 = vunpack.c.h.b16 %v1941
        %v2050 = vunpack.c.l.b16 %v1942
        %v2051 = vunpack.c.h.b16 %v1942
        %v2052 = vunpack.c.l.b16 %v1943
        %v2053 = vunpack.c.h.b16 %v1943
        %v2054 = vunpack.c.l.b16 %v1944
        %v2055 = vunpack.c.h.b16 %v1944
        %v2056 = vunpack.c.l.b16 %v1945
        %v2057 = vunpack.c.h.b16 %v1945
        %v2058 = vunpack.c.l.b16 %v1946
        %v2059 = vunpack.c.h.b16 %v1946
        %v2060 = vunpack.c.l.b16 %v1947
        %v2061 = vunpack.c.h.b16 %v1947
        %v2062 = vunpack.c.l.b16 %v1948
        %v2063 = vunpack.c.h.b16 %v1948
        %v2064 = vunpack.c.l.b16 %v1949
        %v2065 = vunpack.c.h.b16 %v1949
        %v2066 = vunpack.c.l.b16 %v1950
        %v2067 = vunpack.c.h.b16 %v1950
        %v2068 = vunpack.c.l.b16 %v1951
        %v2069 = vunpack.c.h.b16 %v1951
        %v2070 = vpack.c.b16 %v2010, %v2006
        %v2071 = vpack.c.b16 %v2011, %v2007
        %v2072 = vpack.c.b16 %v2012, %v2008
        %v2073 = vpack.c.b16 %v2013, %v2009
        %v2074 = vpack.c.b16 %v2018, %v2014
        %v2075 = vpack.c.b16 %v2019, %v2015
        %v2076 = vpack.c.b16 %v2020, %v2016
        %v2077 = vpack.c.b16 %v2021, %v2017
        %v2078 = vpack.c.b16 %v2026, %v2022
        %v2079 = vpack.c.b16 %v2027, %v2023
        %v2080 = vpack.c.b16 %v2028, %v2024
        %v2081 = vpack.c.b16 %v2029, %v2025
        %v2082 = vpack.c.b16 %v2034, %v2030
        %v2083 = vpack.c.b16 %v2035, %v2031
        %v2084 = vpack.c.b16 %v2036, %v2032
        %v2085 = vpack.c.b16 %v2037, %v2033
        %v2086 = vpack.c.b16 %v2042, %v2038
        %v2087 = vpack.c.b16 %v2043, %v2039
        %v2088 = vpack.c.b16 %v2044, %v2040
        %v2089 = vpack.c.b16 %v2045, %v2041
        %v2090 = vpack.c.b16 %v2050, %v2046
        %v2091 = vpack.c.b16 %v2051, %v2047
        %v2092 = vpack.c.b16 %v2052, %v2048
        %v2093 = vpack.c.b16 %v2053, %v2049
        %v2094 = vpack.c.b16 %v2058, %v2054
        %v2095 = vpack.c.b16 %v2059, %v2055
        %v2096 = vpack.c.b16 %v2060, %v2056
        %v2097 = vpack.c.b16 %v2061, %v2057
        %v2098 = vpack.c.b16 %v2066, %v2062
        %v2099 = vpack.c.b16 %v2067, %v2063
        %v2100 = vpack.c.b16 %v2068, %v2064
        %v2101 = vpack.c.b16 %v2069, %v2065
        %2134 = vmatprep.subr.bf16.mxu0 %v2099
        %2135 = vmatpush1.bf16.msra.mxu0 %v2098
        %2136 = vmatprep.subr.bf16.mxu0 %v2095
        %2137 = vmatpush1.bf16.msra.mxu0 %v2094
        %2138 = vmatprep.subr.bf16.mxu0 %v2091
        %2139 = vmatpush1.bf16.msra.mxu0 %v2090
        %2140 = vmatprep.subr.bf16.mxu0 %v2087
        %2141 = vmatpush1.bf16.msra.mxu0 %v2086
        %2142 = vmatprep.subr.bf16.mxu0 %v2083
        %2143 = vmatpush1.bf16.msra.mxu0 %v2082
        %2144 = vmatprep.subr.bf16.mxu0 %v2079
        %2145 = vmatpush1.bf16.msra.mxu0 %v2078
        %2146 = vmatprep.subr.bf16.mxu0 %v2075
        %2147 = vmatpush1.bf16.msra.mxu0 %v2074
        %2148 = vmatprep.subr.bf16.mxu0 %v2071
        %2149 = vmatpush1.bf16.msra.mxu0 %v2070
        %2150 = vmatprep.subr.bf16.mxu0 0
        %2151 = vmatpush2.bf16.msra.mxu0 0
        %2152 = vmatprep.subr.bf16.mxu0 0
        %2153 = vmatpush2.bf16.msra.mxu0 0
        %2154 = vmatprep.subr.bf16.mxu0 0
        %2155 = vmatpush2.bf16.msra.mxu0 0
        %2156 = vmatprep.subr.bf16.mxu0 0
        %2157 = vmatpush2.bf16.msra.mxu0 0
        %2158 = vmatprep.subr.bf16.mxu0 0
        %2159 = vmatpush2.bf16.msra.mxu0 0
        %2160 = vmatprep.subr.bf16.mxu0 0
        %2161 = vmatpush2.bf16.msra.mxu0 0
        %2162 = vmatprep.subr.bf16.mxu0 0
        %2163 = vmatpush2.bf16.msra.mxu0 0
        %2164 = vmatprep.subr.bf16.mxu0 0
        %2165 = vmatpush2.bf16.msra.mxu0 0
        %2166 = vmatprep.mubr.bf16.mxu0 0
        %2167 = vmatmul.mubr.bf16.gmra.mxu0 %v1919
        %v2168 = vpop.f32.mrf.mxu0
        %v2169 = vadd.f32 %v1957, %v2168
        %v2170 = vpop.f32.mrf.mxu0
        %v2171 = vadd.f32 %v1961, %v2170
        %v2172 = vpop.f32.mrf.mxu0
        %v2173 = vadd.f32 %v1957, %v2172
        %v2174 = vpop.f32.mrf.mxu0
        %v2175 = vadd.f32 %v1961, %v2174
        %2176 = vdwg.mxu0
        %2177 = vmatprep.subr.bf16.mxu0 %v2101
        %2178 = vmatpush1.bf16.msra.mxu0 %v2100
        %2179 = vmatprep.subr.bf16.mxu0 %v2097
        %2180 = vmatpush1.bf16.msra.mxu0 %v2096
        %2181 = vmatprep.subr.bf16.mxu0 %v2093
        %2182 = vmatpush1.bf16.msra.mxu0 %v2092
        %2183 = vmatprep.subr.bf16.mxu0 %v2089
        %2184 = vmatpush1.bf16.msra.mxu0 %v2088
        %2185 = vmatprep.subr.bf16.mxu0 %v2085
        %2186 = vmatpush1.bf16.msra.mxu0 %v2084
        %2187 = vmatprep.subr.bf16.mxu0 %v2081
        %2188 = vmatpush1.bf16.msra.mxu0 %v2080
        %2189 = vmatprep.subr.bf16.mxu0 %v2077
        %2190 = vmatpush1.bf16.msra.mxu0 %v2076
        %2191 = vmatprep.subr.bf16.mxu0 %v2073
        %2192 = vmatpush1.bf16.msra.mxu0 %v2072
        %2193 = vmatprep.subr.bf16.mxu0 0
        %2194 = vmatpush2.bf16.msra.mxu0 0
        %2195 = vmatprep.subr.bf16.mxu0 0
        %2196 = vmatpush2.bf16.msra.mxu0 0
        %2197 = vmatprep.subr.bf16.mxu0 0
        %2198 = vmatpush2.bf16.msra.mxu0 0
        %2199 = vmatprep.subr.bf16.mxu0 0
        %2200 = vmatpush2.bf16.msra.mxu0 0
        %2201 = vmatprep.subr.bf16.mxu0 0
        %2202 = vmatpush2.bf16.msra.mxu0 0
        %2203 = vmatprep.subr.bf16.mxu0 0
        %2204 = vmatpush2.bf16.msra.mxu0 0
        %2205 = vmatprep.subr.bf16.mxu0 0
        %2206 = vmatpush2.bf16.msra.mxu0 0
        %2207 = vmatprep.subr.bf16.mxu0 0
        %2208 = vmatpush2.bf16.msra.mxu0 0
        %2209 = vmatprep.mubr.bf16.mxu0 0
        %2210 = vmatmul.mubr.bf16.gmra.mxu0 %v1919
        %v2211 = vpop.f32.mrf.mxu0
        %v2212 = vadd.f32 %v1965, %v2211
        %v2213 = vpop.f32.mrf.mxu0
        %v2214 = vadd.f32 %v1969, %v2213
        %v2215 = vpop.f32.mrf.mxu0
        %v2216 = vadd.f32 %v1965, %v2215
        %v2217 = vpop.f32.mrf.mxu0
        %v2218 = vadd.f32 %v1969, %v2217
        %2219 = vdwg.mxu0
        %v2220 = vmul.f32 %v2169, 0.5
        %v2221 = vmul.f32 %v2171, 0.5
        %v2222 = vmul.f32 %v2212, 0.5
        %v2223 = vmul.f32 %v2214, 0.5
        %v2224 = vmul.f32 %v2173, 0.5
        %v2225 = vmul.f32 %v2175, 0.5
        %v2226 = vmul.f32 %v2216, 0.5
        %v2227 = vmul.f32 %v2218, 0.5
        %v2228 = vmul.f32 %v2169, 0.044715
        %v2229 = vmul.f32 %v2171, 0.044715
        %v2230 = vmul.f32 %v2212, 0.044715
        %v2231 = vmul.f32 %v2214, 0.044715
        %v2232 = vmul.f32 %v2173, 0.044715
        %v2233 = vmul.f32 %v2175, 0.044715
        %v2234 = vmul.f32 %v2216, 0.044715
        %v2235 = vmul.f32 %v2218, 0.044715
        %v2236 = vmul.f32 %v2228, %v2169
        %v2237 = vmul.f32 %v2229, %v2171
        %v2238 = vmul.f32 %v2230, %v2212
        %v2239 = vmul.f32 %v2231, %v2214
        %v2240 = vmul.f32 %v2232, %v2173
        %v2241 = vmul.f32 %v2233, %v2175
        %v2242 = vmul.f32 %v2234, %v2216
        %v2243 = vmul.f32 %v2235, %v2218
        %v2244 = vmul.f32 %v2236, %v2169
        %v2245 = vmul.f32 %v2237, %v2171
        %v2246 = vmul.f32 %v2238, %v2212
        %v2247 = vmul.f32 %v2239, %v2214
        %v2248 = vmul.f32 %v2240, %v2173
        %v2249 = vmul.f32 %v2241, %v2175
        %v2250 = vmul.f32 %v2242, %v2216
        %v2251 = vmul.f32 %v2243, %v2218
        %v2252 = vadd.f32 %v2169, %v2244
        %v2253 = vadd.f32 %v2171, %v2245
        %v2254 = vadd.f32 %v2212, %v2246
        %v2255 = vadd.f32 %v2214, %v2247
        %v2256 = vadd.f32 %v2173, %v2248
        %v2257 = vadd.f32 %v2175, %v2249
        %v2258 = vadd.f32 %v2216, %v2250
        %v2259 = vadd.f32 %v2218, %v2251
        %v2260 = vmul.f32 %v2252, 0.7978846
        %v2261 = vmul.f32 %v2253, 0.7978846
        %v2262 = vmul.f32 %v2254, 0.7978846
        %v2263 = vmul.f32 %v2255, 0.7978846
        %v2264 = vmul.f32 %v2256, 0.7978846
        %v2265 = vmul.f32 %v2257, 0.7978846
        %v2266 = vmul.f32 %v2258, 0.7978846
        %v2267 = vmul.f32 %v2259, 0.7978846
        %v2268 = vtanh.pop %v2260
        %v2269 = vtanh.pop %v2261
        %v2270 = vtanh.pop %v2262
        %v2271 = vtanh.pop %v2263
        %v2272 = vtanh.pop %v2264
        %v2273 = vtanh.pop %v2265
        %v2274 = vtanh.pop %v2266
        %v2275 = vtanh.pop %v2267
        %v2276 = vadd.f32 %v2268, 1.0
        %v2277 = vadd.f32 %v2269, 1.0
        %v2278 = vadd.f32 %v2270, 1.0
        %v2279 = vadd.f32 %v2271, 1.0
        %v2280 = vadd.f32 %v2272, 1.0
        %v2281 = vadd.f32 %v2273, 1.0
        %v2282 = vadd.f32 %v2274, 1.0
        %v2283 = vadd.f32 %v2275, 1.0
        %v2284 = vmul.f32 %v2220, %v2276
        %v2285 = vmul.f32 %v2221, %v2277
        %v2286 = vmul.f32 %v2222, %v2278
        %v2287 = vmul.f32 %v2223, %v2279
        %v2288 = vmul.f32 %v2224, %v2280
        %v2289 = vmul.f32 %v2225, %v2281
        %v2290 = vmul.f32 %v2226, %v2282
        %v2291 = vmul.f32 %v2227, %v2283
        %v2292 = vpack.c.bf16 %v2288, %v2284
        %v2293 = vpack.c.bf16 %v2289, %v2285
        %v2294 = vpack.c.bf16 %v2290, %v2286
        %v2295 = vpack.c.bf16 %v2291, %v2287
        %v2296 = vld [vmem:[%s861] sm:$0xf]
        %v2297 = vld [vmem:[%s861 + $0x4] sm:$0xf]
        %v2298 = vld [vmem:[%s861 + $0x8] sm:$0xf]
        %v2299 = vld [vmem:[%s861 + $0xc] sm:$0xf]
        %v2300 = vld [vmem:[%s861 + $0x10] sm:$0xf]
        %v2301 = vld [vmem:[%s861 + $0x14] sm:$0xf]
        %v2302 = vld [vmem:[%s861 + $0x18] sm:$0xf]
        %v2303 = vld [vmem:[%s861 + $0x1c] sm:$0xf]
        %v2304 = vld [vmem:[%s861 + $0x20] sm:$0xf]
        %v2305 = vld [vmem:[%s861 + $0x24] sm:$0xf]
        %v2306 = vld [vmem:[%s861 + $0x28] sm:$0xf]
        %v2307 = vld [vmem:[%s861 + $0x2c] sm:$0xf]
        %v2308 = vld [vmem:[%s861 + $0x30] sm:$0xf]
        %v2309 = vld [vmem:[%s861 + $0x34] sm:$0xf]
        %v2310 = vld [vmem:[%s861 + $0x38] sm:$0xf]
        %v2311 = vld [vmem:[%s861 + $0x3c] sm:$0xf]
        %v2312 = vld [vmem:[%s861 + $0x40] sm:$0xf]
        %v2313 = vld [vmem:[%s861 + $0x44] sm:$0xf]
        %v2314 = vld [vmem:[%s861 + $0x48] sm:$0xf]
        %v2315 = vld [vmem:[%s861 + $0x4c] sm:$0xf]
        %v2316 = vld [vmem:[%s861 + $0x50] sm:$0xf]
        %v2317 = vld [vmem:[%s861 + $0x54] sm:$0xf]
        %v2318 = vld [vmem:[%s861 + $0x58] sm:$0xf]
        %v2319 = vld [vmem:[%s861 + $0x5c] sm:$0xf]
        %v2320 = vld [vmem:[%s861 + $0x60] sm:$0xf]
        %v2321 = vld [vmem:[%s861 + $0x64] sm:$0xf]
        %v2322 = vld [vmem:[%s861 + $0x68] sm:$0xf]
        %v2323 = vld [vmem:[%s861 + $0x6c] sm:$0xf]
        %v2324 = vld [vmem:[%s861 + $0x70] sm:$0xf]
        %v2325 = vld [vmem:[%s861 + $0x74] sm:$0xf]
        %v2326 = vld [vmem:[%s861 + $0x78] sm:$0xf]
        %v2327 = vld [vmem:[%s861 + $0x7c] sm:$0xf]
        %v2328 = vld [vmem:[%s861 + $0x80] sm:$0xf]
        %v2329 = vld [vmem:[%s861 + $0x84] sm:$0xf]
        %v2330 = vld [vmem:[%s861 + $0x88] sm:$0xf]
        %v2331 = vld [vmem:[%s861 + $0x8c] sm:$0xf]
        %v2332 = vld [vmem:[%s861 + $0x90] sm:$0xf]
        %v2333 = vld [vmem:[%s861 + $0x94] sm:$0xf]
        %v2334 = vld [vmem:[%s861 + $0x98] sm:$0xf]
        %v2335 = vld [vmem:[%s861 + $0x9c] sm:$0xf]
        %v2336 = vld [vmem:[%s861 + $0xa0] sm:$0xf]
        %v2337 = vld [vmem:[%s861 + $0xa4] sm:$0xf]
        %v2338 = vld [vmem:[%s861 + $0xa8] sm:$0xf]
        %v2339 = vld [vmem:[%s861 + $0xac] sm:$0xf]
        %v2340 = vld [vmem:[%s861 + $0xb0] sm:$0xf]
        %v2341 = vld [vmem:[%s861 + $0xb4] sm:$0xf]
        %v2342 = vld [vmem:[%s861 + $0xb8] sm:$0xf]
        %v2343 = vld [vmem:[%s861 + $0xbc] sm:$0xf]
        %v2344 = vld [vmem:[%s861 + $0xc0] sm:$0xf]
        %v2345 = vld [vmem:[%s861 + $0xc4] sm:$0xf]
        %v2346 = vld [vmem:[%s861 + $0xc8] sm:$0xf]
        %v2347 = vld [vmem:[%s861 + $0xcc] sm:$0xf]
        %v2348 = vld [vmem:[%s861 + $0xd0] sm:$0xf]
        %v2349 = vld [vmem:[%s861 + $0xd4] sm:$0xf]
        %v2350 = vld [vmem:[%s861 + $0xd8] sm:$0xf]
        %v2351 = vld [vmem:[%s861 + $0xdc] sm:$0xf]
        %v2352 = vld [vmem:[%s861 + $0xe0] sm:$0xf]
        %v2353 = vld [vmem:[%s861 + $0xe4] sm:$0xf]
        %v2354 = vld [vmem:[%s861 + $0xe8] sm:$0xf]
        %v2355 = vld [vmem:[%s861 + $0xec] sm:$0xf]
        %v2356 = vld [vmem:[%s861 + $0xf0] sm:$0xf]
        %v2357 = vld [vmem:[%s861 + $0xf4] sm:$0xf]
        %v2358 = vld [vmem:[%s861 + $0xf8] sm:$0xf]
        %v2359 = vld [vmem:[%s861 + $0xfc] sm:$0xf]
        %v2360 = vld [vmem:[%s974] sm:$0x1]
        %v2362 = vlaneseq
        %v2363 = vshrl.u32 %v2362, 7
        %v2364 = vsub.s32 0, %v2363
        %v2365 = vrot.slane %v2360, %v2364
        %v2431 = vunpack.c.l.b16 %v2296
        %v2432 = vunpack.c.l.b16 %v2297
        %v2433 = vunpack.c.l.b16 %v2298
        %v2434 = vunpack.c.l.b16 %v2299
        %v2435 = vunpack.c.l.b16 %v2300
        %v2436 = vunpack.c.l.b16 %v2301
        %v2437 = vunpack.c.l.b16 %v2302
        %v2438 = vunpack.c.l.b16 %v2303
        %v2439 = vunpack.c.l.b16 %v2304
        %v2440 = vunpack.c.l.b16 %v2305
        %v2441 = vunpack.c.l.b16 %v2306
        %v2442 = vunpack.c.l.b16 %v2307
        %v2443 = vunpack.c.l.b16 %v2308
        %v2444 = vunpack.c.l.b16 %v2309
        %v2445 = vunpack.c.l.b16 %v2310
        %v2446 = vunpack.c.l.b16 %v2311
        %v2447 = vunpack.c.l.b16 %v2312
        %v2448 = vunpack.c.l.b16 %v2313
        %v2449 = vunpack.c.l.b16 %v2314
        %v2450 = vunpack.c.l.b16 %v2315
        %v2451 = vunpack.c.l.b16 %v2316
        %v2452 = vunpack.c.l.b16 %v2317
        %v2453 = vunpack.c.l.b16 %v2318
        %v2454 = vunpack.c.l.b16 %v2319
        %v2455 = vunpack.c.l.b16 %v2320
        %v2456 = vunpack.c.l.b16 %v2321
        %v2457 = vunpack.c.l.b16 %v2322
        %v2458 = vunpack.c.l.b16 %v2323
        %v2459 = vunpack.c.l.b16 %v2324
        %v2460 = vunpack.c.l.b16 %v2325
        %v2461 = vunpack.c.l.b16 %v2326
        %v2462 = vunpack.c.l.b16 %v2327
        %v2463 = vunpack.c.l.b16 %v2328
        %v2464 = vunpack.c.l.b16 %v2329
        %v2465 = vunpack.c.l.b16 %v2330
        %v2466 = vunpack.c.l.b16 %v2331
        %v2467 = vunpack.c.l.b16 %v2332
        %v2468 = vunpack.c.l.b16 %v2333
        %v2469 = vunpack.c.l.b16 %v2334
        %v2470 = vunpack.c.l.b16 %v2335
        %v2471 = vunpack.c.l.b16 %v2336
        %v2472 = vunpack.c.l.b16 %v2337
        %v2473 = vunpack.c.l.b16 %v2338
        %v2474 = vunpack.c.l.b16 %v2339
        %v2475 = vunpack.c.l.b16 %v2340
        %v2476 = vunpack.c.l.b16 %v2341
        %v2477 = vunpack.c.l.b16 %v2342
        %v2478 = vunpack.c.l.b16 %v2343
        %v2479 = vunpack.c.l.b16 %v2344
        %v2480 = vunpack.c.l.b16 %v2345
        %v2481 = vunpack.c.l.b16 %v2346
        %v2482 = vunpack.c.l.b16 %v2347
        %v2483 = vunpack.c.l.b16 %v2348
        %v2484 = vunpack.c.l.b16 %v2349
        %v2485 = vunpack.c.l.b16 %v2350
        %v2486 = vunpack.c.l.b16 %v2351
        %v2487 = vunpack.c.l.b16 %v2352
        %v2488 = vunpack.c.l.b16 %v2353
        %v2489 = vunpack.c.l.b16 %v2354
        %v2490 = vunpack.c.l.b16 %v2355
        %v2491 = vunpack.c.l.b16 %v2356
        %v2492 = vunpack.c.l.b16 %v2357
        %v2493 = vunpack.c.l.b16 %v2358
        %v2494 = vunpack.c.l.b16 %v2359
        %v2495 = vpack.c.b16 %v2432, %v2431
        %v2496 = vpack.c.b16 %v2434, %v2433
        %v2497 = vpack.c.b16 %v2436, %v2435
        %v2498 = vpack.c.b16 %v2438, %v2437
        %v2499 = vpack.c.b16 %v2440, %v2439
        %v2500 = vpack.c.b16 %v2442, %v2441
        %v2501 = vpack.c.b16 %v2444, %v2443
        %v2502 = vpack.c.b16 %v2446, %v2445
        %v2503 = vpack.c.b16 %v2448, %v2447
        %v2504 = vpack.c.b16 %v2450, %v2449
        %v2505 = vpack.c.b16 %v2452, %v2451
        %v2506 = vpack.c.b16 %v2454, %v2453
        %v2507 = vpack.c.b16 %v2456, %v2455
        %v2508 = vpack.c.b16 %v2458, %v2457
        %v2509 = vpack.c.b16 %v2460, %v2459
        %v2510 = vpack.c.b16 %v2462, %v2461
        %v2511 = vpack.c.b16 %v2464, %v2463
        %v2512 = vpack.c.b16 %v2466, %v2465
        %v2513 = vpack.c.b16 %v2468, %v2467
        %v2514 = vpack.c.b16 %v2470, %v2469
        %v2515 = vpack.c.b16 %v2472, %v2471
        %v2516 = vpack.c.b16 %v2474, %v2473
        %v2517 = vpack.c.b16 %v2476, %v2475
        %v2518 = vpack.c.b16 %v2478, %v2477
        %v2519 = vpack.c.b16 %v2480, %v2479
        %v2520 = vpack.c.b16 %v2482, %v2481
        %v2521 = vpack.c.b16 %v2484, %v2483
        %v2522 = vpack.c.b16 %v2486, %v2485
        %v2523 = vpack.c.b16 %v2488, %v2487
        %v2524 = vpack.c.b16 %v2490, %v2489
        %v2525 = vpack.c.b16 %v2492, %v2491
        %v2526 = vpack.c.b16 %v2494, %v2493
        %2559 = vmatprep.subr.bf16.mxu0 0
        %2560 = vmatpush1.bf16.msra.mxu0 %v2502
        %2561 = vmatprep.subr.bf16.mxu0 0
        %2562 = vmatpush1.bf16.msra.mxu0 %v2501
        %2563 = vmatprep.subr.bf16.mxu0 0
        %2564 = vmatpush1.bf16.msra.mxu0 %v2500
        %2565 = vmatprep.subr.bf16.mxu0 0
        %2566 = vmatpush1.bf16.msra.mxu0 %v2499
        %2567 = vmatprep.subr.bf16.mxu0 0
        %2568 = vmatpush1.bf16.msra.mxu0 %v2498
        %2569 = vmatprep.subr.bf16.mxu0 0
        %2570 = vmatpush1.bf16.msra.mxu0 %v2497
        %2571 = vmatprep.subr.bf16.mxu0 0
        %2572 = vmatpush1.bf16.msra.mxu0 %v2496
        %2573 = vmatprep.subr.bf16.mxu0 0
        %2574 = vmatpush1.bf16.msra.mxu0 %v2495
        %2575 = vmatprep.subr.bf16.mxu0 0
        %2576 = vmatpush2.bf16.msra.mxu0 %v2510
        %2577 = vmatprep.subr.bf16.mxu0 0
        %2578 = vmatpush2.bf16.msra.mxu0 %v2509
        %2579 = vmatprep.subr.bf16.mxu0 0
        %2580 = vmatpush2.bf16.msra.mxu0 %v2508
        %2581 = vmatprep.subr.bf16.mxu0 0
        %2582 = vmatpush2.bf16.msra.mxu0 %v2507
        %2583 = vmatprep.subr.bf16.mxu0 0
        %2584 = vmatpush2.bf16.msra.mxu0 %v2506
        %2585 = vmatprep.subr.bf16.mxu0 0
        %2586 = vmatpush2.bf16.msra.mxu0 %v2505
        %2587 = vmatprep.subr.bf16.mxu0 0
        %2588 = vmatpush2.bf16.msra.mxu0 %v2504
        %2589 = vmatprep.subr.bf16.mxu0 0
        %2590 = vmatpush2.bf16.msra.mxu0 %v2503
        %2591 = vmatprep.mubr.bf16.mxu0 %v2293
        %2592 = vmatmul.mubr.bf16.gmra.mxu0 %v2292
        %v2593 = vpop.f32.mrf.mxu0
        %v2594 = vadd.f32 %v2365, %v2593
        %v2595 = vpop.f32.mrf.mxu0
        %v2596 = vpop.f32.mrf.mxu0
        %v2597 = vadd.f32 %v2365, %v2596
        %v2598 = vpop.f32.mrf.mxu0
        %2599 = vdwg.mxu0
        %2600 = vmatprep.subr.bf16.mxu0 0
        %2601 = vmatpush1.bf16.msra.mxu0 %v2518
        %2602 = vmatprep.subr.bf16.mxu0 0
        %2603 = vmatpush1.bf16.msra.mxu0 %v2517
        %2604 = vmatprep.subr.bf16.mxu0 0
        %2605 = vmatpush1.bf16.msra.mxu0 %v2516
        %2606 = vmatprep.subr.bf16.mxu0 0
        %2607 = vmatpush1.bf16.msra.mxu0 %v2515
        %2608 = vmatprep.subr.bf16.mxu0 0
        %2609 = vmatpush1.bf16.msra.mxu0 %v2514
        %2610 = vmatprep.subr.bf16.mxu0 0
        %2611 = vmatpush1.bf16.msra.mxu0 %v2513
        %2612 = vmatprep.subr.bf16.mxu0 0
        %2613 = vmatpush1.bf16.msra.mxu0 %v2512
        %2614 = vmatprep.subr.bf16.mxu0 0
        %2615 = vmatpush1.bf16.msra.mxu0 %v2511
        %2616 = vmatprep.subr.bf16.mxu0 0
        %2617 = vmatpush2.bf16.msra.mxu0 %v2526
        %2618 = vmatprep.subr.bf16.mxu0 0
        %2619 = vmatpush2.bf16.msra.mxu0 %v2525
        %2620 = vmatprep.subr.bf16.mxu0 0
        %2621 = vmatpush2.bf16.msra.mxu0 %v2524
        %2622 = vmatprep.subr.bf16.mxu0 0
        %2623 = vmatpush2.bf16.msra.mxu0 %v2523
        %2624 = vmatprep.subr.bf16.mxu0 0
        %2625 = vmatpush2.bf16.msra.mxu0 %v2522
        %2626 = vmatprep.subr.bf16.mxu0 0
        %2627 = vmatpush2.bf16.msra.mxu0 %v2521
        %2628 = vmatprep.subr.bf16.mxu0 0
        %2629 = vmatpush2.bf16.msra.mxu0 %v2520
        %2630 = vmatprep.subr.bf16.mxu0 0
        %2631 = vmatpush2.bf16.msra.mxu0 %v2519
        %2632 = vmatprep.mubr.bf16.mxu0 %v2295
        %2633 = vmatmul.mubr.bf16.gmra.mxu0 %v2294
        %v2634 = vpop.f32.mrf.mxu0
        %v2635 = vadd.f32 %v2594, %v2634
        %v2636 = vpop.f32.mrf.mxu0
        %v2637 = vpop.f32.mrf.mxu0
        %v2638 = vadd.f32 %v2597, %v2637
        %v2639 = vpop.f32.mrf.mxu0
        %2640 = vdwg.mxu0
        %v2641 = vadd.f32 %v1917, %v2635
        %v2642 = vadd.f32 %v1918, %v2638
        %v2643 = vld [vmem:[%s977] sm:$0x1]
        %v2644 = vld [vmem:[%s980] sm:$0x1]
        %2645 = vadd.xlane.f32.xlu0 %v2641
        %v2646 = vpop.xlane.xlu0 %2645
        %2647 = vadd.xlane.f32.xlu0 %v2642
        %v2648 = vpop.xlane.xlu0 %2647
        %v2649 = vmul.f32 %v2646, %v1884
        %v2650 = vmul.f32 %v2648, %v1884
        %v2651 = vsub.f32 %v2641, %v2649
        %v2652 = vsub.f32 %v2642, %v2650
        %v2653 = vmul.f32 %v2651, %v2651
        %v2654 = vmul.f32 %v2652, %v2652
        %2655 = vadd.xlane.f32.xlu0 %v2653
        %v2656 = vpop.xlane.xlu0 %2655
        %2657 = vadd.xlane.f32.xlu0 %v2654
        %v2658 = vpop.xlane.xlu0 %2657
        %v2659 = vmul.f32 %v2656, %v1884
        %v2660 = vmul.f32 %v2658, %v1884
        %v2661 = vadd.f32 %v2659, 1e-12
        %v2662 = vadd.f32 %v2660, 1e-12
        %v2663 = vrsqrt.pop %v2661
        %v2664 = vrsqrt.pop %v2662
        %v2665 = vmul.f32 %v2651, %v2663
        %v2666 = vmul.f32 %v2652, %v2664
        %v2668 = vlaneseq
        %v2669 = vshrl.u32 %v2668, 7
        %v2670 = vsub.s32 0, %v2669
        %v2671 = vrot.slane %v2643, %v2670
        %v2673 = vmul.f32 %v2665, %v2671
        %v2674 = vmul.f32 %v2666, %v2671
        %v2676 = vlaneseq
        %v2677 = vshrl.u32 %v2676, 7
        %v2678 = vsub.s32 0, %v2677
        %v2679 = vrot.slane %v2644, %v2678
        %v2681 = vadd.f32 %v2673, %v2679
        %v2682 = vadd.f32 %v2674, %v2679
        %2683 = vst [vmem:[#allocation2] sm:$0xff] %v2681
        %2684 = vst [vmem:[#allocation2 + $0x8] sm:$0xff] %v2682
        %p2685 = scmp.eq.s32.totalorder %s46, 1
        // Predicated region
        $region145: #{tpu_custom_call.1} parent=95 // pred_check
          %p2686 = pneg %p2685
        $region146: #{tpu_custom_call.1} parent=95 // pred_check_branch
          %2688 = sbr.rel (%p2686) target = $region148
        $region147: #{tpu_custom_call.1} parent=95 // pred_region
          %v2689 = vld [vmem:[#allocation8] sm:$0xff]
          %v2690 = vpack.c.bf16 %v2689, %v2689
          %v2691 = vld [vmem:[#allocation12] sm:$0xf]
          %v2692 = vld [vmem:[#allocation12 + $0x4] sm:$0xf]
          %v2693 = vld [vmem:[#allocation12 + $0x8] sm:$0xf]
          %v2694 = vld [vmem:[#allocation12 + $0xc] sm:$0xf]
          %v2695 = vld [vmem:[#allocation12 + $0x10] sm:$0xf]
          %v2696 = vld [vmem:[#allocation12 + $0x14] sm:$0xf]
          %v2697 = vld [vmem:[#allocation12 + $0x18] sm:$0x1]
          %v2698 = vld [vmem:[#allocation14] sm:$0x1]
          %v2700 = vlaneseq
          %v2701 = vshrl.u32 %v2700, 7
          %v2702 = vsub.s32 0, %v2701
          %v2703 = vrot.slane %v2698, %v2702
          %v2712 = vunpack.c.l.b16 %v2691
          %v2713 = vunpack.c.l.b16 %v2692
          %v2714 = vunpack.c.l.b16 %v2693
          %v2715 = vunpack.c.l.b16 %v2694
          %v2716 = vunpack.c.l.b16 %v2695
          %v2717 = vunpack.c.l.b16 %v2696
          %v2718 = vunpack.c.l.b16 %v2697
          %v2719 = vpack.c.b16 %v2713, %v2712
          %v2720 = vpack.c.b16 %v2715, %v2714
          %v2721 = vpack.c.b16 %v2717, %v2716
          %v2722 = vpack.c.b16 %v2718, %v2718
          %vm2726 = vcmask 408576
          %v2728 = vsel %vm2726, %v2690, 0
          %vm2730 = vcmask 1040384
          %v2732 = vsel %vm2730, %v2722, 0
          %2734 = vmatprep.subr.bf16.mxu0 0
          %2735 = vmatpush1.bf16.msra.mxu0 0
          %2736 = vmatprep.subr.bf16.mxu0 0
          %2737 = vmatpush1.bf16.msra.mxu0 0
          %2738 = vmatprep.subr.bf16.mxu0 0
          %2739 = vmatpush1.bf16.msra.mxu0 0
          %2740 = vmatprep.subr.bf16.mxu0 0
          %2741 = vmatpush1.bf16.msra.mxu0 0
          %2742 = vmatprep.subr.bf16.mxu0 0
          %2743 = vmatpush1.bf16.msra.mxu0 %v2732
          %2744 = vmatprep.subr.bf16.mxu0 0
          %2745 = vmatpush1.bf16.msra.mxu0 %v2721
          %2746 = vmatprep.subr.bf16.mxu0 0
          %2747 = vmatpush1.bf16.msra.mxu0 %v2720
          %2748 = vmatprep.subr.bf16.mxu0 0
          %2749 = vmatpush1.bf16.msra.mxu0 %v2719
          %2750 = vmatprep.subr.bf16.mxu0 0
          %2751 = vmatpush2.bf16.msra.mxu0 0
          %2752 = vmatprep.subr.bf16.mxu0 0
          %2753 = vmatpush2.bf16.msra.mxu0 0
          %2754 = vmatprep.subr.bf16.mxu0 0
          %2755 = vmatpush2.bf16.msra.mxu0 0
          %2756 = vmatprep.subr.bf16.mxu0 0
          %2757 = vmatpush2.bf16.msra.mxu0 0
          %2758 = vmatprep.subr.bf16.mxu0 0
          %2759 = vmatpush2.bf16.msra.mxu0 0
          %2760 = vmatprep.subr.bf16.mxu0 0
          %2761 = vmatpush2.bf16.msra.mxu0 0
          %2762 = vmatprep.subr.bf16.mxu0 0
          %2763 = vmatpush2.bf16.msra.mxu0 0
          %2764 = vmatprep.subr.bf16.mxu0 0
          %2765 = vmatpush2.bf16.msra.mxu0 0
          %2766 = vmatprep.mubr.bf16.mxu0 0
          %2767 = vmatmul.mubr.bf16.gmra.mxu0 %v2728
          %v2768 = vpop.f32.mrf.mxu0
          %v2769 = vadd.f32 %v2703, %v2768
          %v2770 = vpop.f32.mrf.mxu0
          %v2771 = vpop.f32.mrf.mxu0
          %v2772 = vpop.f32.mrf.mxu0
          %2773 = vdwg.mxu0
          %v2774 = vadd.f32 %v2681, %v2769
          %2775 = vst [vmem:[#allocation21] sm:$0xff] %v2774
          %s2776 = scalar_lea.vmem [#allocation8], 8
          %v2777 = vld [vmem:[%s2776] sm:$0xff]
          %v2778 = vpack.c.bf16 %v2777, %v2777
          %v2779 = vld [vmem:[#allocation12] sm:$0xf]
          %v2780 = vld [vmem:[#allocation12 + $0x4] sm:$0xf]
          %v2781 = vld [vmem:[#allocation12 + $0x8] sm:$0xf]
          %v2782 = vld [vmem:[#allocation12 + $0xc] sm:$0xf]
          %v2783 = vld [vmem:[#allocation12 + $0x10] sm:$0xf]
          %v2784 = vld [vmem:[#allocation12 + $0x14] sm:$0xf]
          %v2785 = vld [vmem:[#allocation12 + $0x18] sm:$0x1]
          %v2786 = vld [vmem:[#allocation14] sm:$0x1]
          %v2788 = vlaneseq
          %v2789 = vshrl.u32 %v2788, 7
          %v2790 = vsub.s32 0, %v2789
          %v2791 = vrot.slane %v2786, %v2790
          %v2800 = vunpack.c.l.b16 %v2779
          %v2801 = vunpack.c.l.b16 %v2780
          %v2802 = vunpack.c.l.b16 %v2781
          %v2803 = vunpack.c.l.b16 %v2782
          %v2804 = vunpack.c.l.b16 %v2783
          %v2805 = vunpack.c.l.b16 %v2784
          %v2806 = vunpack.c.l.b16 %v2785
          %v2807 = vpack.c.b16 %v2801, %v2800
          %v2808 = vpack.c.b16 %v2803, %v2802
          %v2809 = vpack.c.b16 %v2805, %v2804
          %v2810 = vpack.c.b16 %v2806, %v2806
          %v2815 = vsel %vm2726, %v2778, 0
          %v2818 = vsel %vm2730, %v2810, 0
          %2820 = vmatprep.subr.bf16.mxu0 0
          %2821 = vmatpush1.bf16.msra.mxu0 0
          %2822 = vmatprep.subr.bf16.mxu0 0
          %2823 = vmatpush1.bf16.msra.mxu0 0
          %2824 = vmatprep.subr.bf16.mxu0 0
          %2825 = vmatpush1.bf16.msra.mxu0 0
          %2826 = vmatprep.subr.bf16.mxu0 0
          %2827 = vmatpush1.bf16.msra.mxu0 0
          %2828 = vmatprep.subr.bf16.mxu0 0
          %2829 = vmatpush1.bf16.msra.mxu0 %v2818
          %2830 = vmatprep.subr.bf16.mxu0 0
          %2831 = vmatpush1.bf16.msra.mxu0 %v2809
          %2832 = vmatprep.subr.bf16.mxu0 0
          %2833 = vmatpush1.bf16.msra.mxu0 %v2808
          %2834 = vmatprep.subr.bf16.mxu0 0
          %2835 = vmatpush1.bf16.msra.mxu0 %v2807
          %2836 = vmatprep.subr.bf16.mxu0 0
          %2837 = vmatpush2.bf16.msra.mxu0 0
          %2838 = vmatprep.subr.bf16.mxu0 0
          %2839 = vmatpush2.bf16.msra.mxu0 0
          %2840 = vmatprep.subr.bf16.mxu0 0
          %2841 = vmatpush2.bf16.msra.mxu0 0
          %2842 = vmatprep.subr.bf16.mxu0 0
          %2843 = vmatpush2.bf16.msra.mxu0 0
          %2844 = vmatprep.subr.bf16.mxu0 0
          %2845 = vmatpush2.bf16.msra.mxu0 0
          %2846 = vmatprep.subr.bf16.mxu0 0
          %2847 = vmatpush2.bf16.msra.mxu0 0
          %2848 = vmatprep.subr.bf16.mxu0 0
          %2849 = vmatpush2.bf16.msra.mxu0 0
          %2850 = vmatprep.subr.bf16.mxu0 0
          %2851 = vmatpush2.bf16.msra.mxu0 0
          %2852 = vmatprep.mubr.bf16.mxu0 0
          %2853 = vmatmul.mubr.bf16.gmra.mxu0 %v2815
          %v2854 = vpop.f32.mrf.mxu0
          %v2855 = vadd.f32 %v2791, %v2854
          %v2856 = vpop.f32.mrf.mxu0
          %v2857 = vpop.f32.mrf.mxu0
          %v2858 = vpop.f32.mrf.mxu0
          %2859 = vdwg.mxu0
          %v2860 = vadd.f32 %v2682, %v2855
          %s2861 = scalar_lea.vmem [#allocation21], 8
          %2862 = vst [vmem:[%s2861] sm:$0xff] %v2860
        $region148: #{tpu_custom_call.1} parent=95 // pred_fallthru
          _
        // Predicated region
        $region149: #{tpu_custom_call.1} parent=95 // pred_check
          %p2863 = pneg %p545
        $region150: #{tpu_custom_call.1} parent=95 // pred_check_branch
          %2865 = sbr.rel (%p2863) target = $region152
        $region151: #{tpu_custom_call.1} parent=95 // pred_region
          %s2866 = smul.u32 2, %s45
          %s2868 = ssub.s32 256, 256
          %2869 = vsyncadd [#allocation5], %s2868
          %s2870 = smul.addr %s2866, 128
          %s2871 = scalar_lea.hbm %s19, %s2870
          %s2872 = sshll.u32 [#allocation21], 4
          %s2873 = int_to_ptr.vmem [resolvable:$true] %s2872
          %2878 = dma.vmem_to_hbm [thread:$0]  %s2873, 256, %s2871, [#allocation5], 128, 128, 8
        $region152: #{tpu_custom_call.1} parent=95 // pred_fallthru
          _
        // Predicated region
        $region153: #{tpu_custom_call.1} parent=95 // pred_check
          %p2879 = pneg %p545
        $region154: #{tpu_custom_call.1} parent=95 // pred_check_branch
          %2881 = sbr.rel (%p2879) target = $region156
        $region155: #{tpu_custom_call.1} parent=95 // pred_region
          %2882 = dma.done [#allocation5], 256
        $region156: #{tpu_custom_call.1} parent=95 // pred_fallthru
          _
      $region96: #{tpu_custom_call.1} parent=5 // pred_fallthru
        _
      %p2883 = scmp.le.s32.totalorder 2, %s36
      // Predicated region
      $region157: #{tpu_custom_call.1} parent=5 // pred_check
        %p2884 = pneg %p2883
      $region158: #{tpu_custom_call.1} parent=5 // pred_check_branch
        %2886 = sbr.rel (%p2884) target = $region160
      $region159: #{tpu_custom_call.1} parent=5 // pred_region
        %s2887 = ssub.s32 %s36, 2
      $region160: #{tpu_custom_call.1} parent=5 // pred_fallthru
        _
    $region6: #{tpu_custom_call.1} parent=1 // loop_footer
      %s40 = sadd.s32 1, %s36
    $region7: #{tpu_custom_call.1} parent=1 // loop_footer_branch
      %35 = sbr.rel target = $region3
    $region8: #{tpu_custom_call.1} parent=1 // loop_exit
      _
    %2888 = vsyncpa [#allocation4], 1
    %s2889 = scalar_lea.sflag [#allocation4], 1
    %2890 = vsyncpa %s2889, 1
    %2891 = vsyncpa [#allocation7], 1
    %2892 = vsyncpa [#allocation10], 1
    %2893 = vsyncpa [#allocation13], 1
    %2894 = vsyncpa [#allocation16], 1
    %s2895 = scalar_lea.sflag [#allocation16], 1
    %2896 = vsyncpa %s2895, 1
    %2897 = vsyncpa [#allocation19], 1
    %s2898 = scalar_lea.sflag [#allocation19], 1
    %2899 = vsyncpa %s2898, 1
    %2900 = vsyncpa [#allocation5], 1
    %s2901 = scalar_lea.sflag [#allocation5], 1
    %2902 = vsyncpa %s2901, 1

</llo_original>
